<compile_context>
chip_gen: v6e
topology: v6e:2x2x1
jax: 0.10.0
libtpu: 0.0.40
codegen_flags: <defaults>
</compile_context>

<pallas_src>
import jax
import jax.numpy as jnp
from jax.experimental import pallas as pl
from jax.experimental.pallas import tpu as pltpu

F32 = jnp.float32
BF16 = jnp.bfloat16


def _conv_embed_kernel(x_ref, w1_ref, b1_ref, w2_ref, b2_ref, w3_ref, b3_ref,
                       o_ref, a1_ref, a2_ref, acc2_ref, acc3_ref):
    """Fused conv1+ReLU -> conv2+ReLU -> conv3+ReLU for TB batch elements.

    x_ref  : (TB, W+2, 2)        zero-padded input, channels-last            f32
    w1_ref : (3, 256)            conv1 weight as (kw, c_out)                 f32
    w2_ref : (2, 3, 256, 256)    conv2 weight as (kh, kw, c_in, c_out)       bf16
    w3_ref : (3, 256, CP)        conv3 weight as (kw, c_in, c_out_padded)    bf16
    o_ref  : (TB, W, CP)         lane-dense (128-padded) output              f32
    a1_ref : (2, TB, W+2, 256)   VMEM scratch — zero-padded conv1 output     bf16
    a2_ref : (TB, W+2, 256)      VMEM scratch — zero-padded conv2 output     bf16
    acc2_ref: (TB*W, 256)        f32 VMEM accumulator for conv2
    acc3_ref: (TB*W, CP)         f32 VMEM accumulator for conv3
    """
    TB, Wp2, _ = x_ref.shape
    W = Wp2 - 2
    CP = o_ref.shape[-1]
    TBW = TB * W

    # Scratch persists across grid steps and the halo rows are never rewritten:
    # zero them exactly once on the first step.
    @pl.when(pl.program_id(0) == 0)
    def _init_halos():
        a1_ref[:, :, 0:1, :] = jnp.zeros((2, TB, 1, 256), BF16)
        a1_ref[:, :, W + 1:W + 2, :] = jnp.zeros((2, TB, 1, 256), BF16)
        a2_ref[:, 0:1, :] = jnp.zeros((TB, 1, 256), BF16)
        a2_ref[:, W + 1:W + 2, :] = jnp.zeros((TB, 1, 256), BF16)

    # ---- conv1: Conv2d(1 -> 256, (1,3)) + ReLU — VPU shifted FMAs, batched --
    w1 = w1_ref[...]                                    # (3, 256)  hoisted
    b1 = b1_ref[...]                                    # (1, 256)
    for h in range(2):                                  # the two input rows
        pre = b1                                        # broadcasts up
        for kw in range(3):
            xin = x_ref[:, kw:kw + W, h:h + 1]          # (TB, W, 1) shifted input
            pre = pre + xin * w1[kw:kw + 1, :]          # (TB, W, 256) lane-bcast FMA
        a1_ref[h, :, 1:W + 1, :] = jnp.maximum(pre, 0.0).astype(BF16)

    # ---- conv2: Conv2d(256 -> 256, (2,3)) + ReLU — 6 MXU taps, M = TB*W -----
    t = 0
    for kh in range(2):
        for kw in range(3):
            tap = a1_ref[kh, :, kw:kw + W, :].reshape(TBW, 256)   # bf16 im2col slab
            d = jnp.dot(tap, w2_ref[kh, kw, :, :], preferred_element_type=F32)
            if t == 0:
                acc2_ref[...] = d                        # first tap: init
            else:
                acc2_ref[...] += d                       # f32 VMEM accumulation
            t += 1
    a2 = jnp.maximum(acc2_ref[...] + b2_ref[...], 0.0).astype(BF16)
    a2_ref[:, 1:W + 1, :] = a2.reshape(TB, W, 256)

    # ---- conv3: Conv2d(256 -> CP, (1,3)) + ReLU — 3 MXU taps, lane-dense N --
    for kw in range(3):
        tap = a2_ref[:, kw:kw + W, :].reshape(TBW, 256)
        d = jnp.dot(tap, w3_ref[kw, :, :], preferred_element_type=F32)
        if kw == 0:
            acc3_ref[...] = d
        else:
            acc3_ref[...] += d
    # Only HBM store; squeeze(H) + transpose(1,2) realized by the (TB, W, CP)
    # output layout directly (full 128-lane stores, no vst.msk).
    o_ref[...] = jnp.maximum(acc3_ref[...] + b3_ref[...], 0.0).reshape(TB, W, CP)


def _pick_tb(B, W):
    """Batch block: target M = TB*W ~ 256 MXU rows, keep >= 2 grid steps."""
    tb = max(1, 256 // max(W, 1))
    tb = min(tb, B)
    if B >= 2:
        tb = min(tb, pl.cdiv(B, 2))   # feed both TensorCores on v7x
    return max(tb, 1)


def conv_patch_embedding(img, params, *, tb=None):
    """img: (B, 1, 2, W) NCHW; params in PyTorch OIHW layouts. Returns (B, W, C_out)."""
    B, cin, H, W = img.shape
    assert cin == 1 and H == 2, (cin, H)
    C_out = params["w3"].shape[0]
    CP = ((C_out + 127) // 128) * 128              # lane-dense padded feature dim

    if tb is None:
        tb = _pick_tb(B, W)
    B_pad = pl.cdiv(B, tb) * tb

    # Tiny layout glue on the raw input / weights only (no activation im2col).
    x = jnp.transpose(img[:, 0], (0, 2, 1))                              # (B, W, 2)
    xpad = jnp.pad(x, ((0, B_pad - B), (1, 1), (0, 0)))                  # (B_pad, W+2, 2)
    w1k = jnp.transpose(params["w1"][:, 0, 0, :], (1, 0)).astype(F32)    # (3, 256)
    b1k = params["b1"][None, :].astype(F32)                              # (1, 256)
    w2k = jnp.transpose(params["w2"], (2, 3, 1, 0)).astype(BF16)         # (2,3,256,256)
    b2k = params["b2"][None, :].astype(F32)                              # (1, 256)
    w3k = jnp.transpose(params["w3"][:, :, 0, :], (2, 1, 0))             # (3,256,C_out)
    w3k = jnp.pad(w3k, ((0, 0), (0, 0), (0, CP - C_out))).astype(BF16)   # (3,256,CP)
    b3k = jnp.pad(params["b3"], ((0, CP - C_out),))[None, :].astype(F32)  # (1, CP)

    out = pl.pallas_call(
        _conv_embed_kernel,
        out_shape=jax.ShapeDtypeStruct((B_pad, W, CP), F32),
        grid=(B_pad // tb,),
        in_specs=[
            pl.BlockSpec((tb, W + 2, 2), lambda b: (b, 0, 0)),
            pl.BlockSpec((3, 256), lambda b: (0, 0)),
            pl.BlockSpec((1, 256), lambda b: (0, 0)),
            pl.BlockSpec((2, 3, 256, 256), lambda b: (0, 0, 0, 0)),
            pl.BlockSpec((1, 256), lambda b: (0, 0)),
            pl.BlockSpec((3, 256, CP), lambda b: (0, 0, 0)),
            pl.BlockSpec((1, CP), lambda b: (0, 0)),
        ],
        out_specs=pl.BlockSpec((tb, W, CP), lambda b: (b, 0, 0)),
        scratch_shapes=[
            pltpu.VMEM((2, tb, W + 2, 256), BF16),     # padded conv1 activations
            pltpu.VMEM((tb, W + 2, 256), BF16),        # padded conv2 activations
            pltpu.VMEM((tb * W, 256), F32),            # conv2 f32 accumulator
            pltpu.VMEM((tb * W, CP), F32),             # conv3 f32 accumulator
        ],
        compiler_params=pltpu.CompilerParams(
            dimension_semantics=("parallel",)),
    )(xpad, w1k, b1k, w2k, b2k, w3k, b3k)

    # Drop the batch padding and the lane padding of the feature dim.
    return out[:B, :, :C_out]


# ---------------------------------------------------------------------------
# Pure-JAX f32 reference (lax convolutions, HIGHEST precision)
# ---------------------------------------------------------------------------
def conv_patch_embedding_ref(img, params):
    dn = ("NCHW", "OIHW", "NCHW")
    hi = jax.lax.Precision.HIGHEST
    y = jax.lax.conv_general_dilated(img, params["w1"], (1, 1), [(0, 0), (1, 1)],
                                     dimension_numbers=dn, precision=hi)
    y = jnp.maximum(y + params["b1"][None, :, None, None], 0.0)
    y = jax.lax.conv_general_dilated(y, params["w2"], (1, 1), [(0, 0), (1, 1)],
                                     dimension_numbers=dn, precision=hi)
    y = jnp.maximum(y + params["b2"][None, :, None, None], 0.0)
    y = jax.lax.conv_general_dilated(y, params["w3"], (1, 1), [(0, 0), (1, 1)],
                                     dimension_numbers=dn, precision=hi)
    y = jnp.maximum(y + params["b3"][None, :, None, None], 0.0)
    y = jnp.squeeze(y, axis=2)                          # (B, C_out, W)
    return jnp.transpose(y, (0, 2, 1))                  # (B, W, C_out)


# ---------------------------------------------------------------------------
if __name__ == "__main__":
    B = 4             # small batch; exercises TB=2, grid=2 batch blocking
    W = 16            # image_size / sequence length of the embedding
    C_out = 80        # conv_patch_embedding default out_channel

    key = jax.random.PRNGKey(0)
    ks = jax.random.split(key, 7)

    def nrm(kk, shape, s=0.02):
        return (s * jax.random.normal(kk, shape)).astype(F32)

    # Parameters kept in the PyTorch Conv2d (O, I, KH, KW) layout.
    params = {
        "w1": nrm(ks[0], (256, 1, 1, 3)),     "b1": nrm(ks[1], (256,)),
        "w2": nrm(ks[2], (256, 256, 2, 3)),   "b2": nrm(ks[3], (256,)),
        "w3": nrm(ks[4], (C_out, 256, 1, 3)), "b3": nrm(ks[5], (C_out,)),
    }
    img = jax.random.normal(ks[6], (B, 1, 2, W), dtype=F32)

    fwd = jax.jit(conv_patch_embedding)
    out = jax.block_until_ready(fwd(img, params))
    assert out.shape == (B, W, C_out), out.shape

    ref = jax.block_until_ready(conv_patch_embedding_ref(img, params))
    max_err = float(jnp.max(jnp.abs(out - ref)))
    assert max_err < 2e-3, f"mismatch vs f32 conv reference: {max_err}"
    print("KERNEL_OK")
</pallas_src>

<mosaic_0001>
module attributes {stable_mosaic.version = 11 : i64} {
  func.func @_conv_embed_kernel(%arg0: i32, %arg1: memref<2x18x2xf32, #tpu.memory_space<vmem>>, %arg2: memref<3x256xf32, #tpu.memory_space<vmem>>, %arg3: memref<1x256xf32, #tpu.memory_space<vmem>>, %arg4: memref<2x3x256x256xbf16, #tpu.memory_space<vmem>>, %arg5: memref<1x256xf32, #tpu.memory_space<vmem>>, %arg6: memref<3x256x128xbf16, #tpu.memory_space<vmem>>, %arg7: memref<1x128xf32, #tpu.memory_space<vmem>>, %arg8: memref<2x16x128xf32, #tpu.memory_space<vmem>>, %arg9: memref<2x2x18x256xbf16, #tpu.memory_space<vmem>>, %arg10: memref<2x18x256xbf16, #tpu.memory_space<vmem>>, %arg11: memref<32x256xf32, #tpu.memory_space<vmem>>, %arg12: memref<32x128xf32, #tpu.memory_space<vmem>>) attributes {dimension_semantics = [#tpu.dimension_semantics<parallel>], iteration_bounds = array<i64: 2>, scalar_prefetch = 0 : i64, scratch_operands = 4 : i64, tpu.core_type = #tpu.core_type<tc>, window_params = [{transform_indices = @transform_0, window_bounds = array<i64: 2, 18, 2>}, {pipeline_mode = #tpu.pipeline_mode<synchronous>, transform_indices = @transform_1, window_bounds = array<i64: 3, 256>}, {pipeline_mode = #tpu.pipeline_mode<synchronous>, transform_indices = @transform_2, window_bounds = array<i64: 1, 256>}, {pipeline_mode = #tpu.pipeline_mode<synchronous>, transform_indices = @transform_3, window_bounds = array<i64: 2, 3, 256, 256>}, {pipeline_mode = #tpu.pipeline_mode<synchronous>, transform_indices = @transform_4, window_bounds = array<i64: 1, 256>}, {pipeline_mode = #tpu.pipeline_mode<synchronous>, transform_indices = @transform_5, window_bounds = array<i64: 3, 256, 128>}, {pipeline_mode = #tpu.pipeline_mode<synchronous>, transform_indices = @transform_6, window_bounds = array<i64: 1, 128>}, {transform_indices = @transform_7, window_bounds = array<i64: 2, 16, 128>}]} {
    %c0_i32 = arith.constant 0 : i32
    %0 = arith.cmpi eq, %arg0, %c0_i32 : i32
    %1 = arith.extui %0 : i1 to i32
    %c0_i32_0 = arith.constant 0 : i32
    %2 = arith.cmpi ne, %1, %c0_i32_0 : i32
    scf.if %2 {
      %cst_152 = arith.constant 0.000000e+00 : bf16
      %154 = vector.broadcast %cst_152 : bf16 to vector<2x2x1x256xbf16>
      %c0_153 = arith.constant 0 : index
      %c0_154 = arith.constant 0 : index
      %c0_155 = arith.constant 0 : index
      %c0_156 = arith.constant 0 : index
      %155 = vector.load %arg9[%c0_153, %c0_154, %c0_155, %c0_156] : memref<2x2x18x256xbf16, #tpu.memory_space<vmem>>, vector<2x2x1x256xbf16>
      tpu.vector_store %arg9[%c0_153, %c0_154, %c0_155, %c0_156], %154 {strides = array<i32>} : memref<2x2x18x256xbf16, #tpu.memory_space<vmem>>, vector<2x2x1x256xbf16>,
      %cst_157 = arith.constant 0.000000e+00 : bf16
      %156 = vector.broadcast %cst_157 : bf16 to vector<2x2x1x256xbf16>
      %c0_158 = arith.constant 0 : index
      %c0_159 = arith.constant 0 : index
      %c17 = arith.constant 17 : index
      %c0_160 = arith.constant 0 : index
      %157 = vector.load %arg9[%c0_158, %c0_159, %c17, %c0_160] : memref<2x2x18x256xbf16, #tpu.memory_space<vmem>>, vector<2x2x1x256xbf16>
      tpu.vector_store %arg9[%c0_158, %c0_159, %c17, %c0_160], %156 {strides = array<i32>} : memref<2x2x18x256xbf16, #tpu.memory_space<vmem>>, vector<2x2x1x256xbf16>,
      %cst_161 = arith.constant 0.000000e+00 : bf16
      %158 = vector.broadcast %cst_161 : bf16 to vector<2x1x256xbf16>
      %c0_162 = arith.constant 0 : index
      %c0_163 = arith.constant 0 : index
      %c0_164 = arith.constant 0 : index
      %159 = vector.load %arg10[%c0_162, %c0_163, %c0_164] : memref<2x18x256xbf16, #tpu.memory_space<vmem>>, vector<2x1x256xbf16>
      tpu.vector_store %arg10[%c0_162, %c0_163, %c0_164], %158 {strides = array<i32>} : memref<2x18x256xbf16, #tpu.memory_space<vmem>>, vector<2x1x256xbf16>,
      %cst_165 = arith.constant 0.000000e+00 : bf16
      %160 = vector.broadcast %cst_165 : bf16 to vector<2x1x256xbf16>
      %c0_166 = arith.constant 0 : index
      %c17_167 = arith.constant 17 : index
      %c0_168 = arith.constant 0 : index
      %161 = vector.load %arg10[%c0_166, %c17_167, %c0_168] : memref<2x18x256xbf16, #tpu.memory_space<vmem>>, vector<2x1x256xbf16>
      tpu.vector_store %arg10[%c0_166, %c17_167, %c0_168], %160 {strides = array<i32>} : memref<2x18x256xbf16, #tpu.memory_space<vmem>>, vector<2x1x256xbf16>,
    } else {
    }
    %c0 = arith.constant 0 : index
    %c0_1 = arith.constant 0 : index
    %3 = vector.load %arg2[%c0, %c0_1] : memref<3x256xf32, #tpu.memory_space<vmem>>, vector<3x256xf32>
    %c0_2 = arith.constant 0 : index
    %c0_3 = arith.constant 0 : index
    %4 = vector.load %arg3[%c0_2, %c0_3] : memref<1x256xf32, #tpu.memory_space<vmem>>, vector<1x256xf32>
    %c0_4 = arith.constant 0 : index
    %c0_5 = arith.constant 0 : index
    %c0_6 = arith.constant 0 : index
    %5 = vector.load %arg1[%c0_4, %c0_5, %c0_6] : memref<2x18x2xf32, #tpu.memory_space<vmem>>, vector<2x16x1xf32>
    %6 = vector.extract_strided_slice %3 {offsets = [0, 0], sizes = [1, 256], strides = [1, 1]} : vector<3x256xf32> to vector<1x256xf32>
    %7 = vector.shape_cast %6 : vector<1x256xf32> to vector<1x1x256xf32>
    %8 = vector.broadcast %5 : vector<2x16x1xf32> to vector<2x16x256xf32>
    %9 = vector.broadcast %7 : vector<1x1x256xf32> to vector<2x16x256xf32>
    %10 = arith.mulf %8, %9 : vector<2x16x256xf32>
    %11 = vector.shape_cast %4 : vector<1x256xf32> to vector<1x1x256xf32>
    %12 = vector.broadcast %11 : vector<1x1x256xf32> to vector<2x16x256xf32>
    %13 = arith.addf %12, %10 : vector<2x16x256xf32>
    %c0_7 = arith.constant 0 : index
    %c1 = arith.constant 1 : index
    %c0_8 = arith.constant 0 : index
    %14 = vector.load %arg1[%c0_7, %c1, %c0_8] : memref<2x18x2xf32, #tpu.memory_space<vmem>>, vector<2x16x1xf32>
    %15 = vector.extract_strided_slice %3 {offsets = [1, 0], sizes = [1, 256], strides = [1, 1]} : vector<3x256xf32> to vector<1x256xf32>
    %16 = vector.shape_cast %15 : vector<1x256xf32> to vector<1x1x256xf32>
    %17 = vector.broadcast %14 : vector<2x16x1xf32> to vector<2x16x256xf32>
    %18 = vector.broadcast %16 : vector<1x1x256xf32> to vector<2x16x256xf32>
    %19 = arith.mulf %17, %18 : vector<2x16x256xf32>
    %20 = arith.addf %13, %19 : vector<2x16x256xf32>
    %c0_9 = arith.constant 0 : index
    %c2 = arith.constant 2 : index
    %c0_10 = arith.constant 0 : index
    %21 = vector.load %arg1[%c0_9, %c2, %c0_10] : memref<2x18x2xf32, #tpu.memory_space<vmem>>, vector<2x16x1xf32>
    %22 = vector.extract_strided_slice %3 {offsets = [2, 0], sizes = [1, 256], strides = [1, 1]} : vector<3x256xf32> to vector<1x256xf32>
    %23 = vector.shape_cast %22 : vector<1x256xf32> to vector<1x1x256xf32>
    %24 = vector.broadcast %21 : vector<2x16x1xf32> to vector<2x16x256xf32>
    %25 = vector.broadcast %23 : vector<1x1x256xf32> to vector<2x16x256xf32>
    %26 = arith.mulf %24, %25 : vector<2x16x256xf32>
    %27 = arith.addf %20, %26 : vector<2x16x256xf32>
    %cst = arith.constant 0.000000e+00 : f32
    %28 = vector.broadcast %cst : f32 to vector<2x16x256xf32>
    %29 = arith.maximumf %27, %28 : vector<2x16x256xf32>
    %30 = arith.truncf %29 : vector<2x16x256xf32> to vector<2x16x256xbf16>
    %c0_11 = arith.constant 0 : index
    %c0_12 = arith.constant 0 : index
    %c1_13 = arith.constant 1 : index
    %c0_14 = arith.constant 0 : index
    %31 = vector.load %arg9[%c0_11, %c0_12, %c1_13, %c0_14] : memref<2x2x18x256xbf16, #tpu.memory_space<vmem>>, vector<1x2x16x256xbf16>
    %32 = vector.shape_cast %31 : vector<1x2x16x256xbf16> to vector<2x16x256xbf16>
    %33 = vector.shape_cast %30 : vector<2x16x256xbf16> to vector<1x2x16x256xbf16>
    tpu.vector_store %arg9[%c0_11, %c0_12, %c1_13, %c0_14], %33 {strides = array<i32>} : memref<2x2x18x256xbf16, #tpu.memory_space<vmem>>, vector<1x2x16x256xbf16>,
    %c0_15 = arith.constant 0 : index
    %c0_16 = arith.constant 0 : index
    %c1_17 = arith.constant 1 : index
    %34 = vector.load %arg1[%c0_15, %c0_16, %c1_17] : memref<2x18x2xf32, #tpu.memory_space<vmem>>, vector<2x16x1xf32>
    %35 = vector.extract_strided_slice %3 {offsets = [0, 0], sizes = [1, 256], strides = [1, 1]} : vector<3x256xf32> to vector<1x256xf32>
    %36 = vector.shape_cast %35 : vector<1x256xf32> to vector<1x1x256xf32>
    %37 = vector.broadcast %34 : vector<2x16x1xf32> to vector<2x16x256xf32>
    %38 = vector.broadcast %36 : vector<1x1x256xf32> to vector<2x16x256xf32>
    %39 = arith.mulf %37, %38 : vector<2x16x256xf32>
    %40 = vector.shape_cast %4 : vector<1x256xf32> to vector<1x1x256xf32>
    %41 = vector.broadcast %40 : vector<1x1x256xf32> to vector<2x16x256xf32>
    %42 = arith.addf %41, %39 : vector<2x16x256xf32>
    %c0_18 = arith.constant 0 : index
    %c1_19 = arith.constant 1 : index
    %c1_20 = arith.constant 1 : index
    %43 = vector.load %arg1[%c0_18, %c1_19, %c1_20] : memref<2x18x2xf32, #tpu.memory_space<vmem>>, vector<2x16x1xf32>
    %44 = vector.extract_strided_slice %3 {offsets = [1, 0], sizes = [1, 256], strides = [1, 1]} : vector<3x256xf32> to vector<1x256xf32>
    %45 = vector.shape_cast %44 : vector<1x256xf32> to vector<1x1x256xf32>
    %46 = vector.broadcast %43 : vector<2x16x1xf32> to vector<2x16x256xf32>
    %47 = vector.broadcast %45 : vector<1x1x256xf32> to vector<2x16x256xf32>
    %48 = arith.mulf %46, %47 : vector<2x16x256xf32>
    %49 = arith.addf %42, %48 : vector<2x16x256xf32>
    %c0_21 = arith.constant 0 : index
    %c2_22 = arith.constant 2 : index
    %c1_23 = arith.constant 1 : index
    %50 = vector.load %arg1[%c0_21, %c2_22, %c1_23] : memref<2x18x2xf32, #tpu.memory_space<vmem>>, vector<2x16x1xf32>
    %51 = vector.extract_strided_slice %3 {offsets = [2, 0], sizes = [1, 256], strides = [1, 1]} : vector<3x256xf32> to vector<1x256xf32>
    %52 = vector.shape_cast %51 : vector<1x256xf32> to vector<1x1x256xf32>
    %53 = vector.broadcast %50 : vector<2x16x1xf32> to vector<2x16x256xf32>
    %54 = vector.broadcast %52 : vector<1x1x256xf32> to vector<2x16x256xf32>
    %55 = arith.mulf %53, %54 : vector<2x16x256xf32>
    %56 = arith.addf %49, %55 : vector<2x16x256xf32>
    %cst_24 = arith.constant 0.000000e+00 : f32
    %57 = vector.broadcast %cst_24 : f32 to vector<2x16x256xf32>
    %58 = arith.maximumf %56, %57 : vector<2x16x256xf32>
    %59 = arith.truncf %58 : vector<2x16x256xf32> to vector<2x16x256xbf16>
    %c1_25 = arith.constant 1 : index
    %c0_26 = arith.constant 0 : index
    %c1_27 = arith.constant 1 : index
    %c0_28 = arith.constant 0 : index
    %60 = vector.load %arg9[%c1_25, %c0_26, %c1_27, %c0_28] : memref<2x2x18x256xbf16, #tpu.memory_space<vmem>>, vector<1x2x16x256xbf16>
    %61 = vector.shape_cast %60 : vector<1x2x16x256xbf16> to vector<2x16x256xbf16>
    %62 = vector.shape_cast %59 : vector<2x16x256xbf16> to vector<1x2x16x256xbf16>
    tpu.vector_store %arg9[%c1_25, %c0_26, %c1_27, %c0_28], %62 {strides = array<i32>} : memref<2x2x18x256xbf16, #tpu.memory_space<vmem>>, vector<1x2x16x256xbf16>,
    %c0_29 = arith.constant 0 : index
    %c0_30 = arith.constant 0 : index
    %c0_31 = arith.constant 0 : index
    %c0_32 = arith.constant 0 : index
    %63 = vector.load %arg9[%c0_29, %c0_30, %c0_31, %c0_32] : memref<2x2x18x256xbf16, #tpu.memory_space<vmem>>, vector<1x2x16x256xbf16>
    %64 = vector.shape_cast %63 : vector<1x2x16x256xbf16> to vector<2x16x256xbf16>
    %65 = vector.shape_cast %64 : vector<2x16x256xbf16> to vector<32x256xbf16>
    %c0_33 = arith.constant 0 : index
    %c0_34 = arith.constant 0 : index
    %c0_35 = arith.constant 0 : index
    %c0_36 = arith.constant 0 : index
    %66 = vector.load %arg4[%c0_33, %c0_34, %c0_35, %c0_36] : memref<2x3x256x256xbf16, #tpu.memory_space<vmem>>, vector<1x1x256x256xbf16>
    %67 = vector.shape_cast %66 : vector<1x1x256x256xbf16> to vector<256x256xbf16>
    %cst_37 = arith.constant dense<0.000000e+00> : vector<32x256xf32>
    %68 = tpu.matmul %65, %67, %cst_37 {dimension_numbers = #tpu.dot_dimension_numbers<[1], [0], [0], [1], [0, 0, 1, 1], [], []>} : vector<32x256xbf16>, vector<256x256xbf16>, vector<32x256xf32> -> vector<32x256xf32>
    %c0_38 = arith.constant 0 : index
    %c0_39 = arith.constant 0 : index
    %69 = vector.load %arg11[%c0_38, %c0_39] : memref<32x256xf32, #tpu.memory_space<vmem>>, vector<32x256xf32>
    tpu.vector_store %arg11[%c0_38, %c0_39], %68 {strides = array<i32>} : memref<32x256xf32, #tpu.memory_space<vmem>>, vector<32x256xf32>,
    %c0_40 = arith.constant 0 : index
    %c0_41 = arith.constant 0 : index
    %c1_42 = arith.constant 1 : index
    %c0_43 = arith.constant 0 : index
    %70 = vector.load %arg9[%c0_40, %c0_41, %c1_42, %c0_43] : memref<2x2x18x256xbf16, #tpu.memory_space<vmem>>, vector<1x2x16x256xbf16>
    %71 = vector.shape_cast %70 : vector<1x2x16x256xbf16> to vector<2x16x256xbf16>
    %72 = vector.shape_cast %71 : vector<2x16x256xbf16> to vector<32x256xbf16>
    %c0_44 = arith.constant 0 : index
    %c1_45 = arith.constant 1 : index
    %c0_46 = arith.constant 0 : index
    %c0_47 = arith.constant 0 : index
    %73 = vector.load %arg4[%c0_44, %c1_45, %c0_46, %c0_47] : memref<2x3x256x256xbf16, #tpu.memory_space<vmem>>, vector<1x1x256x256xbf16>
    %74 = vector.shape_cast %73 : vector<1x1x256x256xbf16> to vector<256x256xbf16>
    %cst_48 = arith.constant dense<0.000000e+00> : vector<32x256xf32>
    %75 = tpu.matmul %72, %74, %cst_48 {dimension_numbers = #tpu.dot_dimension_numbers<[1], [0], [0], [1], [0, 0, 1, 1], [], []>} : vector<32x256xbf16>, vector<256x256xbf16>, vector<32x256xf32> -> vector<32x256xf32>
    %c0_49 = arith.constant 0 : index
    %c0_50 = arith.constant 0 : index
    %76 = vector.load %arg11[%c0_49, %c0_50] : memref<32x256xf32, #tpu.memory_space<vmem>>, vector<32x256xf32>
    %77 = arith.addf %76, %75 : vector<32x256xf32>
    %c0_51 = arith.constant 0 : index
    %c0_52 = arith.constant 0 : index
    %78 = vector.load %arg11[%c0_51, %c0_52] : memref<32x256xf32, #tpu.memory_space<vmem>>, vector<32x256xf32>
    tpu.vector_store %arg11[%c0_51, %c0_52], %77 {strides = array<i32>} : memref<32x256xf32, #tpu.memory_space<vmem>>, vector<32x256xf32>,
    %c0_53 = arith.constant 0 : index
    %c0_54 = arith.constant 0 : index
    %c2_55 = arith.constant 2 : index
    %c0_56 = arith.constant 0 : index
    %79 = vector.load %arg9[%c0_53, %c0_54, %c2_55, %c0_56] : memref<2x2x18x256xbf16, #tpu.memory_space<vmem>>, vector<1x2x16x256xbf16>
    %80 = vector.shape_cast %79 : vector<1x2x16x256xbf16> to vector<2x16x256xbf16>
    %81 = vector.shape_cast %80 : vector<2x16x256xbf16> to vector<32x256xbf16>
    %c0_57 = arith.constant 0 : index
    %c2_58 = arith.constant 2 : index
    %c0_59 = arith.constant 0 : index
    %c0_60 = arith.constant 0 : index
    %82 = vector.load %arg4[%c0_57, %c2_58, %c0_59, %c0_60] : memref<2x3x256x256xbf16, #tpu.memory_space<vmem>>, vector<1x1x256x256xbf16>
    %83 = vector.shape_cast %82 : vector<1x1x256x256xbf16> to vector<256x256xbf16>
    %cst_61 = arith.constant dense<0.000000e+00> : vector<32x256xf32>
    %84 = tpu.matmul %81, %83, %cst_61 {dimension_numbers = #tpu.dot_dimension_numbers<[1], [0], [0], [1], [0, 0, 1, 1], [], []>} : vector<32x256xbf16>, vector<256x256xbf16>, vector<32x256xf32> -> vector<32x256xf32>
    %c0_62 = arith.constant 0 : index
    %c0_63 = arith.constant 0 : index
    %85 = vector.load %arg11[%c0_62, %c0_63] : memref<32x256xf32, #tpu.memory_space<vmem>>, vector<32x256xf32>
    %86 = arith.addf %85, %84 : vector<32x256xf32>
    %c0_64 = arith.constant 0 : index
    %c0_65 = arith.constant 0 : index
    %87 = vector.load %arg11[%c0_64, %c0_65] : memref<32x256xf32, #tpu.memory_space<vmem>>, vector<32x256xf32>
    tpu.vector_store %arg11[%c0_64, %c0_65], %86 {strides = array<i32>} : memref<32x256xf32, #tpu.memory_space<vmem>>, vector<32x256xf32>,
    %c1_66 = arith.constant 1 : index
    %c0_67 = arith.constant 0 : index
    %c0_68 = arith.constant 0 : index
    %c0_69 = arith.constant 0 : index
    %88 = vector.load %arg9[%c1_66, %c0_67, %c0_68, %c0_69] : memref<2x2x18x256xbf16, #tpu.memory_space<vmem>>, vector<1x2x16x256xbf16>
    %89 = vector.shape_cast %88 : vector<1x2x16x256xbf16> to vector<2x16x256xbf16>
    %90 = vector.shape_cast %89 : vector<2x16x256xbf16> to vector<32x256xbf16>
    %c1_70 = arith.constant 1 : index
    %c0_71 = arith.constant 0 : index
    %c0_72 = arith.constant 0 : index
    %c0_73 = arith.constant 0 : index
    %91 = vector.load %arg4[%c1_70, %c0_71, %c0_72, %c0_73] : memref<2x3x256x256xbf16, #tpu.memory_space<vmem>>, vector<1x1x256x256xbf16>
    %92 = vector.shape_cast %91 : vector<1x1x256x256xbf16> to vector<256x256xbf16>
    %cst_74 = arith.constant dense<0.000000e+00> : vector<32x256xf32>
    %93 = tpu.matmul %90, %92, %cst_74 {dimension_numbers = #tpu.dot_dimension_numbers<[1], [0], [0], [1], [0, 0, 1, 1], [], []>} : vector<32x256xbf16>, vector<256x256xbf16>, vector<32x256xf32> -> vector<32x256xf32>
    %c0_75 = arith.constant 0 : index
    %c0_76 = arith.constant 0 : index
    %94 = vector.load %arg11[%c0_75, %c0_76] : memref<32x256xf32, #tpu.memory_space<vmem>>, vector<32x256xf32>
    %95 = arith.addf %94, %93 : vector<32x256xf32>
    %c0_77 = arith.constant 0 : index
    %c0_78 = arith.constant 0 : index
    %96 = vector.load %arg11[%c0_77, %c0_78] : memref<32x256xf32, #tpu.memory_space<vmem>>, vector<32x256xf32>
    tpu.vector_store %arg11[%c0_77, %c0_78], %95 {strides = array<i32>} : memref<32x256xf32, #tpu.memory_space<vmem>>, vector<32x256xf32>,
    %c1_79 = arith.constant 1 : index
    %c0_80 = arith.constant 0 : index
    %c1_81 = arith.constant 1 : index
    %c0_82 = arith.constant 0 : index
    %97 = vector.load %arg9[%c1_79, %c0_80, %c1_81, %c0_82] : memref<2x2x18x256xbf16, #tpu.memory_space<vmem>>, vector<1x2x16x256xbf16>
    %98 = vector.shape_cast %97 : vector<1x2x16x256xbf16> to vector<2x16x256xbf16>
    %99 = vector.shape_cast %98 : vector<2x16x256xbf16> to vector<32x256xbf16>
    %c1_83 = arith.constant 1 : index
    %c1_84 = arith.constant 1 : index
    %c0_85 = arith.constant 0 : index
    %c0_86 = arith.constant 0 : index
    %100 = vector.load %arg4[%c1_83, %c1_84, %c0_85, %c0_86] : memref<2x3x256x256xbf16, #tpu.memory_space<vmem>>, vector<1x1x256x256xbf16>
    %101 = vector.shape_cast %100 : vector<1x1x256x256xbf16> to vector<256x256xbf16>
    %cst_87 = arith.constant dense<0.000000e+00> : vector<32x256xf32>
    %102 = tpu.matmul %99, %101, %cst_87 {dimension_numbers = #tpu.dot_dimension_numbers<[1], [0], [0], [1], [0, 0, 1, 1], [], []>} : vector<32x256xbf16>, vector<256x256xbf16>, vector<32x256xf32> -> vector<32x256xf32>
    %c0_88 = arith.constant 0 : index
    %c0_89 = arith.constant 0 : index
    %103 = vector.load %arg11[%c0_88, %c0_89] : memref<32x256xf32, #tpu.memory_space<vmem>>, vector<32x256xf32>
    %104 = arith.addf %103, %102 : vector<32x256xf32>
    %c0_90 = arith.constant 0 : index
    %c0_91 = arith.constant 0 : index
    %105 = vector.load %arg11[%c0_90, %c0_91] : memref<32x256xf32, #tpu.memory_space<vmem>>, vector<32x256xf32>
    tpu.vector_store %arg11[%c0_90, %c0_91], %104 {strides = array<i32>} : memref<32x256xf32, #tpu.memory_space<vmem>>, vector<32x256xf32>,
    %c1_92 = arith.constant 1 : index
    %c0_93 = arith.constant 0 : index
    %c2_94 = arith.constant 2 : index
    %c0_95 = arith.constant 0 : index
    %106 = vector.load %arg9[%c1_92, %c0_93, %c2_94, %c0_95] : memref<2x2x18x256xbf16, #tpu.memory_space<vmem>>, vector<1x2x16x256xbf16>
    %107 = vector.shape_cast %106 : vector<1x2x16x256xbf16> to vector<2x16x256xbf16>
    %108 = vector.shape_cast %107 : vector<2x16x256xbf16> to vector<32x256xbf16>
    %c1_96 = arith.constant 1 : index
    %c2_97 = arith.constant 2 : index
    %c0_98 = arith.constant 0 : index
    %c0_99 = arith.constant 0 : index
    %109 = vector.load %arg4[%c1_96, %c2_97, %c0_98, %c0_99] : memref<2x3x256x256xbf16, #tpu.memory_space<vmem>>, vector<1x1x256x256xbf16>
    %110 = vector.shape_cast %109 : vector<1x1x256x256xbf16> to vector<256x256xbf16>
    %cst_100 = arith.constant dense<0.000000e+00> : vector<32x256xf32>
    %111 = tpu.matmul %108, %110, %cst_100 {dimension_numbers = #tpu.dot_dimension_numbers<[1], [0], [0], [1], [0, 0, 1, 1], [], []>} : vector<32x256xbf16>, vector<256x256xbf16>, vector<32x256xf32> -> vector<32x256xf32>
    %c0_101 = arith.constant 0 : index
    %c0_102 = arith.constant 0 : index
    %112 = vector.load %arg11[%c0_101, %c0_102] : memref<32x256xf32, #tpu.memory_space<vmem>>, vector<32x256xf32>
    %113 = arith.addf %112, %111 : vector<32x256xf32>
    %c0_103 = arith.constant 0 : index
    %c0_104 = arith.constant 0 : index
    %114 = vector.load %arg11[%c0_103, %c0_104] : memref<32x256xf32, #tpu.memory_space<vmem>>, vector<32x256xf32>
    tpu.vector_store %arg11[%c0_103, %c0_104], %113 {strides = array<i32>} : memref<32x256xf32, #tpu.memory_space<vmem>>, vector<32x256xf32>,
    %c0_105 = arith.constant 0 : index
    %c0_106 = arith.constant 0 : index
    %115 = vector.load %arg11[%c0_105, %c0_106] : memref<32x256xf32, #tpu.memory_space<vmem>>, vector<32x256xf32>
    %c0_107 = arith.constant 0 : index
    %c0_108 = arith.constant 0 : index
    %116 = vector.load %arg5[%c0_107, %c0_108] : memref<1x256xf32, #tpu.memory_space<vmem>>, vector<1x256xf32>
    %117 = vector.broadcast %116 : vector<1x256xf32> to vector<32x256xf32>
    %118 = arith.addf %115, %117 : vector<32x256xf32>
    %cst_109 = arith.constant 0.000000e+00 : f32
    %119 = vector.broadcast %cst_109 : f32 to vector<32x256xf32>
    %120 = arith.maximumf %118, %119 : vector<32x256xf32>
    %121 = arith.truncf %120 : vector<32x256xf32> to vector<32x256xbf16>
    %122 = vector.shape_cast %121 : vector<32x256xbf16> to vector<2x16x256xbf16>
    %c0_110 = arith.constant 0 : index
    %c1_111 = arith.constant 1 : index
    %c0_112 = arith.constant 0 : index
    %123 = vector.load %arg10[%c0_110, %c1_111, %c0_112] : memref<2x18x256xbf16, #tpu.memory_space<vmem>>, vector<2x16x256xbf16>
    tpu.vector_store %arg10[%c0_110, %c1_111, %c0_112], %122 {strides = array<i32>} : memref<2x18x256xbf16, #tpu.memory_space<vmem>>, vector<2x16x256xbf16>,
    %c0_113 = arith.constant 0 : index
    %c0_114 = arith.constant 0 : index
    %c0_115 = arith.constant 0 : index
    %124 = vector.load %arg10[%c0_113, %c0_114, %c0_115] : memref<2x18x256xbf16, #tpu.memory_space<vmem>>, vector<2x16x256xbf16>
    %125 = vector.shape_cast %124 : vector<2x16x256xbf16> to vector<32x256xbf16>
    %c0_116 = arith.constant 0 : index
    %c0_117 = arith.constant 0 : index
    %c0_118 = arith.constant 0 : index
    %126 = vector.load %arg6[%c0_116, %c0_117, %c0_118] : memref<3x256x128xbf16, #tpu.memory_space<vmem>>, vector<1x256x128xbf16>
    %127 = vector.shape_cast %126 : vector<1x256x128xbf16> to vector<256x128xbf16>
    %cst_119 = arith.constant dense<0.000000e+00> : vector<32x128xf32>
    %128 = tpu.matmul %125, %127, %cst_119 {dimension_numbers = #tpu.dot_dimension_numbers<[1], [0], [0], [1], [0, 0, 1, 1], [], []>} : vector<32x256xbf16>, vector<256x128xbf16>, vector<32x128xf32> -> vector<32x128xf32>
    %c0_120 = arith.constant 0 : index
    %c0_121 = arith.constant 0 : index
    %129 = vector.load %arg12[%c0_120, %c0_121] : memref<32x128xf32, #tpu.memory_space<vmem>>, vector<32x128xf32>
    tpu.vector_store %arg12[%c0_120, %c0_121], %128 {strides = array<i32>} : memref<32x128xf32, #tpu.memory_space<vmem>>, vector<32x128xf32>,
    %c0_122 = arith.constant 0 : index
    %c1_123 = arith.constant 1 : index
    %c0_124 = arith.constant 0 : index
    %130 = vector.load %arg10[%c0_122, %c1_123, %c0_124] : memref<2x18x256xbf16, #tpu.memory_space<vmem>>, vector<2x16x256xbf16>
    %131 = vector.shape_cast %130 : vector<2x16x256xbf16> to vector<32x256xbf16>
    %c1_125 = arith.constant 1 : index
    %c0_126 = arith.constant 0 : index
    %c0_127 = arith.constant 0 : index
    %132 = vector.load %arg6[%c1_125, %c0_126, %c0_127] : memref<3x256x128xbf16, #tpu.memory_space<vmem>>, vector<1x256x128xbf16>
    %133 = vector.shape_cast %132 : vector<1x256x128xbf16> to vector<256x128xbf16>
    %cst_128 = arith.constant dense<0.000000e+00> : vector<32x128xf32>
    %134 = tpu.matmul %131, %133, %cst_128 {dimension_numbers = #tpu.dot_dimension_numbers<[1], [0], [0], [1], [0, 0, 1, 1], [], []>} : vector<32x256xbf16>, vector<256x128xbf16>, vector<32x128xf32> -> vector<32x128xf32>
    %c0_129 = arith.constant 0 : index
    %c0_130 = arith.constant 0 : index
    %135 = vector.load %arg12[%c0_129, %c0_130] : memref<32x128xf32, #tpu.memory_space<vmem>>, vector<32x128xf32>
    %136 = arith.addf %135, %134 : vector<32x128xf32>
    %c0_131 = arith.constant 0 : index
    %c0_132 = arith.constant 0 : index
    %137 = vector.load %arg12[%c0_131, %c0_132] : memref<32x128xf32, #tpu.memory_space<vmem>>, vector<32x128xf32>
    tpu.vector_store %arg12[%c0_131, %c0_132], %136 {strides = array<i32>} : memref<32x128xf32, #tpu.memory_space<vmem>>, vector<32x128xf32>,
    %c0_133 = arith.constant 0 : index
    %c2_134 = arith.constant 2 : index
    %c0_135 = arith.constant 0 : index
    %138 = vector.load %arg10[%c0_133, %c2_134, %c0_135] : memref<2x18x256xbf16, #tpu.memory_space<vmem>>, vector<2x16x256xbf16>
    %139 = vector.shape_cast %138 : vector<2x16x256xbf16> to vector<32x256xbf16>
    %c2_136 = arith.constant 2 : index
    %c0_137 = arith.constant 0 : index
    %c0_138 = arith.constant 0 : index
    %140 = vector.load %arg6[%c2_136, %c0_137, %c0_138] : memref<3x256x128xbf16, #tpu.memory_space<vmem>>, vector<1x256x128xbf16>
    %141 = vector.shape_cast %140 : vector<1x256x128xbf16> to vector<256x128xbf16>
    %cst_139 = arith.constant dense<0.000000e+00> : vector<32x128xf32>
    %142 = tpu.matmul %139, %141, %cst_139 {dimension_numbers = #tpu.dot_dimension_numbers<[1], [0], [0], [1], [0, 0, 1, 1], [], []>} : vector<32x256xbf16>, vector<256x128xbf16>, vector<32x128xf32> -> vector<32x128xf32>
    %c0_140 = arith.constant 0 : index
    %c0_141 = arith.constant 0 : index
    %143 = vector.load %arg12[%c0_140, %c0_141] : memref<32x128xf32, #tpu.memory_space<vmem>>, vector<32x128xf32>
    %144 = arith.addf %143, %142 : vector<32x128xf32>
    %c0_142 = arith.constant 0 : index
    %c0_143 = arith.constant 0 : index
    %145 = vector.load %arg12[%c0_142, %c0_143] : memref<32x128xf32, #tpu.memory_space<vmem>>, vector<32x128xf32>
    tpu.vector_store %arg12[%c0_142, %c0_143], %144 {strides = array<i32>} : memref<32x128xf32, #tpu.memory_space<vmem>>, vector<32x128xf32>,
    %c0_144 = arith.constant 0 : index
    %c0_145 = arith.constant 0 : index
    %146 = vector.load %arg12[%c0_144, %c0_145] : memref<32x128xf32, #tpu.memory_space<vmem>>, vector<32x128xf32>
    %c0_146 = arith.constant 0 : index
    %c0_147 = arith.constant 0 : index
    %147 = vector.load %arg7[%c0_146, %c0_147] : memref<1x128xf32, #tpu.memory_space<vmem>>, vector<1x128xf32>
    %148 = vector.broadcast %147 : vector<1x128xf32> to vector<32x128xf32>
    %149 = arith.addf %146, %148 : vector<32x128xf32>
    %cst_148 = arith.constant 0.000000e+00 : f32
    %150 = vector.broadcast %cst_148 : f32 to vector<32x128xf32>
    %151 = arith.maximumf %149, %150 : vector<32x128xf32>
    %152 = vector.shape_cast %151 : vector<32x128xf32> to vector<2x16x128xf32>
    %c0_149 = arith.constant 0 : index
    %c0_150 = arith.constant 0 : index
    %c0_151 = arith.constant 0 : index
    %153 = vector.load %arg8[%c0_149, %c0_150, %c0_151] : memref<2x16x128xf32, #tpu.memory_space<vmem>>, vector<2x16x128xf32>
    tpu.vector_store %arg8[%c0_149, %c0_150, %c0_151], %152 {strides = array<i32>} : memref<2x16x128xf32, #tpu.memory_space<vmem>>, vector<2x16x128xf32>,
    return
  }
  func.func @transform_0(%arg0: i32) -> (i32, i32, i32) {
    %c0_i32 = arith.constant 0 : i32
    %c0_i32_0 = arith.constant 0 : i32
    %c0_i32_1 = arith.constant 0 : i32
    return %arg0, %c0_i32, %c0_i32_0 : i32, i32, i32
  }
  func.func @transform_1(%arg0: i32) -> (i32, i32) {
    %c0_i32 = arith.constant 0 : i32
    %c0_i32_0 = arith.constant 0 : i32
    %c0_i32_1 = arith.constant 0 : i32
    return %c0_i32, %c0_i32_0 : i32, i32
  }
  func.func @transform_2(%arg0: i32) -> (i32, i32) {
    %c0_i32 = arith.constant 0 : i32
    %c0_i32_0 = arith.constant 0 : i32
    %c0_i32_1 = arith.constant 0 : i32
    return %c0_i32, %c0_i32_0 : i32, i32
  }
  func.func @transform_3(%arg0: i32) -> (i32, i32, i32, i32) {
    %c0_i32 = arith.constant 0 : i32
    %c0_i32_0 = arith.constant 0 : i32
    %c0_i32_1 = arith.constant 0 : i32
    %c0_i32_2 = arith.constant 0 : i32
    %c0_i32_3 = arith.constant 0 : i32
    return %c0_i32, %c0_i32_0, %c0_i32_1, %c0_i32_2 : i32, i32, i32, i32
  }
  func.func @transform_4(%arg0: i32) -> (i32, i32) {
    %c0_i32 = arith.constant 0 : i32
    %c0_i32_0 = arith.constant 0 : i32
    %c0_i32_1 = arith.constant 0 : i32
    return %c0_i32, %c0_i32_0 : i32, i32
  }
  func.func @transform_5(%arg0: i32) -> (i32, i32, i32) {
    %c0_i32 = arith.constant 0 : i32
    %c0_i32_0 = arith.constant 0 : i32
    %c0_i32_1 = arith.constant 0 : i32
    %c0_i32_2 = arith.constant 0 : i32
    return %c0_i32, %c0_i32_0, %c0_i32_1 : i32, i32, i32
  }
  func.func @transform_6(%arg0: i32) -> (i32, i32) {
    %c0_i32 = arith.constant 0 : i32
    %c0_i32_0 = arith.constant 0 : i32
    %c0_i32_1 = arith.constant 0 : i32
    return %c0_i32, %c0_i32_0 : i32, i32
  }
  func.func @transform_7(%arg0: i32) -> (i32, i32, i32) {
    %c0_i32 = arith.constant 0 : i32
    %c0_i32_0 = arith.constant 0 : i32
    %c0_i32_1 = arith.constant 0 : i32
    return %arg0, %c0_i32, %c0_i32_0 : i32, i32, i32
  }
}

</mosaic_0001>

<llo_original>
// kernel: conv_patch_embedding.1
$region0: #{conv_patch_embedding.1}
  #allocation0 [shape = 'u32[]', space=smem, size = 0x4, offset = 0x4, fixed_abs, tag = 'smem constant byte address 0x4 - core index']
  #allocation1 [shape = 'u32[144,128]{1,0:T(1,128)}', space=vmem, size = 0x12000, scoped, tag = 'internal scratch']
  #allocation2 [shape = 'bf16[2,2,18,256]{3,2,1,0:T(8,128)(2,1)}', space=vmem, size = 0xc000, scoped, tag = 'scratch operand']
  #allocation3 [shape = 'bf16[2,18,256]{2,1,0:T(8,128)(2,1)}', space=vmem, size = 0x6000, scoped, tag = 'scratch operand']
  #allocation4 [shape = 'f32[32,256]{1,0:T(8,128)}', space=vmem, size = 0x8000, scoped, tag = 'scratch operand']
  #allocation5 [shape = 'f32[32,128]{1,0:T(8,128)}', space=vmem, size = 0x4000, scoped, tag = 'scratch operand']
  %s0 = inlined_call_operand.vmem [shape: f32[4,18,2], index: 0, kind: input, shape index: {}]
  %s1 = inlined_call_operand.vmem [shape: f32[3,256], index: 1, kind: input, shape index: {}]
  %s2 = inlined_call_operand.vmem [shape: f32[1,256], index: 2, kind: input, shape index: {}]
  %s3 = inlined_call_operand.vmem [shape: bf16[2,3,256,256], index: 3, kind: input, shape index: {}]
  %s4 = inlined_call_operand.vmem [shape: f32[1,256], index: 4, kind: input, shape index: {}]
  %s5 = inlined_call_operand.vmem [shape: bf16[3,256,128], index: 5, kind: input, shape index: {}]
  %s6 = inlined_call_operand.vmem [shape: f32[1,128], index: 6, kind: input, shape index: {}]
  %s7 = inlined_call_operand.hbm [shape: f32[4,16,128], index: 7, kind: output, shape index: {}]
  %s8 = sld [smem:[#allocation0]]
  $region65: #{conv_patch_embedding.1} parent=0
    _
  %s10 = ssub.s32 1, %s8
  %s11 = scalar_select 0, %s10, %s8
  $region1: #{conv_patch_embedding.1} parent=0
    #allocation6 [shape = 'u8[32768]{0}', space=vmem, size = 0x8000, scoped, tag = 'output window, operand 0']
    #allocation7 [shape = 's32[2]{0}', space=sflag, size = 0x8, scoped, tag = 'scoped memory for conv_patch_embedding.1']
    %12 = vsyncpa [#allocation7], 0
    %s13 = scalar_lea.sflag [#allocation7], 1
    %14 = vsyncpa %s13, 0
    loop: start=0, step=1, limit=4
    $region2: #{conv_patch_embedding.1} parent=1 // loop_pre_header
      _
    $region3: #{conv_patch_embedding.1} parent=1 // loop_header
      %s16 = sphi 0, %s20
      %p17 = scmp.ge.s32.totalorder %s16, 4
      %s26 = sphi 0, %s28
      %s29 = sphi 0, %s26
      %s30 = sphi 0, %s29
      %s46 = sphi 0, %s30
      %s50 = sphi 0, %s50
      %s52 = sphi 0, %s50
      %s53 = sphi 0, %s52
      %s67 = sphi 0, %s53
      %s71 = sphi 0, %s71
      %s73 = sphi 0, %s71
      %s74 = sphi 0, %s73
      %s88 = sphi 0, %s74
      %s92 = sphi 0, %s92
      %s94 = sphi 0, %s92
      %s95 = sphi 0, %s94
      %s109 = sphi 0, %s95
      %s113 = sphi 0, %s113
      %s115 = sphi 0, %s113
      %s116 = sphi 0, %s115
      %s130 = sphi 0, %s116
      %s134 = sphi 0, %s134
      %s136 = sphi 0, %s134
      %s137 = sphi 0, %s136
      %s151 = sphi 0, %s137
      %s155 = sphi 0, %s155
      %s157 = sphi 0, %s155
      %s158 = sphi 0, %s157
      %s172 = sphi 0, %s158
      %s178 = sphi 0, %s180
      %s181 = sphi 0, %s178
      %s182 = sphi 0, %s181
      %s198 = sphi 0, %s182
    $region4: #{conv_patch_embedding.1} parent=1 // loop_header_branch
      %19 = sbr.rel (%p17) target = $region8
    $region5: #{conv_patch_embedding.1} parent=1 // loop_body
      %s21 = ssub.s32 %s16, 1
      %s22 = ssub.s32 %s16, 2
      %s23 = sadd.s32 %s16, 1
      %s24 = ssub.s32 %s16, %s23
      %p25 = scmp.eq.s32.totalorder %s24, 0
      %s27 = sadd.s32 %s26, 1
      %s28 = scalar_select %p25, %s26, %s27
      %p31 = pneg %p25
      %p32 = scmp.eq.s32.totalorder %s16, 1
      %p33 = por %p31, %p32
      %p34 = scmp.ne.s32.totalorder %s26, %s29
      %p35 = scmp.eq.s32.totalorder %s16, 0
      %p36 = por %p34, %p35
      %p37 = scmp.ne.s32.totalorder %s26, %s29
      %p38 = scmp.eq.s32.totalorder %s21, 1
      %p39 = por %p37, %p38
      %p40 = scmp.ne.s32.totalorder %s29, %s30
      %p41 = scmp.eq.s32.totalorder %s21, 0
      %p42 = por %p40, %p41
      %p43 = scmp.ne.s32.totalorder %s29, %s30
      %p44 = scmp.eq.s32.totalorder %s22, 1
      %p45 = por %p43, %p44
      %p47 = scmp.ne.s32.totalorder %s30, %s46
      %p48 = scmp.eq.s32.totalorder %s22, 0
      %p49 = por %p47, %p48
      %s51 = sadd.s32 %s50, 1
      %p54 = scmp.eq.s32.totalorder %s16, 1
      %p55 = scmp.ne.s32.totalorder %s50, %s52
      %p56 = scmp.eq.s32.totalorder %s16, 0
      %p57 = por %p55, %p56
      %p58 = scmp.ne.s32.totalorder %s50, %s52
      %p59 = scmp.eq.s32.totalorder %s21, 1
      %p60 = por %p58, %p59
      %p61 = scmp.ne.s32.totalorder %s52, %s53
      %p62 = scmp.eq.s32.totalorder %s21, 0
      %p63 = por %p61, %p62
      %p64 = scmp.ne.s32.totalorder %s52, %s53
      %p65 = scmp.eq.s32.totalorder %s22, 1
      %p66 = por %p64, %p65
      %p68 = scmp.ne.s32.totalorder %s53, %s67
      %p69 = scmp.eq.s32.totalorder %s22, 0
      %p70 = por %p68, %p69
      %s72 = sadd.s32 %s71, 1
      %p75 = scmp.eq.s32.totalorder %s16, 1
      %p76 = scmp.ne.s32.totalorder %s71, %s73
      %p77 = scmp.eq.s32.totalorder %s16, 0
      %p78 = por %p76, %p77
      %p79 = scmp.ne.s32.totalorder %s71, %s73
      %p80 = scmp.eq.s32.totalorder %s21, 1
      %p81 = por %p79, %p80
      %p82 = scmp.ne.s32.totalorder %s73, %s74
      %p83 = scmp.eq.s32.totalorder %s21, 0
      %p84 = por %p82, %p83
      %p85 = scmp.ne.s32.totalorder %s73, %s74
      %p86 = scmp.eq.s32.totalorder %s22, 1
      %p87 = por %p85, %p86
      %p89 = scmp.ne.s32.totalorder %s74, %s88
      %p90 = scmp.eq.s32.totalorder %s22, 0
      %p91 = por %p89, %p90
      %s93 = sadd.s32 %s92, 1
      %p96 = scmp.eq.s32.totalorder %s16, 1
      %p97 = scmp.ne.s32.totalorder %s92, %s94
      %p98 = scmp.eq.s32.totalorder %s16, 0
      %p99 = por %p97, %p98
      %p100 = scmp.ne.s32.totalorder %s92, %s94
      %p101 = scmp.eq.s32.totalorder %s21, 1
      %p102 = por %p100, %p101
      %p103 = scmp.ne.s32.totalorder %s94, %s95
      %p104 = scmp.eq.s32.totalorder %s21, 0
      %p105 = por %p103, %p104
      %p106 = scmp.ne.s32.totalorder %s94, %s95
      %p107 = scmp.eq.s32.totalorder %s22, 1
      %p108 = por %p106, %p107
      %p110 = scmp.ne.s32.totalorder %s95, %s109
      %p111 = scmp.eq.s32.totalorder %s22, 0
      %p112 = por %p110, %p111
      %s114 = sadd.s32 %s113, 1
      %p117 = scmp.eq.s32.totalorder %s16, 1
      %p118 = scmp.ne.s32.totalorder %s113, %s115
      %p119 = scmp.eq.s32.totalorder %s16, 0
      %p120 = por %p118, %p119
      %p121 = scmp.ne.s32.totalorder %s113, %s115
      %p122 = scmp.eq.s32.totalorder %s21, 1
      %p123 = por %p121, %p122
      %p124 = scmp.ne.s32.totalorder %s115, %s116
      %p125 = scmp.eq.s32.totalorder %s21, 0
      %p126 = por %p124, %p125
      %p127 = scmp.ne.s32.totalorder %s115, %s116
      %p128 = scmp.eq.s32.totalorder %s22, 1
      %p129 = por %p127, %p128
      %p131 = scmp.ne.s32.totalorder %s116, %s130
      %p132 = scmp.eq.s32.totalorder %s22, 0
      %p133 = por %p131, %p132
      %s135 = sadd.s32 %s134, 1
      %p138 = scmp.eq.s32.totalorder %s16, 1
      %p139 = scmp.ne.s32.totalorder %s134, %s136
      %p140 = scmp.eq.s32.totalorder %s16, 0
      %p141 = por %p139, %p140
      %p142 = scmp.ne.s32.totalorder %s134, %s136
      %p143 = scmp.eq.s32.totalorder %s21, 1
      %p144 = por %p142, %p143
      %p145 = scmp.ne.s32.totalorder %s136, %s137
      %p146 = scmp.eq.s32.totalorder %s21, 0
      %p147 = por %p145, %p146
      %p148 = scmp.ne.s32.totalorder %s136, %s137
      %p149 = scmp.eq.s32.totalorder %s22, 1
      %p150 = por %p148, %p149
      %p152 = scmp.ne.s32.totalorder %s137, %s151
      %p153 = scmp.eq.s32.totalorder %s22, 0
      %p154 = por %p152, %p153
      %s156 = sadd.s32 %s155, 1
      %p159 = scmp.eq.s32.totalorder %s16, 1
      %p160 = scmp.ne.s32.totalorder %s155, %s157
      %p161 = scmp.eq.s32.totalorder %s16, 0
      %p162 = por %p160, %p161
      %p163 = scmp.ne.s32.totalorder %s155, %s157
      %p164 = scmp.eq.s32.totalorder %s21, 1
      %p165 = por %p163, %p164
      %p166 = scmp.ne.s32.totalorder %s157, %s158
      %p167 = scmp.eq.s32.totalorder %s21, 0
      %p168 = por %p166, %p167
      %p169 = scmp.ne.s32.totalorder %s157, %s158
      %p170 = scmp.eq.s32.totalorder %s22, 1
      %p171 = por %p169, %p170
      %p173 = scmp.ne.s32.totalorder %s158, %s172
      %p174 = scmp.eq.s32.totalorder %s22, 0
      %p175 = por %p173, %p174
      %s176 = ssub.s32 %s16, %s23
      %p177 = scmp.eq.s32.totalorder %s176, 0
      %s179 = sadd.s32 %s178, 1
      %s180 = scalar_select %p177, %s178, %s179
      %p183 = pneg %p177
      %p184 = scmp.eq.s32.totalorder %s16, 1
      %p185 = por %p183, %p184
      %p186 = scmp.ne.s32.totalorder %s178, %s181
      %p187 = scmp.eq.s32.totalorder %s16, 0
      %p188 = por %p186, %p187
      %p189 = scmp.ne.s32.totalorder %s178, %s181
      %p190 = scmp.eq.s32.totalorder %s21, 1
      %p191 = por %p189, %p190
      %p192 = scmp.ne.s32.totalorder %s181, %s182
      %p193 = scmp.eq.s32.totalorder %s21, 0
      %p194 = por %p192, %p193
      %p195 = scmp.ne.s32.totalorder %s181, %s182
      %p196 = scmp.eq.s32.totalorder %s22, 1
      %p197 = por %p195, %p196
      %p199 = scmp.ne.s32.totalorder %s182, %s198
      %p200 = scmp.eq.s32.totalorder %s22, 0
      %p201 = por %p199, %p200
      %p202 = scmp.le.s32.totalorder 1, %s16
      %p203 = scmp.lt.s32.totalorder %s16, 3
      %p204 = pnand %p202, %p203
      %p205 = pneg %p204
      // Predicated region
      $region9: #{conv_patch_embedding.1} parent=5 // pred_check
        _
      $region10: #{conv_patch_embedding.1} parent=5 // pred_check_branch
        %207 = sbr.rel (%p204) target = $region12
      $region11: #{conv_patch_embedding.1} parent=5 // pred_region
        %s208 = ssub.s32 %s16, 1
        // Predicated region
        $region13: #{conv_patch_embedding.1} parent=11 // pred_check
          %p209 = pneg %p63
        $region14: #{conv_patch_embedding.1} parent=11 // pred_check_branch
          %211 = sbr.rel (%p209) target = $region16
        $region15: #{conv_patch_embedding.1} parent=11 // pred_region
          _
        $region16: #{conv_patch_embedding.1} parent=11 // pred_fallthru
          _
        // Predicated region
        $region17: #{conv_patch_embedding.1} parent=11 // pred_check
          %p212 = pneg %p84
        $region18: #{conv_patch_embedding.1} parent=11 // pred_check_branch
          %214 = sbr.rel (%p212) target = $region20
        $region19: #{conv_patch_embedding.1} parent=11 // pred_region
          _
        $region20: #{conv_patch_embedding.1} parent=11 // pred_fallthru
          _
        // Predicated region
        $region21: #{conv_patch_embedding.1} parent=11 // pred_check
          %p215 = pneg %p105
        $region22: #{conv_patch_embedding.1} parent=11 // pred_check_branch
          %217 = sbr.rel (%p215) target = $region24
        $region23: #{conv_patch_embedding.1} parent=11 // pred_region
          _
        $region24: #{conv_patch_embedding.1} parent=11 // pred_fallthru
          _
        // Predicated region
        $region25: #{conv_patch_embedding.1} parent=11 // pred_check
          %p218 = pneg %p126
        $region26: #{conv_patch_embedding.1} parent=11 // pred_check_branch
          %220 = sbr.rel (%p218) target = $region28
        $region27: #{conv_patch_embedding.1} parent=11 // pred_region
          _
        $region28: #{conv_patch_embedding.1} parent=11 // pred_fallthru
          _
        // Predicated region
        $region29: #{conv_patch_embedding.1} parent=11 // pred_check
          %p221 = pneg %p147
        $region30: #{conv_patch_embedding.1} parent=11 // pred_check_branch
          %223 = sbr.rel (%p221) target = $region32
        $region31: #{conv_patch_embedding.1} parent=11 // pred_region
          _
        $region32: #{conv_patch_embedding.1} parent=11 // pred_fallthru
          _
        // Predicated region
        $region33: #{conv_patch_embedding.1} parent=11 // pred_check
          %p224 = pneg %p168
        $region34: #{conv_patch_embedding.1} parent=11 // pred_check_branch
          %226 = sbr.rel (%p224) target = $region36
        $region35: #{conv_patch_embedding.1} parent=11 // pred_region
          _
        $region36: #{conv_patch_embedding.1} parent=11 // pred_fallthru
          _
      $region12: #{conv_patch_embedding.1} parent=5 // pred_fallthru
        _
      %p227 = scmp.lt.s32.totalorder %s16, 2
      // Predicated region
      $region37: #{conv_patch_embedding.1} parent=5 // pred_check
        %p228 = pneg %p227
      $region38: #{conv_patch_embedding.1} parent=5 // pred_check_branch
        %230 = sbr.rel (%p228) target = $region40
      $region39: #{conv_patch_embedding.1} parent=5 // pred_region
        // Predicated region
        $region41: #{conv_patch_embedding.1} parent=39 // pred_check
          %p231 = pneg %p36
        $region42: #{conv_patch_embedding.1} parent=39 // pred_check_branch
          %233 = sbr.rel (%p231) target = $region44
        $region43: #{conv_patch_embedding.1} parent=39 // pred_region
          %s234 = smul.u32 2, %s16
          %p235 = scmp.lt.s32.totalorder %s234, 3
          %s236 = scalar_select %p235, %s234, 3
          %s237 = smul.addr %s236, 3
          %s238 = smul.addr %s237, 8
          %s239 = scalar_lea.vmem %s0, %s238
          %s240 = smul.u32 2, %s16
        $region44: #{conv_patch_embedding.1} parent=39 // pred_fallthru
          _
      $region40: #{conv_patch_embedding.1} parent=5 // pred_fallthru
        _
      %p241 = scmp.le.s32.totalorder 1, %s16
      %p242 = scmp.lt.s32.totalorder %s16, 3
      %p243 = pnand %p241, %p242
      %p244 = pneg %p243
      // Predicated region
      $region45: #{conv_patch_embedding.1} parent=5 // pred_check
        _
      $region46: #{conv_patch_embedding.1} parent=5 // pred_check_branch
        %246 = sbr.rel (%p243) target = $region48
      $region47: #{conv_patch_embedding.1} parent=5 // pred_region
        %s247 = ssub.s32 %s16, 1
        %s248 = smul.u32 2, %s21
        %p249 = scmp.lt.s32.totalorder %s248, 3
        %s250 = scalar_select %p249, %s248, 3
        %s251 = smul.addr %s250, 3
        %s252 = smul.addr %s251, 8
        %s253 = scalar_lea.vmem %s0, %s252
        %p254 = pneg %p42
        %p255 = pneg %p39
        %p256 = pneg %p63
        %p257 = pneg %p60
        %p258 = pneg %p84
        %p259 = pneg %p81
        %p260 = pneg %p105
        %p261 = pneg %p102
        %p262 = pneg %p126
        %p263 = pneg %p123
        %p264 = pneg %p147
        %p265 = pneg %p144
        %p266 = pneg %p168
        %p267 = pneg %p165
        %p268 = pneg %p194
        %p269 = pneg %p191
        %s270 = sand.u32 %s181, 1
        %s271 = scalar_lea.sflag [#allocation7], %s270
        %s272 = sand.u32 %s181, 1
        %s273 = smul.addr %s272, 32
        %s274 = scalar_lea.vmem [#allocation6], %s273
        %s275 = smul.u32 2, %s21
        %p276 = scmp.lt.s32.totalorder %s275, 3
        %s277 = scalar_select %p276, %s275, 3
        %s278 = smul.addr %s277, 3
        %s279 = smul.addr %s278, 8
        %s280 = scalar_lea.vmem %s0, %s279
        %s281 = smul.u32 2, %s21
        %s282 = smul.u32 2, %s21
        %p284 = scmp.eq.s32.totalorder %s21, 0
        // Predicated region
        $region49: #{conv_patch_embedding.1} parent=47 // pred_check
          %p285 = pneg %p284
        $region50: #{conv_patch_embedding.1} parent=47 // pred_check_branch
          %287 = sbr.rel (%p285) target = $region52
        $region51: #{conv_patch_embedding.1} parent=47 // pred_region
          %vm288 = vcmask 1040384
          %vm289 = vsmask.f32 256
          %vm290 = vmand %vm288, %vm289
          %vm291 = vcmask 1044484
          %vm292 = vsmask.f32 4352
          %vm293 = vmand %vm291, %vm292
          %vm294 = vmor %vm293, %vm290
          %v295 = vld [vmem:[#allocation2] sm:$0x11]
          %v296 = vsel %vm294, 0, %v295
          %297 = vst [vmem:[#allocation2] sm:$0x11] %v296
          %v298 = vld [vmem:[#allocation2 + $0x18] sm:$0x11]
          %v299 = vsel %vm294, 0, %v298
          %300 = vst [vmem:[#allocation2 + $0x18] sm:$0x11] %v299
          %v301 = vld [vmem:[#allocation2 + $0x30] sm:$0x11]
          %v302 = vsel %vm294, 0, %v301
          %303 = vst [vmem:[#allocation2 + $0x30] sm:$0x11] %v302
          %v304 = vld [vmem:[#allocation2 + $0x48] sm:$0x11]
          %v305 = vsel %vm294, 0, %v304
          %306 = vst [vmem:[#allocation2 + $0x48] sm:$0x11] %v305
          %vm307 = vsmask.f32 7938
          %vm308 = vmand %vm288, %vm307
          %vm309 = vsmask.f32 7954
          %vm310 = vmand %vm291, %vm309
          %vm311 = vmor %vm310, %vm308
          %v312 = vld [vmem:[#allocation2 + $0x10] sm:$0x11]
          %v313 = vsel %vm311, 0, %v312
          %314 = vst [vmem:[#allocation2 + $0x10] sm:$0x11] %v313
          %v315 = vld [vmem:[#allocation2 + $0x28] sm:$0x11]
          %v316 = vsel %vm311, 0, %v315
          %317 = vst [vmem:[#allocation2 + $0x28] sm:$0x11] %v316
          %v318 = vld [vmem:[#allocation2 + $0x40] sm:$0x11]
          %v319 = vsel %vm311, 0, %v318
          %320 = vst [vmem:[#allocation2 + $0x40] sm:$0x11] %v319
          %v321 = vld [vmem:[#allocation2 + $0x58] sm:$0x11]
          %v322 = vsel %vm311, 0, %v321
          %323 = vst [vmem:[#allocation2 + $0x58] sm:$0x11] %v322
          %v324 = vld [vmem:[#allocation3] sm:$0x11]
          %v325 = vsel %vm294, 0, %v324
          %326 = vst [vmem:[#allocation3] sm:$0x11] %v325
          %v327 = vld [vmem:[#allocation3 + $0x18] sm:$0x11]
          %v328 = vsel %vm294, 0, %v327
          %329 = vst [vmem:[#allocation3 + $0x18] sm:$0x11] %v328
          %v330 = vld [vmem:[#allocation3 + $0x10] sm:$0x11]
          %v331 = vsel %vm311, 0, %v330
          %332 = vst [vmem:[#allocation3 + $0x10] sm:$0x11] %v331
          %v333 = vld [vmem:[#allocation3 + $0x28] sm:$0x11]
          %v334 = vsel %vm311, 0, %v333
          %335 = vst [vmem:[#allocation3 + $0x28] sm:$0x11] %v334
        $region52: #{conv_patch_embedding.1} parent=47 // pred_fallthru
          _
        %v336 = vld [vmem:[%s1] sm:$0x77]
        %v337 = vld [vmem:[%s2] sm:$0x3]
        %v338 = vld [vmem:[%s280] sm:$0xff]
        %v339 = vld [vmem:[%s280 + $0x8] sm:$0xff]
        %v340 = vld [vmem:[%s280 + $0x18] sm:$0xff]
        %v341 = vld [vmem:[%s280 + $0x20] sm:$0xff]
        %343 = vset.pattern.permute.xlu0 0
        %344 = vperm.xlu0 %343, %v338
        %v345 = vpop.permute.xlu0 %344
        %348 = vset.pattern.permute.xlu0 0
        %349 = vperm.xlu0 %348, %v339
        %v350 = vpop.permute.xlu0 %349
        %353 = vset.pattern.permute.xlu0 0
        %354 = vperm.xlu0 %353, %v340
        %v355 = vpop.permute.xlu0 %354
        %358 = vset.pattern.permute.xlu0 0
        %359 = vperm.xlu0 %358, %v341
        %v360 = vpop.permute.xlu0 %359
        %v363 = vlaneseq
        %v364 = vshrl.u32 %v363, 7
        %v365 = vsub.s32 0, %v364
        %v366 = vrot.slane %v336, %v365
        %v367 = vlaneseq
        %v368 = vshrl.u32 %v367, 7
        %v369 = vsub.s32 4, %v368
        %v370 = vrot.slane %v336, %v369
        %v373 = vlaneseq
        %v374 = vshrl.u32 %v373, 7
        %v375 = vsub.s32 0, %v374
        %v376 = vrot.slane %v366, %v375
        %v377 = vlaneseq
        %v378 = vshrl.u32 %v377, 7
        %v379 = vsub.s32 0, %v378
        %v380 = vrot.slane %v370, %v379
        %v381 = vmul.f32 %v345, %v376
        %v382 = vmul.f32 %v345, %v380
        %v383 = vmul.f32 %v350, %v376
        %v384 = vmul.f32 %v350, %v380
        %v385 = vmul.f32 %v355, %v376
        %v386 = vmul.f32 %v355, %v380
        %v387 = vmul.f32 %v360, %v376
        %v388 = vmul.f32 %v360, %v380
        %v390 = vlaneseq
        %v391 = vshrl.u32 %v390, 7
        %v392 = vsub.s32 0, %v391
        %v393 = vrot.slane %v337, %v392
        %v394 = vlaneseq
        %v395 = vshrl.u32 %v394, 7
        %v396 = vsub.s32 1, %v395
        %v397 = vrot.slane %v337, %v396
        %v400 = vadd.f32 %v393, %v381
        %v401 = vadd.f32 %v397, %v382
        %v402 = vadd.f32 %v393, %v383
        %v403 = vadd.f32 %v397, %v384
        %v404 = vadd.f32 %v393, %v385
        %v405 = vadd.f32 %v397, %v386
        %v406 = vadd.f32 %v393, %v387
        %v407 = vadd.f32 %v397, %v388
        %v408 = vld [vmem:[%s280 + $0x1] sm:$0xff]
        %v409 = vld [vmem:[%s280 + $0x9] sm:$0xff]
        %v410 = vld [vmem:[%s280 + $0x19] sm:$0xff]
        %v411 = vld [vmem:[%s280 + $0x21] sm:$0xff]
        %413 = vset.pattern.permute.xlu0 0
        %414 = vperm.xlu0 %413, %v408
        %v415 = vpop.permute.xlu0 %414
        %418 = vset.pattern.permute.xlu0 0
        %419 = vperm.xlu0 %418, %v409
        %v420 = vpop.permute.xlu0 %419
        %423 = vset.pattern.permute.xlu0 0
        %424 = vperm.xlu0 %423, %v410
        %v425 = vpop.permute.xlu0 %424
        %428 = vset.pattern.permute.xlu0 0
        %429 = vperm.xlu0 %428, %v411
        %v430 = vpop.permute.xlu0 %429
        %v432 = vlaneseq
        %v433 = vshrl.u32 %v432, 7
        %v434 = vsub.s32 1, %v433
        %v435 = vrot.slane %v336, %v434
        %v436 = vlaneseq
        %v437 = vshrl.u32 %v436, 7
        %v438 = vsub.s32 5, %v437
        %v439 = vrot.slane %v336, %v438
        %v442 = vlaneseq
        %v443 = vshrl.u32 %v442, 7
        %v444 = vsub.s32 1, %v443
        %v445 = vrot.slane %v435, %v444
        %v446 = vlaneseq
        %v447 = vshrl.u32 %v446, 7
        %v448 = vsub.s32 1, %v447
        %v449 = vrot.slane %v439, %v448
        %v450 = vmul.f32 %v415, %v445
        %v451 = vmul.f32 %v415, %v449
        %v452 = vmul.f32 %v420, %v445
        %v453 = vmul.f32 %v420, %v449
        %v454 = vmul.f32 %v425, %v445
        %v455 = vmul.f32 %v425, %v449
        %v456 = vmul.f32 %v430, %v445
        %v457 = vmul.f32 %v430, %v449
        %v458 = vadd.f32 %v400, %v450
        %v459 = vadd.f32 %v401, %v451
        %v460 = vadd.f32 %v402, %v452
        %v461 = vadd.f32 %v403, %v453
        %v462 = vadd.f32 %v404, %v454
        %v463 = vadd.f32 %v405, %v455
        %v464 = vadd.f32 %v406, %v456
        %v465 = vadd.f32 %v407, %v457
        %v466 = vld [vmem:[%s280 + $0x2] sm:$0xff]
        %v467 = vld [vmem:[%s280 + $0xa] sm:$0xff]
        %v468 = vld [vmem:[%s280 + $0x1a] sm:$0xff]
        %v469 = vld [vmem:[%s280 + $0x22] sm:$0xff]
        %471 = vset.pattern.permute.xlu0 0
        %472 = vperm.xlu0 %471, %v466
        %v473 = vpop.permute.xlu0 %472
        %476 = vset.pattern.permute.xlu0 0
        %477 = vperm.xlu0 %476, %v467
        %v478 = vpop.permute.xlu0 %477
        %481 = vset.pattern.permute.xlu0 0
        %482 = vperm.xlu0 %481, %v468
        %v483 = vpop.permute.xlu0 %482
        %486 = vset.pattern.permute.xlu0 0
        %487 = vperm.xlu0 %486, %v469
        %v488 = vpop.permute.xlu0 %487
        %v490 = vlaneseq
        %v491 = vshrl.u32 %v490, 7
        %v492 = vsub.s32 2, %v491
        %v493 = vrot.slane %v336, %v492
        %v494 = vlaneseq
        %v495 = vshrl.u32 %v494, 7
        %v496 = vsub.s32 6, %v495
        %v497 = vrot.slane %v336, %v496
        %v500 = vlaneseq
        %v501 = vshrl.u32 %v500, 7
        %v502 = vsub.s32 2, %v501
        %v503 = vrot.slane %v493, %v502
        %v504 = vlaneseq
        %v505 = vshrl.u32 %v504, 7
        %v506 = vsub.s32 2, %v505
        %v507 = vrot.slane %v497, %v506
        %v508 = vmul.f32 %v473, %v503
        %v509 = vmul.f32 %v473, %v507
        %v510 = vmul.f32 %v478, %v503
        %v511 = vmul.f32 %v478, %v507
        %v512 = vmul.f32 %v483, %v503
        %v513 = vmul.f32 %v483, %v507
        %v514 = vmul.f32 %v488, %v503
        %v515 = vmul.f32 %v488, %v507
        %v516 = vadd.f32 %v458, %v508
        %v517 = vadd.f32 %v459, %v509
        %v518 = vadd.f32 %v460, %v510
        %v519 = vadd.f32 %v461, %v511
        %v520 = vadd.f32 %v462, %v512
        %v521 = vadd.f32 %v463, %v513
        %v522 = vadd.f32 %v464, %v514
        %v523 = vadd.f32 %v465, %v515
        %v524 = vmax.f32 %v516, 0.0
        %v525 = vmax.f32 %v517, 0.0
        %v526 = vmax.f32 %v518, 0.0
        %v527 = vmax.f32 %v519, 0.0
        %v528 = vmax.f32 %v520, 0.0
        %v529 = vmax.f32 %v521, 0.0
        %v530 = vmax.f32 %v522, 0.0
        %v531 = vmax.f32 %v523, 0.0
        %v532 = vpack.c.bf16 %v526, %v524
        %v533 = vpack.c.bf16 %v527, %v525
        %v534 = vpack.c.bf16 %v530, %v528
        %v535 = vpack.c.bf16 %v531, %v529
        %v540 = vunpack.c.l.b16 %v532
        %v541 = vunpack.c.l.b16 %v533
        %v542 = vunpack.c.h.b16 %v532
        %v543 = vunpack.c.h.b16 %v533
        %v544 = vunpack.c.l.b16 %v534
        %v545 = vunpack.c.l.b16 %v535
        %v546 = vunpack.c.h.b16 %v534
        %v547 = vunpack.c.h.b16 %v535
        %v548 = vpack.c.b16 %v541, %v540
        %v549 = vpack.c.b16 %v543, %v542
        %v550 = vpack.c.b16 %v545, %v544
        %v551 = vpack.c.b16 %v547, %v546
        %vm552 = vsmask.f32 256
        %vm553 = vsmask.f32 4368
        %vm554 = vmor %vm552, %vm553
        %v556 = vshrl.u32 %v548, 16
        %v558 = vrot.slane %v556, 7
        %v559 = vshll.u32 %v548, 16
        %v561 = vor.u32 %v558, %v559
        %v562 = vrot.slane %v558, 4
        %v564 = vshrl.u32 %v549, 16
        %v566 = vrot.slane %v564, 7
        %v567 = vshll.u32 %v549, 16
        %v569 = vor.u32 %v566, %v567
        %v570 = vsel %vm554, %v562, %v569
        %v571 = vrot.slane %v566, 4
        %v573 = vshrl.u32 %v550, 16
        %v575 = vrot.slane %v573, 7
        %v576 = vshll.u32 %v550, 16
        %v578 = vor.u32 %v575, %v576
        %v579 = vrot.slane %v575, 4
        %v581 = vshrl.u32 %v551, 16
        %v583 = vrot.slane %v581, 7
        %v584 = vshll.u32 %v551, 16
        %v586 = vor.u32 %v583, %v584
        %v587 = vsel %vm554, %v579, %v586
        %v588 = vrot.slane %v583, 4
        %vm595 = vcmask 1043456
        %vm596 = vsmask.f32 7938
        %vm597 = vmand %vm595, %vm596
        %vm598 = vcmask 1047556
        %vm599 = vsmask.f32 7954
        %vm600 = vmand %vm598, %vm599
        %vm601 = vmor %vm600, %vm597
        %v602 = vld [vmem:[#allocation2] sm:$0xff]
        %v603 = vsel %vm601, %v561, %v602
        %604 = vst [vmem:[#allocation2] sm:$0xff] %v603
        %605 = vst [vmem:[#allocation2 + $0x8] sm:$0xff] %v570
        %vm606 = vcmask 1040384
        %vm607 = vmand %vm606, %vm552
        %vm608 = vcmask 1044484
        %vm609 = vsmask.f32 4352
        %vm610 = vmand %vm608, %vm609
        %vm611 = vmor %vm610, %vm607
        %v612 = vld [vmem:[#allocation2 + $0x10] sm:$0x11]
        %v613 = vsel %vm611, %v571, %v612
        %614 = vst [vmem:[#allocation2 + $0x10] sm:$0x11] %v613
        %v615 = vld [vmem:[#allocation2 + $0x18] sm:$0xff]
        %v616 = vsel %vm601, %v578, %v615
        %617 = vst [vmem:[#allocation2 + $0x18] sm:$0xff] %v616
        %618 = vst [vmem:[#allocation2 + $0x20] sm:$0xff] %v587
        %v619 = vld [vmem:[#allocation2 + $0x28] sm:$0x11]
        %v620 = vsel %vm611, %v588, %v619
        %621 = vst [vmem:[#allocation2 + $0x28] sm:$0x11] %v620
        %v622 = vld [vmem:[%s280] sm:$0xff]
        %v623 = vld [vmem:[%s280 + $0x8] sm:$0xff]
        %v624 = vld [vmem:[%s280 + $0x18] sm:$0xff]
        %v625 = vld [vmem:[%s280 + $0x20] sm:$0xff]
        %627 = vset.pattern.permute.xlu0 1
        %628 = vperm.xlu0 %627, %v622
        %v629 = vpop.permute.xlu0 %628
        %632 = vset.pattern.permute.xlu0 1
        %633 = vperm.xlu0 %632, %v623
        %v634 = vpop.permute.xlu0 %633
        %637 = vset.pattern.permute.xlu0 1
        %638 = vperm.xlu0 %637, %v624
        %v639 = vpop.permute.xlu0 %638
        %642 = vset.pattern.permute.xlu0 1
        %643 = vperm.xlu0 %642, %v625
        %v644 = vpop.permute.xlu0 %643
        %v646 = vmul.f32 %v629, %v376
        %v647 = vmul.f32 %v629, %v380
        %v648 = vmul.f32 %v634, %v376
        %v649 = vmul.f32 %v634, %v380
        %v650 = vmul.f32 %v639, %v376
        %v651 = vmul.f32 %v639, %v380
        %v652 = vmul.f32 %v644, %v376
        %v653 = vmul.f32 %v644, %v380
        %v654 = vadd.f32 %v393, %v646
        %v655 = vadd.f32 %v397, %v647
        %v656 = vadd.f32 %v393, %v648
        %v657 = vadd.f32 %v397, %v649
        %v658 = vadd.f32 %v393, %v650
        %v659 = vadd.f32 %v397, %v651
        %v660 = vadd.f32 %v393, %v652
        %v661 = vadd.f32 %v397, %v653
        %v662 = vld [vmem:[%s280 + $0x1] sm:$0xff]
        %v663 = vld [vmem:[%s280 + $0x9] sm:$0xff]
        %v664 = vld [vmem:[%s280 + $0x19] sm:$0xff]
        %v665 = vld [vmem:[%s280 + $0x21] sm:$0xff]
        %667 = vset.pattern.permute.xlu0 1
        %668 = vperm.xlu0 %667, %v662
        %v669 = vpop.permute.xlu0 %668
        %672 = vset.pattern.permute.xlu0 1
        %673 = vperm.xlu0 %672, %v663
        %v674 = vpop.permute.xlu0 %673
        %677 = vset.pattern.permute.xlu0 1
        %678 = vperm.xlu0 %677, %v664
        %v679 = vpop.permute.xlu0 %678
        %682 = vset.pattern.permute.xlu0 1
        %683 = vperm.xlu0 %682, %v665
        %v684 = vpop.permute.xlu0 %683
        %v686 = vmul.f32 %v669, %v445
        %v687 = vmul.f32 %v669, %v449
        %v688 = vmul.f32 %v674, %v445
        %v689 = vmul.f32 %v674, %v449
        %v690 = vmul.f32 %v679, %v445
        %v691 = vmul.f32 %v679, %v449
        %v692 = vmul.f32 %v684, %v445
        %v693 = vmul.f32 %v684, %v449
        %v694 = vadd.f32 %v654, %v686
        %v695 = vadd.f32 %v655, %v687
        %v696 = vadd.f32 %v656, %v688
        %v697 = vadd.f32 %v657, %v689
        %v698 = vadd.f32 %v658, %v690
        %v699 = vadd.f32 %v659, %v691
        %v700 = vadd.f32 %v660, %v692
        %v701 = vadd.f32 %v661, %v693
        %v702 = vld [vmem:[%s280 + $0x2] sm:$0xff]
        %v703 = vld [vmem:[%s280 + $0xa] sm:$0xff]
        %v704 = vld [vmem:[%s280 + $0x1a] sm:$0xff]
        %v705 = vld [vmem:[%s280 + $0x22] sm:$0xff]
        %707 = vset.pattern.permute.xlu0 1
        %708 = vperm.xlu0 %707, %v702
        %v709 = vpop.permute.xlu0 %708
        %712 = vset.pattern.permute.xlu0 1
        %713 = vperm.xlu0 %712, %v703
        %v714 = vpop.permute.xlu0 %713
        %717 = vset.pattern.permute.xlu0 1
        %718 = vperm.xlu0 %717, %v704
        %v719 = vpop.permute.xlu0 %718
        %722 = vset.pattern.permute.xlu0 1
        %723 = vperm.xlu0 %722, %v705
        %v724 = vpop.permute.xlu0 %723
        %v726 = vmul.f32 %v709, %v503
        %v727 = vmul.f32 %v709, %v507
        %v728 = vmul.f32 %v714, %v503
        %v729 = vmul.f32 %v714, %v507
        %v730 = vmul.f32 %v719, %v503
        %v731 = vmul.f32 %v719, %v507
        %v732 = vmul.f32 %v724, %v503
        %v733 = vmul.f32 %v724, %v507
        %v734 = vadd.f32 %v694, %v726
        %v735 = vadd.f32 %v695, %v727
        %v736 = vadd.f32 %v696, %v728
        %v737 = vadd.f32 %v697, %v729
        %v738 = vadd.f32 %v698, %v730
        %v739 = vadd.f32 %v699, %v731
        %v740 = vadd.f32 %v700, %v732
        %v741 = vadd.f32 %v701, %v733
        %v742 = vmax.f32 %v734, 0.0
        %v743 = vmax.f32 %v735, 0.0
        %v744 = vmax.f32 %v736, 0.0
        %v745 = vmax.f32 %v737, 0.0
        %v746 = vmax.f32 %v738, 0.0
        %v747 = vmax.f32 %v739, 0.0
        %v748 = vmax.f32 %v740, 0.0
        %v749 = vmax.f32 %v741, 0.0
        %v750 = vpack.c.bf16 %v744, %v742
        %v751 = vpack.c.bf16 %v745, %v743
        %v752 = vpack.c.bf16 %v748, %v746
        %v753 = vpack.c.bf16 %v749, %v747
        %v758 = vunpack.c.l.b16 %v750
        %v759 = vunpack.c.l.b16 %v751
        %v760 = vunpack.c.h.b16 %v750
        %v761 = vunpack.c.h.b16 %v751
        %v762 = vunpack.c.l.b16 %v752
        %v763 = vunpack.c.l.b16 %v753
        %v764 = vunpack.c.h.b16 %v752
        %v765 = vunpack.c.h.b16 %v753
        %v766 = vpack.c.b16 %v759, %v758
        %v767 = vpack.c.b16 %v761, %v760
        %v768 = vpack.c.b16 %v763, %v762
        %v769 = vpack.c.b16 %v765, %v764
        %v771 = vshrl.u32 %v766, 16
        %v773 = vrot.slane %v771, 7
        %v774 = vshll.u32 %v766, 16
        %v776 = vor.u32 %v773, %v774
        %v777 = vrot.slane %v773, 4
        %v779 = vshrl.u32 %v767, 16
        %v781 = vrot.slane %v779, 7
        %v782 = vshll.u32 %v767, 16
        %v784 = vor.u32 %v781, %v782
        %v785 = vsel %vm554, %v777, %v784
        %v786 = vrot.slane %v781, 4
        %v788 = vshrl.u32 %v768, 16
        %v790 = vrot.slane %v788, 7
        %v791 = vshll.u32 %v768, 16
        %v793 = vor.u32 %v790, %v791
        %v794 = vrot.slane %v790, 4
        %v796 = vshrl.u32 %v769, 16
        %v798 = vrot.slane %v796, 7
        %v799 = vshll.u32 %v769, 16
        %v801 = vor.u32 %v798, %v799
        %v802 = vsel %vm554, %v794, %v801
        %v803 = vrot.slane %v798, 4
        %s810 = scalar_lea.vmem [#allocation2], 48
        %v811 = vld [vmem:[%s810] sm:$0xff]
        %v812 = vsel %vm601, %v776, %v811
        %813 = vst [vmem:[%s810] sm:$0xff] %v812
        %814 = vst [vmem:[%s810 + $0x8] sm:$0xff] %v785
        %v815 = vld [vmem:[%s810 + $0x10] sm:$0x11]
        %v816 = vsel %vm611, %v786, %v815
        %817 = vst [vmem:[%s810 + $0x10] sm:$0x11] %v816
        %v818 = vld [vmem:[%s810 + $0x18] sm:$0xff]
        %v819 = vsel %vm601, %v793, %v818
        %820 = vst [vmem:[%s810 + $0x18] sm:$0xff] %v819
        %821 = vst [vmem:[%s810 + $0x20] sm:$0xff] %v802
        %v822 = vld [vmem:[%s810 + $0x28] sm:$0x11]
        %v823 = vsel %vm611, %v803, %v822
        %824 = vst [vmem:[%s810 + $0x28] sm:$0x11] %v823
        %v825 = vld [vmem:[#allocation2] sm:$0xff]
        %v826 = vld [vmem:[#allocation2 + $0x8] sm:$0xff]
        %v827 = vld [vmem:[#allocation2 + $0x18] sm:$0xff]
        %v828 = vld [vmem:[#allocation2 + $0x20] sm:$0xff]
        %v829 = vld [vmem:[%s3] sm:$0xff]
        %v830 = vld [vmem:[%s3 + $0x8] sm:$0xff]
        %v831 = vld [vmem:[%s3 + $0x10] sm:$0xff]
        %v832 = vld [vmem:[%s3 + $0x18] sm:$0xff]
        %v833 = vld [vmem:[%s3 + $0x20] sm:$0xff]
        %v834 = vld [vmem:[%s3 + $0x28] sm:$0xff]
        %v835 = vld [vmem:[%s3 + $0x30] sm:$0xff]
        %v836 = vld [vmem:[%s3 + $0x38] sm:$0xff]
        %v837 = vld [vmem:[%s3 + $0x40] sm:$0xff]
        %v838 = vld [vmem:[%s3 + $0x48] sm:$0xff]
        %v839 = vld [vmem:[%s3 + $0x50] sm:$0xff]
        %v840 = vld [vmem:[%s3 + $0x58] sm:$0xff]
        %v841 = vld [vmem:[%s3 + $0x60] sm:$0xff]
        %v842 = vld [vmem:[%s3 + $0x68] sm:$0xff]
        %v843 = vld [vmem:[%s3 + $0x70] sm:$0xff]
        %v844 = vld [vmem:[%s3 + $0x78] sm:$0xff]
        %v845 = vld [vmem:[%s3 + $0x80] sm:$0xff]
        %v846 = vld [vmem:[%s3 + $0x88] sm:$0xff]
        %v847 = vld [vmem:[%s3 + $0x90] sm:$0xff]
        %v848 = vld [vmem:[%s3 + $0x98] sm:$0xff]
        %v849 = vld [vmem:[%s3 + $0xa0] sm:$0xff]
        %v850 = vld [vmem:[%s3 + $0xa8] sm:$0xff]
        %v851 = vld [vmem:[%s3 + $0xb0] sm:$0xff]
        %v852 = vld [vmem:[%s3 + $0xb8] sm:$0xff]
        %v853 = vld [vmem:[%s3 + $0xc0] sm:$0xff]
        %v854 = vld [vmem:[%s3 + $0xc8] sm:$0xff]
        %v855 = vld [vmem:[%s3 + $0xd0] sm:$0xff]
        %v856 = vld [vmem:[%s3 + $0xd8] sm:$0xff]
        %v857 = vld [vmem:[%s3 + $0xe0] sm:$0xff]
        %v858 = vld [vmem:[%s3 + $0xe8] sm:$0xff]
        %v859 = vld [vmem:[%s3 + $0xf0] sm:$0xff]
        %v860 = vld [vmem:[%s3 + $0xf8] sm:$0xff]
        %v865 = vunpack.c.l.b16 %v825
        %v866 = vunpack.c.h.b16 %v825
        %v867 = vunpack.c.l.b16 %v826
        %v868 = vunpack.c.h.b16 %v826
        %v869 = vunpack.c.l.b16 %v827
        %v870 = vunpack.c.h.b16 %v827
        %v871 = vunpack.c.l.b16 %v828
        %v872 = vunpack.c.h.b16 %v828
        %v873 = vpack.c.b16 %v867, %v865
        %v874 = vpack.c.b16 %v868, %v866
        %v875 = vpack.c.b16 %v871, %v869
        %v876 = vpack.c.b16 %v872, %v870
        %v913 = vunpack.c.l.b16 %v829
        %v914 = vunpack.c.h.b16 %v829
        %v915 = vunpack.c.l.b16 %v830
        %v916 = vunpack.c.h.b16 %v830
        %v917 = vunpack.c.l.b16 %v831
        %v918 = vunpack.c.h.b16 %v831
        %v919 = vunpack.c.l.b16 %v832
        %v920 = vunpack.c.h.b16 %v832
        %v921 = vunpack.c.l.b16 %v833
        %v922 = vunpack.c.h.b16 %v833
        %v923 = vunpack.c.l.b16 %v834
        %v924 = vunpack.c.h.b16 %v834
        %v925 = vunpack.c.l.b16 %v835
        %v926 = vunpack.c.h.b16 %v835
        %v927 = vunpack.c.l.b16 %v836
        %v928 = vunpack.c.h.b16 %v836
        %v929 = vunpack.c.l.b16 %v837
        %v930 = vunpack.c.h.b16 %v837
        %v931 = vunpack.c.l.b16 %v838
        %v932 = vunpack.c.h.b16 %v838
        %v933 = vunpack.c.l.b16 %v839
        %v934 = vunpack.c.h.b16 %v839
        %v935 = vunpack.c.l.b16 %v840
        %v936 = vunpack.c.h.b16 %v840
        %v937 = vunpack.c.l.b16 %v841
        %v938 = vunpack.c.h.b16 %v841
        %v939 = vunpack.c.l.b16 %v842
        %v940 = vunpack.c.h.b16 %v842
        %v941 = vunpack.c.l.b16 %v843
        %v942 = vunpack.c.h.b16 %v843
        %v943 = vunpack.c.l.b16 %v844
        %v944 = vunpack.c.h.b16 %v844
        %v945 = vunpack.c.l.b16 %v845
        %v946 = vunpack.c.h.b16 %v845
        %v947 = vunpack.c.l.b16 %v846
        %v948 = vunpack.c.h.b16 %v846
        %v949 = vunpack.c.l.b16 %v847
        %v950 = vunpack.c.h.b16 %v847
        %v951 = vunpack.c.l.b16 %v848
        %v952 = vunpack.c.h.b16 %v848
        %v953 = vunpack.c.l.b16 %v849
        %v954 = vunpack.c.h.b16 %v849
        %v955 = vunpack.c.l.b16 %v850
        %v956 = vunpack.c.h.b16 %v850
        %v957 = vunpack.c.l.b16 %v851
        %v958 = vunpack.c.h.b16 %v851
        %v959 = vunpack.c.l.b16 %v852
        %v960 = vunpack.c.h.b16 %v852
        %v961 = vunpack.c.l.b16 %v853
        %v962 = vunpack.c.h.b16 %v853
        %v963 = vunpack.c.l.b16 %v854
        %v964 = vunpack.c.h.b16 %v854
        %v965 = vunpack.c.l.b16 %v855
        %v966 = vunpack.c.h.b16 %v855
        %v967 = vunpack.c.l.b16 %v856
        %v968 = vunpack.c.h.b16 %v856
        %v969 = vunpack.c.l.b16 %v857
        %v970 = vunpack.c.h.b16 %v857
        %v971 = vunpack.c.l.b16 %v858
        %v972 = vunpack.c.h.b16 %v858
        %v973 = vunpack.c.l.b16 %v859
        %v974 = vunpack.c.h.b16 %v859
        %v975 = vunpack.c.l.b16 %v860
        %v976 = vunpack.c.h.b16 %v860
        %v977 = vpack.c.b16 %v915, %v913
        %v978 = vpack.c.b16 %v916, %v914
        %v979 = vpack.c.b16 %v919, %v917
        %v980 = vpack.c.b16 %v920, %v918
        %v981 = vpack.c.b16 %v923, %v921
        %v982 = vpack.c.b16 %v924, %v922
        %v983 = vpack.c.b16 %v927, %v925
        %v984 = vpack.c.b16 %v928, %v926
        %v985 = vpack.c.b16 %v931, %v929
        %v986 = vpack.c.b16 %v932, %v930
        %v987 = vpack.c.b16 %v935, %v933
        %v988 = vpack.c.b16 %v936, %v934
        %v989 = vpack.c.b16 %v939, %v937
        %v990 = vpack.c.b16 %v940, %v938
        %v991 = vpack.c.b16 %v943, %v941
        %v992 = vpack.c.b16 %v944, %v942
        %v993 = vpack.c.b16 %v947, %v945
        %v994 = vpack.c.b16 %v948, %v946
        %v995 = vpack.c.b16 %v951, %v949
        %v996 = vpack.c.b16 %v952, %v950
        %v997 = vpack.c.b16 %v955, %v953
        %v998 = vpack.c.b16 %v956, %v954
        %v999 = vpack.c.b16 %v959, %v957
        %v1000 = vpack.c.b16 %v960, %v958
        %v1001 = vpack.c.b16 %v963, %v961
        %v1002 = vpack.c.b16 %v964, %v962
        %v1003 = vpack.c.b16 %v967, %v965
        %v1004 = vpack.c.b16 %v968, %v966
        %v1005 = vpack.c.b16 %v971, %v969
        %v1006 = vpack.c.b16 %v972, %v970
        %v1007 = vpack.c.b16 %v975, %v973
        %v1008 = vpack.c.b16 %v976, %v974
        %1041 = vmatprep.subr.bf16.mxu0 %v992
        %1042 = vmatpush1.bf16.msra.mxu0 %v991
        %1043 = vmatprep.subr.bf16.mxu0 %v990
        %1044 = vmatpush1.bf16.msra.mxu0 %v989
        %1045 = vmatprep.subr.bf16.mxu0 %v988
        %1046 = vmatpush1.bf16.msra.mxu0 %v987
        %1047 = vmatprep.subr.bf16.mxu0 %v986
        %1048 = vmatpush1.bf16.msra.mxu0 %v985
        %1049 = vmatprep.subr.bf16.mxu0 %v984
        %1050 = vmatpush1.bf16.msra.mxu0 %v983
        %1051 = vmatprep.subr.bf16.mxu0 %v982
        %1052 = vmatpush1.bf16.msra.mxu0 %v981
        %1053 = vmatprep.subr.bf16.mxu0 %v980
        %1054 = vmatpush1.bf16.msra.mxu0 %v979
        %1055 = vmatprep.subr.bf16.mxu0 %v978
        %1056 = vmatpush1.bf16.msra.mxu0 %v977
        %1057 = vmatprep.subr.bf16.mxu0 %v1008
        %1058 = vmatpush2.bf16.msra.mxu0 %v1007
        %1059 = vmatprep.subr.bf16.mxu0 %v1006
        %1060 = vmatpush2.bf16.msra.mxu0 %v1005
        %1061 = vmatprep.subr.bf16.mxu0 %v1004
        %1062 = vmatpush2.bf16.msra.mxu0 %v1003
        %1063 = vmatprep.subr.bf16.mxu0 %v1002
        %1064 = vmatpush2.bf16.msra.mxu0 %v1001
        %1065 = vmatprep.subr.bf16.mxu0 %v1000
        %1066 = vmatpush2.bf16.msra.mxu0 %v999
        %1067 = vmatprep.subr.bf16.mxu0 %v998
        %1068 = vmatpush2.bf16.msra.mxu0 %v997
        %1069 = vmatprep.subr.bf16.mxu0 %v996
        %1070 = vmatpush2.bf16.msra.mxu0 %v995
        %1071 = vmatprep.subr.bf16.mxu0 %v994
        %1072 = vmatpush2.bf16.msra.mxu0 %v993
        %1073 = vmatprep.mubr.bf16.mxu0 %v874
        %1074 = vmatmul.mubr.bf16.gmra.mxu0 %v873
        %v1075 = vpop.f32.mrf.mxu0
        %v1076 = vadd.f32 0.0, %v1075
        %v1077 = vpop.f32.mrf.mxu0
        %v1078 = vadd.f32 0.0, %v1077
        %v1079 = vpop.f32.mrf.mxu0
        %v1080 = vadd.f32 0.0, %v1079
        %v1081 = vpop.f32.mrf.mxu0
        %v1082 = vadd.f32 0.0, %v1081
        %1083 = vmatprep.mubr.bf16.mxu0 %v876
        %1084 = vmatmul.mubr.bf16.gmra.mxu0 %v875
        %v1085 = vpop.f32.mrf.mxu0
        %v1086 = vadd.f32 0.0, %v1085
        %v1087 = vpop.f32.mrf.mxu0
        %v1088 = vadd.f32 0.0, %v1087
        %v1089 = vpop.f32.mrf.mxu0
        %v1090 = vadd.f32 0.0, %v1089
        %v1091 = vpop.f32.mrf.mxu0
        %v1092 = vadd.f32 0.0, %v1091
        %1093 = vdwg.mxu0
        %1094 = vst [vmem:[#allocation4] sm:$0xff] %v1076
        %1095 = vst [vmem:[#allocation4 + $0x8] sm:$0xff] %v1078
        %1096 = vst [vmem:[#allocation4 + $0x10] sm:$0xff] %v1080
        %1097 = vst [vmem:[#allocation4 + $0x18] sm:$0xff] %v1082
        %1098 = vst [vmem:[#allocation4 + $0x20] sm:$0xff] %v1086
        %1099 = vst [vmem:[#allocation4 + $0x28] sm:$0xff] %v1088
        %1100 = vst [vmem:[#allocation4 + $0x30] sm:$0xff] %v1090
        %1101 = vst [vmem:[#allocation4 + $0x38] sm:$0xff] %v1092
        %v1102 = vld [vmem:[#allocation2] sm:$0xff]
        %v1103 = vld [vmem:[#allocation2 + $0x8] sm:$0xff]
        %v1104 = vld [vmem:[#allocation2 + $0x10] sm:$0x11]
        %v1105 = vld [vmem:[#allocation2 + $0x18] sm:$0xff]
        %v1106 = vld [vmem:[#allocation2 + $0x20] sm:$0xff]
        %v1107 = vld [vmem:[#allocation2 + $0x28] sm:$0x11]
        %vm1108 = vsmask.f32 3328
        %vm1109 = vsmask.f32 7440
        %vm1110 = vmor %vm1108, %vm1109
        %v1112 = vshrl.u32 %v1102, 16
        %v1114 = vrot.slane %v1112, 4
        %v1115 = vshll.u32 %v1102, 16
        %v1117 = vrot.slane %v1115, 5
        %v1118 = vor.u32 %v1114, %v1117
        %v1119 = vrot.slane %v1118, 4
        %v1121 = vshll.u32 %v1103, 16
        %v1123 = vrot.slane %v1121, 5
        %v1124 = vsel %vm1110, %v1119, %v1123
        %v1125 = vshrl.u32 %v1103, 16
        %v1127 = vrot.slane %v1125, 4
        %v1128 = vor.u32 %v1127, %v1123
        %v1129 = vrot.slane %v1128, 4
        %v1131 = vshll.u32 %v1104, 16
        %v1133 = vrot.slane %v1131, 5
        %v1134 = vsel %vm1110, %v1129, %v1133
        %v1136 = vshrl.u32 %v1105, 16
        %v1138 = vrot.slane %v1136, 4
        %v1139 = vshll.u32 %v1105, 16
        %v1141 = vrot.slane %v1139, 5
        %v1142 = vor.u32 %v1138, %v1141
        %v1143 = vrot.slane %v1142, 4
        %v1145 = vshll.u32 %v1106, 16
        %v1147 = vrot.slane %v1145, 5
        %v1148 = vsel %vm1110, %v1143, %v1147
        %v1149 = vshrl.u32 %v1106, 16
        %v1151 = vrot.slane %v1149, 4
        %v1152 = vor.u32 %v1151, %v1147
        %v1153 = vrot.slane %v1152, 4
        %v1155 = vshll.u32 %v1107, 16
        %v1157 = vrot.slane %v1155, 5
        %v1158 = vsel %vm1110, %v1153, %v1157
        %s1159 = scalar_lea.vmem %s3, 256
        %v1160 = vld [vmem:[%s1159] sm:$0xff]
        %v1161 = vld [vmem:[%s1159 + $0x8] sm:$0xff]
        %v1162 = vld [vmem:[%s1159 + $0x10] sm:$0xff]
        %v1163 = vld [vmem:[%s1159 + $0x18] sm:$0xff]
        %v1164 = vld [vmem:[%s1159 + $0x20] sm:$0xff]
        %v1165 = vld [vmem:[%s1159 + $0x28] sm:$0xff]
        %v1166 = vld [vmem:[%s1159 + $0x30] sm:$0xff]
        %v1167 = vld [vmem:[%s1159 + $0x38] sm:$0xff]
        %v1168 = vld [vmem:[%s1159 + $0x40] sm:$0xff]
        %v1169 = vld [vmem:[%s1159 + $0x48] sm:$0xff]
        %v1170 = vld [vmem:[%s1159 + $0x50] sm:$0xff]
        %v1171 = vld [vmem:[%s1159 + $0x58] sm:$0xff]
        %v1172 = vld [vmem:[%s1159 + $0x60] sm:$0xff]
        %v1173 = vld [vmem:[%s1159 + $0x68] sm:$0xff]
        %v1174 = vld [vmem:[%s1159 + $0x70] sm:$0xff]
        %v1175 = vld [vmem:[%s1159 + $0x78] sm:$0xff]
        %v1176 = vld [vmem:[%s1159 + $0x80] sm:$0xff]
        %v1177 = vld [vmem:[%s1159 + $0x88] sm:$0xff]
        %v1178 = vld [vmem:[%s1159 + $0x90] sm:$0xff]
        %v1179 = vld [vmem:[%s1159 + $0x98] sm:$0xff]
        %v1180 = vld [vmem:[%s1159 + $0xa0] sm:$0xff]
        %v1181 = vld [vmem:[%s1159 + $0xa8] sm:$0xff]
        %v1182 = vld [vmem:[%s1159 + $0xb0] sm:$0xff]
        %v1183 = vld [vmem:[%s1159 + $0xb8] sm:$0xff]
        %v1184 = vld [vmem:[%s1159 + $0xc0] sm:$0xff]
        %v1185 = vld [vmem:[%s1159 + $0xc8] sm:$0xff]
        %v1186 = vld [vmem:[%s1159 + $0xd0] sm:$0xff]
        %v1187 = vld [vmem:[%s1159 + $0xd8] sm:$0xff]
        %v1188 = vld [vmem:[%s1159 + $0xe0] sm:$0xff]
        %v1189 = vld [vmem:[%s1159 + $0xe8] sm:$0xff]
        %v1190 = vld [vmem:[%s1159 + $0xf0] sm:$0xff]
        %v1191 = vld [vmem:[%s1159 + $0xf8] sm:$0xff]
        %v1192 = vunpack.c.l.b16 %v1124
        %v1193 = vunpack.c.h.b16 %v1124
        %v1194 = vunpack.c.l.b16 %v1134
        %v1195 = vunpack.c.h.b16 %v1134
        %v1196 = vunpack.c.l.b16 %v1148
        %v1197 = vunpack.c.h.b16 %v1148
        %v1198 = vunpack.c.l.b16 %v1158
        %v1199 = vunpack.c.h.b16 %v1158
        %v1200 = vpack.c.b16 %v1194, %v1192
        %v1201 = vpack.c.b16 %v1195, %v1193
        %v1202 = vpack.c.b16 %v1198, %v1196
        %v1203 = vpack.c.b16 %v1199, %v1197
        %v1240 = vunpack.c.l.b16 %v1160
        %v1241 = vunpack.c.h.b16 %v1160
        %v1242 = vunpack.c.l.b16 %v1161
        %v1243 = vunpack.c.h.b16 %v1161
        %v1244 = vunpack.c.l.b16 %v1162
        %v1245 = vunpack.c.h.b16 %v1162
        %v1246 = vunpack.c.l.b16 %v1163
        %v1247 = vunpack.c.h.b16 %v1163
        %v1248 = vunpack.c.l.b16 %v1164
        %v1249 = vunpack.c.h.b16 %v1164
        %v1250 = vunpack.c.l.b16 %v1165
        %v1251 = vunpack.c.h.b16 %v1165
        %v1252 = vunpack.c.l.b16 %v1166
        %v1253 = vunpack.c.h.b16 %v1166
        %v1254 = vunpack.c.l.b16 %v1167
        %v1255 = vunpack.c.h.b16 %v1167
        %v1256 = vunpack.c.l.b16 %v1168
        %v1257 = vunpack.c.h.b16 %v1168
        %v1258 = vunpack.c.l.b16 %v1169
        %v1259 = vunpack.c.h.b16 %v1169
        %v1260 = vunpack.c.l.b16 %v1170
        %v1261 = vunpack.c.h.b16 %v1170
        %v1262 = vunpack.c.l.b16 %v1171
        %v1263 = vunpack.c.h.b16 %v1171
        %v1264 = vunpack.c.l.b16 %v1172
        %v1265 = vunpack.c.h.b16 %v1172
        %v1266 = vunpack.c.l.b16 %v1173
        %v1267 = vunpack.c.h.b16 %v1173
        %v1268 = vunpack.c.l.b16 %v1174
        %v1269 = vunpack.c.h.b16 %v1174
        %v1270 = vunpack.c.l.b16 %v1175
        %v1271 = vunpack.c.h.b16 %v1175
        %v1272 = vunpack.c.l.b16 %v1176
        %v1273 = vunpack.c.h.b16 %v1176
        %v1274 = vunpack.c.l.b16 %v1177
        %v1275 = vunpack.c.h.b16 %v1177
        %v1276 = vunpack.c.l.b16 %v1178
        %v1277 = vunpack.c.h.b16 %v1178
        %v1278 = vunpack.c.l.b16 %v1179
        %v1279 = vunpack.c.h.b16 %v1179
        %v1280 = vunpack.c.l.b16 %v1180
        %v1281 = vunpack.c.h.b16 %v1180
        %v1282 = vunpack.c.l.b16 %v1181
        %v1283 = vunpack.c.h.b16 %v1181
        %v1284 = vunpack.c.l.b16 %v1182
        %v1285 = vunpack.c.h.b16 %v1182
        %v1286 = vunpack.c.l.b16 %v1183
        %v1287 = vunpack.c.h.b16 %v1183
        %v1288 = vunpack.c.l.b16 %v1184
        %v1289 = vunpack.c.h.b16 %v1184
        %v1290 = vunpack.c.l.b16 %v1185
        %v1291 = vunpack.c.h.b16 %v1185
        %v1292 = vunpack.c.l.b16 %v1186
        %v1293 = vunpack.c.h.b16 %v1186
        %v1294 = vunpack.c.l.b16 %v1187
        %v1295 = vunpack.c.h.b16 %v1187
        %v1296 = vunpack.c.l.b16 %v1188
        %v1297 = vunpack.c.h.b16 %v1188
        %v1298 = vunpack.c.l.b16 %v1189
        %v1299 = vunpack.c.h.b16 %v1189
        %v1300 = vunpack.c.l.b16 %v1190
        %v1301 = vunpack.c.h.b16 %v1190
        %v1302 = vunpack.c.l.b16 %v1191
        %v1303 = vunpack.c.h.b16 %v1191
        %v1304 = vpack.c.b16 %v1242, %v1240
        %v1305 = vpack.c.b16 %v1243, %v1241
        %v1306 = vpack.c.b16 %v1246, %v1244
        %v1307 = vpack.c.b16 %v1247, %v1245
        %v1308 = vpack.c.b16 %v1250, %v1248
        %v1309 = vpack.c.b16 %v1251, %v1249
        %v1310 = vpack.c.b16 %v1254, %v1252
        %v1311 = vpack.c.b16 %v1255, %v1253
        %v1312 = vpack.c.b16 %v1258, %v1256
        %v1313 = vpack.c.b16 %v1259, %v1257
        %v1314 = vpack.c.b16 %v1262, %v1260
        %v1315 = vpack.c.b16 %v1263, %v1261
        %v1316 = vpack.c.b16 %v1266, %v1264
        %v1317 = vpack.c.b16 %v1267, %v1265
        %v1318 = vpack.c.b16 %v1270, %v1268
        %v1319 = vpack.c.b16 %v1271, %v1269
        %v1320 = vpack.c.b16 %v1274, %v1272
        %v1321 = vpack.c.b16 %v1275, %v1273
        %v1322 = vpack.c.b16 %v1278, %v1276
        %v1323 = vpack.c.b16 %v1279, %v1277
        %v1324 = vpack.c.b16 %v1282, %v1280
        %v1325 = vpack.c.b16 %v1283, %v1281
        %v1326 = vpack.c.b16 %v1286, %v1284
        %v1327 = vpack.c.b16 %v1287, %v1285
        %v1328 = vpack.c.b16 %v1290, %v1288
        %v1329 = vpack.c.b16 %v1291, %v1289
        %v1330 = vpack.c.b16 %v1294, %v1292
        %v1331 = vpack.c.b16 %v1295, %v1293
        %v1332 = vpack.c.b16 %v1298, %v1296
        %v1333 = vpack.c.b16 %v1299, %v1297
        %v1334 = vpack.c.b16 %v1302, %v1300
        %v1335 = vpack.c.b16 %v1303, %v1301
        %1368 = vmatprep.subr.bf16.mxu0 %v1319
        %1369 = vmatpush1.bf16.msra.mxu0 %v1318
        %1370 = vmatprep.subr.bf16.mxu0 %v1317
        %1371 = vmatpush1.bf16.msra.mxu0 %v1316
        %1372 = vmatprep.subr.bf16.mxu0 %v1315
        %1373 = vmatpush1.bf16.msra.mxu0 %v1314
        %1374 = vmatprep.subr.bf16.mxu0 %v1313
        %1375 = vmatpush1.bf16.msra.mxu0 %v1312
        %1376 = vmatprep.subr.bf16.mxu0 %v1311
        %1377 = vmatpush1.bf16.msra.mxu0 %v1310
        %1378 = vmatprep.subr.bf16.mxu0 %v1309
        %1379 = vmatpush1.bf16.msra.mxu0 %v1308
        %1380 = vmatprep.subr.bf16.mxu0 %v1307
        %1381 = vmatpush1.bf16.msra.mxu0 %v1306
        %1382 = vmatprep.subr.bf16.mxu0 %v1305
        %1383 = vmatpush1.bf16.msra.mxu0 %v1304
        %1384 = vmatprep.subr.bf16.mxu0 %v1335
        %1385 = vmatpush2.bf16.msra.mxu0 %v1334
        %1386 = vmatprep.subr.bf16.mxu0 %v1333
        %1387 = vmatpush2.bf16.msra.mxu0 %v1332
        %1388 = vmatprep.subr.bf16.mxu0 %v1331
        %1389 = vmatpush2.bf16.msra.mxu0 %v1330
        %1390 = vmatprep.subr.bf16.mxu0 %v1329
        %1391 = vmatpush2.bf16.msra.mxu0 %v1328
        %1392 = vmatprep.subr.bf16.mxu0 %v1327
        %1393 = vmatpush2.bf16.msra.mxu0 %v1326
        %1394 = vmatprep.subr.bf16.mxu0 %v1325
        %1395 = vmatpush2.bf16.msra.mxu0 %v1324
        %1396 = vmatprep.subr.bf16.mxu0 %v1323
        %1397 = vmatpush2.bf16.msra.mxu0 %v1322
        %1398 = vmatprep.subr.bf16.mxu0 %v1321
        %1399 = vmatpush2.bf16.msra.mxu0 %v1320
        %1400 = vmatprep.mubr.bf16.mxu0 %v1201
        %1401 = vmatmul.mubr.bf16.gmra.mxu0 %v1200
        %v1402 = vpop.f32.mrf.mxu0
        %v1403 = vadd.f32 0.0, %v1402
        %v1404 = vpop.f32.mrf.mxu0
        %v1405 = vadd.f32 0.0, %v1404
        %v1406 = vpop.f32.mrf.mxu0
        %v1407 = vadd.f32 0.0, %v1406
        %v1408 = vpop.f32.mrf.mxu0
        %v1409 = vadd.f32 0.0, %v1408
        %1410 = vmatprep.mubr.bf16.mxu0 %v1203
        %1411 = vmatmul.mubr.bf16.gmra.mxu0 %v1202
        %v1412 = vpop.f32.mrf.mxu0
        %v1413 = vadd.f32 0.0, %v1412
        %v1414 = vpop.f32.mrf.mxu0
        %v1415 = vadd.f32 0.0, %v1414
        %v1416 = vpop.f32.mrf.mxu0
        %v1417 = vadd.f32 0.0, %v1416
        %v1418 = vpop.f32.mrf.mxu0
        %v1419 = vadd.f32 0.0, %v1418
        %1420 = vdwg.mxu0
        %v1421 = vld [vmem:[#allocation4] sm:$0xff]
        %v1422 = vld [vmem:[#allocation4 + $0x8] sm:$0xff]
        %v1423 = vld [vmem:[#allocation4 + $0x10] sm:$0xff]
        %v1424 = vld [vmem:[#allocation4 + $0x18] sm:$0xff]
        %v1425 = vld [vmem:[#allocation4 + $0x20] sm:$0xff]
        %v1426 = vld [vmem:[#allocation4 + $0x28] sm:$0xff]
        %v1427 = vld [vmem:[#allocation4 + $0x30] sm:$0xff]
        %v1428 = vld [vmem:[#allocation4 + $0x38] sm:$0xff]
        %v1429 = vadd.f32 %v1421, %v1403
        %v1430 = vadd.f32 %v1422, %v1405
        %v1431 = vadd.f32 %v1423, %v1407
        %v1432 = vadd.f32 %v1424, %v1409
        %v1433 = vadd.f32 %v1425, %v1413
        %v1434 = vadd.f32 %v1426, %v1415
        %v1435 = vadd.f32 %v1427, %v1417
        %v1436 = vadd.f32 %v1428, %v1419
        %1437 = vst [vmem:[#allocation4] sm:$0xff] %v1429
        %1438 = vst [vmem:[#allocation4 + $0x8] sm:$0xff] %v1430
        %1439 = vst [vmem:[#allocation4 + $0x10] sm:$0xff] %v1431
        %1440 = vst [vmem:[#allocation4 + $0x18] sm:$0xff] %v1432
        %1441 = vst [vmem:[#allocation4 + $0x20] sm:$0xff] %v1433
        %1442 = vst [vmem:[#allocation4 + $0x28] sm:$0xff] %v1434
        %1443 = vst [vmem:[#allocation4 + $0x30] sm:$0xff] %v1435
        %1444 = vst [vmem:[#allocation4 + $0x38] sm:$0xff] %v1436
        %v1445 = vld [vmem:[#allocation2] sm:$0xee]
        %v1446 = vld [vmem:[#allocation2 + $0x8] sm:$0xff]
        %v1447 = vld [vmem:[#allocation2 + $0x10] sm:$0x11]
        %v1448 = vld [vmem:[#allocation2 + $0x18] sm:$0xee]
        %v1449 = vld [vmem:[#allocation2 + $0x20] sm:$0xff]
        %v1450 = vld [vmem:[#allocation2 + $0x28] sm:$0x11]
        %vm1457 = vcmask 1042432
        %vm1458 = vcmask 1046532
        %vm1459 = vmor %vm1457, %vm1458
        %v1460 = vrot.slane %v1445, 5
        %v1461 = vrot.slane %v1460, 4
        %v1462 = vrot.slane %v1446, 5
        %v1463 = vsel %vm1459, %v1461, %v1462
        %v1464 = vrot.slane %v1462, 4
        %v1465 = vrot.slane %v1447, 5
        %v1466 = vsel %vm1459, %v1464, %v1465
        %v1467 = vrot.slane %v1448, 5
        %v1468 = vrot.slane %v1467, 4
        %v1469 = vrot.slane %v1449, 5
        %v1470 = vsel %vm1459, %v1468, %v1469
        %v1471 = vrot.slane %v1469, 4
        %v1472 = vrot.slane %v1450, 5
        %v1473 = vsel %vm1459, %v1471, %v1472
        %s1474 = scalar_lea.vmem %s3, 512
        %v1475 = vld [vmem:[%s1474] sm:$0xff]
        %v1476 = vld [vmem:[%s1474 + $0x8] sm:$0xff]
        %v1477 = vld [vmem:[%s1474 + $0x10] sm:$0xff]
        %v1478 = vld [vmem:[%s1474 + $0x18] sm:$0xff]
        %v1479 = vld [vmem:[%s1474 + $0x20] sm:$0xff]
        %v1480 = vld [vmem:[%s1474 + $0x28] sm:$0xff]
        %v1481 = vld [vmem:[%s1474 + $0x30] sm:$0xff]
        %v1482 = vld [vmem:[%s1474 + $0x38] sm:$0xff]
        %v1483 = vld [vmem:[%s1474 + $0x40] sm:$0xff]
        %v1484 = vld [vmem:[%s1474 + $0x48] sm:$0xff]
        %v1485 = vld [vmem:[%s1474 + $0x50] sm:$0xff]
        %v1486 = vld [vmem:[%s1474 + $0x58] sm:$0xff]
        %v1487 = vld [vmem:[%s1474 + $0x60] sm:$0xff]
        %v1488 = vld [vmem:[%s1474 + $0x68] sm:$0xff]
        %v1489 = vld [vmem:[%s1474 + $0x70] sm:$0xff]
        %v1490 = vld [vmem:[%s1474 + $0x78] sm:$0xff]
        %v1491 = vld [vmem:[%s1474 + $0x80] sm:$0xff]
        %v1492 = vld [vmem:[%s1474 + $0x88] sm:$0xff]
        %v1493 = vld [vmem:[%s1474 + $0x90] sm:$0xff]
        %v1494 = vld [vmem:[%s1474 + $0x98] sm:$0xff]
        %v1495 = vld [vmem:[%s1474 + $0xa0] sm:$0xff]
        %v1496 = vld [vmem:[%s1474 + $0xa8] sm:$0xff]
        %v1497 = vld [vmem:[%s1474 + $0xb0] sm:$0xff]
        %v1498 = vld [vmem:[%s1474 + $0xb8] sm:$0xff]
        %v1499 = vld [vmem:[%s1474 + $0xc0] sm:$0xff]
        %v1500 = vld [vmem:[%s1474 + $0xc8] sm:$0xff]
        %v1501 = vld [vmem:[%s1474 + $0xd0] sm:$0xff]
        %v1502 = vld [vmem:[%s1474 + $0xd8] sm:$0xff]
        %v1503 = vld [vmem:[%s1474 + $0xe0] sm:$0xff]
        %v1504 = vld [vmem:[%s1474 + $0xe8] sm:$0xff]
        %v1505 = vld [vmem:[%s1474 + $0xf0] sm:$0xff]
        %v1506 = vld [vmem:[%s1474 + $0xf8] sm:$0xff]
        %v1507 = vunpack.c.l.b16 %v1463
        %v1508 = vunpack.c.h.b16 %v1463
        %v1509 = vunpack.c.l.b16 %v1466
        %v1510 = vunpack.c.h.b16 %v1466
        %v1511 = vunpack.c.l.b16 %v1470
        %v1512 = vunpack.c.h.b16 %v1470
        %v1513 = vunpack.c.l.b16 %v1473
        %v1514 = vunpack.c.h.b16 %v1473
        %v1515 = vpack.c.b16 %v1509, %v1507
        %v1516 = vpack.c.b16 %v1510, %v1508
        %v1517 = vpack.c.b16 %v1513, %v1511
        %v1518 = vpack.c.b16 %v1514, %v1512
        %v1555 = vunpack.c.l.b16 %v1475
        %v1556 = vunpack.c.h.b16 %v1475
        %v1557 = vunpack.c.l.b16 %v1476
        %v1558 = vunpack.c.h.b16 %v1476
        %v1559 = vunpack.c.l.b16 %v1477
        %v1560 = vunpack.c.h.b16 %v1477
        %v1561 = vunpack.c.l.b16 %v1478
        %v1562 = vunpack.c.h.b16 %v1478
        %v1563 = vunpack.c.l.b16 %v1479
        %v1564 = vunpack.c.h.b16 %v1479
        %v1565 = vunpack.c.l.b16 %v1480
        %v1566 = vunpack.c.h.b16 %v1480
        %v1567 = vunpack.c.l.b16 %v1481
        %v1568 = vunpack.c.h.b16 %v1481
        %v1569 = vunpack.c.l.b16 %v1482
        %v1570 = vunpack.c.h.b16 %v1482
        %v1571 = vunpack.c.l.b16 %v1483
        %v1572 = vunpack.c.h.b16 %v1483
        %v1573 = vunpack.c.l.b16 %v1484
        %v1574 = vunpack.c.h.b16 %v1484
        %v1575 = vunpack.c.l.b16 %v1485
        %v1576 = vunpack.c.h.b16 %v1485
        %v1577 = vunpack.c.l.b16 %v1486
        %v1578 = vunpack.c.h.b16 %v1486
        %v1579 = vunpack.c.l.b16 %v1487
        %v1580 = vunpack.c.h.b16 %v1487
        %v1581 = vunpack.c.l.b16 %v1488
        %v1582 = vunpack.c.h.b16 %v1488
        %v1583 = vunpack.c.l.b16 %v1489
        %v1584 = vunpack.c.h.b16 %v1489
        %v1585 = vunpack.c.l.b16 %v1490
        %v1586 = vunpack.c.h.b16 %v1490
        %v1587 = vunpack.c.l.b16 %v1491
        %v1588 = vunpack.c.h.b16 %v1491
        %v1589 = vunpack.c.l.b16 %v1492
        %v1590 = vunpack.c.h.b16 %v1492
        %v1591 = vunpack.c.l.b16 %v1493
        %v1592 = vunpack.c.h.b16 %v1493
        %v1593 = vunpack.c.l.b16 %v1494
        %v1594 = vunpack.c.h.b16 %v1494
        %v1595 = vunpack.c.l.b16 %v1495
        %v1596 = vunpack.c.h.b16 %v1495
        %v1597 = vunpack.c.l.b16 %v1496
        %v1598 = vunpack.c.h.b16 %v1496
        %v1599 = vunpack.c.l.b16 %v1497
        %v1600 = vunpack.c.h.b16 %v1497
        %v1601 = vunpack.c.l.b16 %v1498
        %v1602 = vunpack.c.h.b16 %v1498
        %v1603 = vunpack.c.l.b16 %v1499
        %v1604 = vunpack.c.h.b16 %v1499
        %v1605 = vunpack.c.l.b16 %v1500
        %v1606 = vunpack.c.h.b16 %v1500
        %v1607 = vunpack.c.l.b16 %v1501
        %v1608 = vunpack.c.h.b16 %v1501
        %v1609 = vunpack.c.l.b16 %v1502
        %v1610 = vunpack.c.h.b16 %v1502
        %v1611 = vunpack.c.l.b16 %v1503
        %v1612 = vunpack.c.h.b16 %v1503
        %v1613 = vunpack.c.l.b16 %v1504
        %v1614 = vunpack.c.h.b16 %v1504
        %v1615 = vunpack.c.l.b16 %v1505
        %v1616 = vunpack.c.h.b16 %v1505
        %v1617 = vunpack.c.l.b16 %v1506
        %v1618 = vunpack.c.h.b16 %v1506
        %v1619 = vpack.c.b16 %v1557, %v1555
        %v1620 = vpack.c.b16 %v1558, %v1556
        %v1621 = vpack.c.b16 %v1561, %v1559
        %v1622 = vpack.c.b16 %v1562, %v1560
        %v1623 = vpack.c.b16 %v1565, %v1563
        %v1624 = vpack.c.b16 %v1566, %v1564
        %v1625 = vpack.c.b16 %v1569, %v1567
        %v1626 = vpack.c.b16 %v1570, %v1568
        %v1627 = vpack.c.b16 %v1573, %v1571
        %v1628 = vpack.c.b16 %v1574, %v1572
        %v1629 = vpack.c.b16 %v1577, %v1575
        %v1630 = vpack.c.b16 %v1578, %v1576
        %v1631 = vpack.c.b16 %v1581, %v1579
        %v1632 = vpack.c.b16 %v1582, %v1580
        %v1633 = vpack.c.b16 %v1585, %v1583
        %v1634 = vpack.c.b16 %v1586, %v1584
        %v1635 = vpack.c.b16 %v1589, %v1587
        %v1636 = vpack.c.b16 %v1590, %v1588
        %v1637 = vpack.c.b16 %v1593, %v1591
        %v1638 = vpack.c.b16 %v1594, %v1592
        %v1639 = vpack.c.b16 %v1597, %v1595
        %v1640 = vpack.c.b16 %v1598, %v1596
        %v1641 = vpack.c.b16 %v1601, %v1599
        %v1642 = vpack.c.b16 %v1602, %v1600
        %v1643 = vpack.c.b16 %v1605, %v1603
        %v1644 = vpack.c.b16 %v1606, %v1604
        %v1645 = vpack.c.b16 %v1609, %v1607
        %v1646 = vpack.c.b16 %v1610, %v1608
        %v1647 = vpack.c.b16 %v1613, %v1611
        %v1648 = vpack.c.b16 %v1614, %v1612
        %v1649 = vpack.c.b16 %v1617, %v1615
        %v1650 = vpack.c.b16 %v1618, %v1616
        %1683 = vmatprep.subr.bf16.mxu0 %v1634
        %1684 = vmatpush1.bf16.msra.mxu0 %v1633
        %1685 = vmatprep.subr.bf16.mxu0 %v1632
        %1686 = vmatpush1.bf16.msra.mxu0 %v1631
        %1687 = vmatprep.subr.bf16.mxu0 %v1630
        %1688 = vmatpush1.bf16.msra.mxu0 %v1629
        %1689 = vmatprep.subr.bf16.mxu0 %v1628
        %1690 = vmatpush1.bf16.msra.mxu0 %v1627
        %1691 = vmatprep.subr.bf16.mxu0 %v1626
        %1692 = vmatpush1.bf16.msra.mxu0 %v1625
        %1693 = vmatprep.subr.bf16.mxu0 %v1624
        %1694 = vmatpush1.bf16.msra.mxu0 %v1623
        %1695 = vmatprep.subr.bf16.mxu0 %v1622
        %1696 = vmatpush1.bf16.msra.mxu0 %v1621
        %1697 = vmatprep.subr.bf16.mxu0 %v1620
        %1698 = vmatpush1.bf16.msra.mxu0 %v1619
        %1699 = vmatprep.subr.bf16.mxu0 %v1650
        %1700 = vmatpush2.bf16.msra.mxu0 %v1649
        %1701 = vmatprep.subr.bf16.mxu0 %v1648
        %1702 = vmatpush2.bf16.msra.mxu0 %v1647
        %1703 = vmatprep.subr.bf16.mxu0 %v1646
        %1704 = vmatpush2.bf16.msra.mxu0 %v1645
        %1705 = vmatprep.subr.bf16.mxu0 %v1644
        %1706 = vmatpush2.bf16.msra.mxu0 %v1643
        %1707 = vmatprep.subr.bf16.mxu0 %v1642
        %1708 = vmatpush2.bf16.msra.mxu0 %v1641
        %1709 = vmatprep.subr.bf16.mxu0 %v1640
        %1710 = vmatpush2.bf16.msra.mxu0 %v1639
        %1711 = vmatprep.subr.bf16.mxu0 %v1638
        %1712 = vmatpush2.bf16.msra.mxu0 %v1637
        %1713 = vmatprep.subr.bf16.mxu0 %v1636
        %1714 = vmatpush2.bf16.msra.mxu0 %v1635
        %1715 = vmatprep.mubr.bf16.mxu0 %v1516
        %1716 = vmatmul.mubr.bf16.gmra.mxu0 %v1515
        %v1717 = vpop.f32.mrf.mxu0
        %v1718 = vadd.f32 0.0, %v1717
        %v1719 = vpop.f32.mrf.mxu0
        %v1720 = vadd.f32 0.0, %v1719
        %v1721 = vpop.f32.mrf.mxu0
        %v1722 = vadd.f32 0.0, %v1721
        %v1723 = vpop.f32.mrf.mxu0
        %v1724 = vadd.f32 0.0, %v1723
        %1725 = vmatprep.mubr.bf16.mxu0 %v1518
        %1726 = vmatmul.mubr.bf16.gmra.mxu0 %v1517
        %v1727 = vpop.f32.mrf.mxu0
        %v1728 = vadd.f32 0.0, %v1727
        %v1729 = vpop.f32.mrf.mxu0
        %v1730 = vadd.f32 0.0, %v1729
        %v1731 = vpop.f32.mrf.mxu0
        %v1732 = vadd.f32 0.0, %v1731
        %v1733 = vpop.f32.mrf.mxu0
        %v1734 = vadd.f32 0.0, %v1733
        %1735 = vdwg.mxu0
        %v1736 = vld [vmem:[#allocation4] sm:$0xff]
        %v1737 = vld [vmem:[#allocation4 + $0x8] sm:$0xff]
        %v1738 = vld [vmem:[#allocation4 + $0x10] sm:$0xff]
        %v1739 = vld [vmem:[#allocation4 + $0x18] sm:$0xff]
        %v1740 = vld [vmem:[#allocation4 + $0x20] sm:$0xff]
        %v1741 = vld [vmem:[#allocation4 + $0x28] sm:$0xff]
        %v1742 = vld [vmem:[#allocation4 + $0x30] sm:$0xff]
        %v1743 = vld [vmem:[#allocation4 + $0x38] sm:$0xff]
        %v1744 = vadd.f32 %v1736, %v1718
        %v1745 = vadd.f32 %v1737, %v1720
        %v1746 = vadd.f32 %v1738, %v1722
        %v1747 = vadd.f32 %v1739, %v1724
        %v1748 = vadd.f32 %v1740, %v1728
        %v1749 = vadd.f32 %v1741, %v1730
        %v1750 = vadd.f32 %v1742, %v1732
        %v1751 = vadd.f32 %v1743, %v1734
        %1752 = vst [vmem:[#allocation4] sm:$0xff] %v1744
        %1753 = vst [vmem:[#allocation4 + $0x8] sm:$0xff] %v1745
        %1754 = vst [vmem:[#allocation4 + $0x10] sm:$0xff] %v1746
        %1755 = vst [vmem:[#allocation4 + $0x18] sm:$0xff] %v1747
        %1756 = vst [vmem:[#allocation4 + $0x20] sm:$0xff] %v1748
        %1757 = vst [vmem:[#allocation4 + $0x28] sm:$0xff] %v1749
        %1758 = vst [vmem:[#allocation4 + $0x30] sm:$0xff] %v1750
        %1759 = vst [vmem:[#allocation4 + $0x38] sm:$0xff] %v1751
        %v1760 = vld [vmem:[%s810] sm:$0xff]
        %v1761 = vld [vmem:[%s810 + $0x8] sm:$0xff]
        %v1762 = vld [vmem:[%s810 + $0x18] sm:$0xff]
        %v1763 = vld [vmem:[%s810 + $0x20] sm:$0xff]
        %s1764 = scalar_lea.vmem %s3, 768
        %v1765 = vld [vmem:[%s1764] sm:$0xff]
        %v1766 = vld [vmem:[%s1764 + $0x8] sm:$0xff]
        %v1767 = vld [vmem:[%s1764 + $0x10] sm:$0xff]
        %v1768 = vld [vmem:[%s1764 + $0x18] sm:$0xff]
        %v1769 = vld [vmem:[%s1764 + $0x20] sm:$0xff]
        %v1770 = vld [vmem:[%s1764 + $0x28] sm:$0xff]
        %v1771 = vld [vmem:[%s1764 + $0x30] sm:$0xff]
        %v1772 = vld [vmem:[%s1764 + $0x38] sm:$0xff]
        %v1773 = vld [vmem:[%s1764 + $0x40] sm:$0xff]
        %v1774 = vld [vmem:[%s1764 + $0x48] sm:$0xff]
        %v1775 = vld [vmem:[%s1764 + $0x50] sm:$0xff]
        %v1776 = vld [vmem:[%s1764 + $0x58] sm:$0xff]
        %v1777 = vld [vmem:[%s1764 + $0x60] sm:$0xff]
        %v1778 = vld [vmem:[%s1764 + $0x68] sm:$0xff]
        %v1779 = vld [vmem:[%s1764 + $0x70] sm:$0xff]
        %v1780 = vld [vmem:[%s1764 + $0x78] sm:$0xff]
        %v1781 = vld [vmem:[%s1764 + $0x80] sm:$0xff]
        %v1782 = vld [vmem:[%s1764 + $0x88] sm:$0xff]
        %v1783 = vld [vmem:[%s1764 + $0x90] sm:$0xff]
        %v1784 = vld [vmem:[%s1764 + $0x98] sm:$0xff]
        %v1785 = vld [vmem:[%s1764 + $0xa0] sm:$0xff]
        %v1786 = vld [vmem:[%s1764 + $0xa8] sm:$0xff]
        %v1787 = vld [vmem:[%s1764 + $0xb0] sm:$0xff]
        %v1788 = vld [vmem:[%s1764 + $0xb8] sm:$0xff]
        %v1789 = vld [vmem:[%s1764 + $0xc0] sm:$0xff]
        %v1790 = vld [vmem:[%s1764 + $0xc8] sm:$0xff]
        %v1791 = vld [vmem:[%s1764 + $0xd0] sm:$0xff]
        %v1792 = vld [vmem:[%s1764 + $0xd8] sm:$0xff]
        %v1793 = vld [vmem:[%s1764 + $0xe0] sm:$0xff]
        %v1794 = vld [vmem:[%s1764 + $0xe8] sm:$0xff]
        %v1795 = vld [vmem:[%s1764 + $0xf0] sm:$0xff]
        %v1796 = vld [vmem:[%s1764 + $0xf8] sm:$0xff]
        %v1801 = vunpack.c.l.b16 %v1760
        %v1802 = vunpack.c.h.b16 %v1760
        %v1803 = vunpack.c.l.b16 %v1761
        %v1804 = vunpack.c.h.b16 %v1761
        %v1805 = vunpack.c.l.b16 %v1762
        %v1806 = vunpack.c.h.b16 %v1762
        %v1807 = vunpack.c.l.b16 %v1763
        %v1808 = vunpack.c.h.b16 %v1763
        %v1809 = vpack.c.b16 %v1803, %v1801
        %v1810 = vpack.c.b16 %v1804, %v1802
        %v1811 = vpack.c.b16 %v1807, %v1805
        %v1812 = vpack.c.b16 %v1808, %v1806
        %v1849 = vunpack.c.l.b16 %v1765
        %v1850 = vunpack.c.h.b16 %v1765
        %v1851 = vunpack.c.l.b16 %v1766
        %v1852 = vunpack.c.h.b16 %v1766
        %v1853 = vunpack.c.l.b16 %v1767
        %v1854 = vunpack.c.h.b16 %v1767
        %v1855 = vunpack.c.l.b16 %v1768
        %v1856 = vunpack.c.h.b16 %v1768
        %v1857 = vunpack.c.l.b16 %v1769
        %v1858 = vunpack.c.h.b16 %v1769
        %v1859 = vunpack.c.l.b16 %v1770
        %v1860 = vunpack.c.h.b16 %v1770
        %v1861 = vunpack.c.l.b16 %v1771
        %v1862 = vunpack.c.h.b16 %v1771
        %v1863 = vunpack.c.l.b16 %v1772
        %v1864 = vunpack.c.h.b16 %v1772
        %v1865 = vunpack.c.l.b16 %v1773
        %v1866 = vunpack.c.h.b16 %v1773
        %v1867 = vunpack.c.l.b16 %v1774
        %v1868 = vunpack.c.h.b16 %v1774
        %v1869 = vunpack.c.l.b16 %v1775
        %v1870 = vunpack.c.h.b16 %v1775
        %v1871 = vunpack.c.l.b16 %v1776
        %v1872 = vunpack.c.h.b16 %v1776
        %v1873 = vunpack.c.l.b16 %v1777
        %v1874 = vunpack.c.h.b16 %v1777
        %v1875 = vunpack.c.l.b16 %v1778
        %v1876 = vunpack.c.h.b16 %v1778
        %v1877 = vunpack.c.l.b16 %v1779
        %v1878 = vunpack.c.h.b16 %v1779
        %v1879 = vunpack.c.l.b16 %v1780
        %v1880 = vunpack.c.h.b16 %v1780
        %v1881 = vunpack.c.l.b16 %v1781
        %v1882 = vunpack.c.h.b16 %v1781
        %v1883 = vunpack.c.l.b16 %v1782
        %v1884 = vunpack.c.h.b16 %v1782
        %v1885 = vunpack.c.l.b16 %v1783
        %v1886 = vunpack.c.h.b16 %v1783
        %v1887 = vunpack.c.l.b16 %v1784
        %v1888 = vunpack.c.h.b16 %v1784
        %v1889 = vunpack.c.l.b16 %v1785
        %v1890 = vunpack.c.h.b16 %v1785
        %v1891 = vunpack.c.l.b16 %v1786
        %v1892 = vunpack.c.h.b16 %v1786
        %v1893 = vunpack.c.l.b16 %v1787
        %v1894 = vunpack.c.h.b16 %v1787
        %v1895 = vunpack.c.l.b16 %v1788
        %v1896 = vunpack.c.h.b16 %v1788
        %v1897 = vunpack.c.l.b16 %v1789
        %v1898 = vunpack.c.h.b16 %v1789
        %v1899 = vunpack.c.l.b16 %v1790
        %v1900 = vunpack.c.h.b16 %v1790
        %v1901 = vunpack.c.l.b16 %v1791
        %v1902 = vunpack.c.h.b16 %v1791
        %v1903 = vunpack.c.l.b16 %v1792
        %v1904 = vunpack.c.h.b16 %v1792
        %v1905 = vunpack.c.l.b16 %v1793
        %v1906 = vunpack.c.h.b16 %v1793
        %v1907 = vunpack.c.l.b16 %v1794
        %v1908 = vunpack.c.h.b16 %v1794
        %v1909 = vunpack.c.l.b16 %v1795
        %v1910 = vunpack.c.h.b16 %v1795
        %v1911 = vunpack.c.l.b16 %v1796
        %v1912 = vunpack.c.h.b16 %v1796
        %v1913 = vpack.c.b16 %v1851, %v1849
        %v1914 = vpack.c.b16 %v1852, %v1850
        %v1915 = vpack.c.b16 %v1855, %v1853
        %v1916 = vpack.c.b16 %v1856, %v1854
        %v1917 = vpack.c.b16 %v1859, %v1857
        %v1918 = vpack.c.b16 %v1860, %v1858
        %v1919 = vpack.c.b16 %v1863, %v1861
        %v1920 = vpack.c.b16 %v1864, %v1862
        %v1921 = vpack.c.b16 %v1867, %v1865
        %v1922 = vpack.c.b16 %v1868, %v1866
        %v1923 = vpack.c.b16 %v1871, %v1869
        %v1924 = vpack.c.b16 %v1872, %v1870
        %v1925 = vpack.c.b16 %v1875, %v1873
        %v1926 = vpack.c.b16 %v1876, %v1874
        %v1927 = vpack.c.b16 %v1879, %v1877
        %v1928 = vpack.c.b16 %v1880, %v1878
        %v1929 = vpack.c.b16 %v1883, %v1881
        %v1930 = vpack.c.b16 %v1884, %v1882
        %v1931 = vpack.c.b16 %v1887, %v1885
        %v1932 = vpack.c.b16 %v1888, %v1886
        %v1933 = vpack.c.b16 %v1891, %v1889
        %v1934 = vpack.c.b16 %v1892, %v1890
        %v1935 = vpack.c.b16 %v1895, %v1893
        %v1936 = vpack.c.b16 %v1896, %v1894
        %v1937 = vpack.c.b16 %v1899, %v1897
        %v1938 = vpack.c.b16 %v1900, %v1898
        %v1939 = vpack.c.b16 %v1903, %v1901
        %v1940 = vpack.c.b16 %v1904, %v1902
        %v1941 = vpack.c.b16 %v1907, %v1905
        %v1942 = vpack.c.b16 %v1908, %v1906
        %v1943 = vpack.c.b16 %v1911, %v1909
        %v1944 = vpack.c.b16 %v1912, %v1910
        %1977 = vmatprep.subr.bf16.mxu0 %v1928
        %1978 = vmatpush1.bf16.msra.mxu0 %v1927
        %1979 = vmatprep.subr.bf16.mxu0 %v1926
        %1980 = vmatpush1.bf16.msra.mxu0 %v1925
        %1981 = vmatprep.subr.bf16.mxu0 %v1924
        %1982 = vmatpush1.bf16.msra.mxu0 %v1923
        %1983 = vmatprep.subr.bf16.mxu0 %v1922
        %1984 = vmatpush1.bf16.msra.mxu0 %v1921
        %1985 = vmatprep.subr.bf16.mxu0 %v1920
        %1986 = vmatpush1.bf16.msra.mxu0 %v1919
        %1987 = vmatprep.subr.bf16.mxu0 %v1918
        %1988 = vmatpush1.bf16.msra.mxu0 %v1917
        %1989 = vmatprep.subr.bf16.mxu0 %v1916
        %1990 = vmatpush1.bf16.msra.mxu0 %v1915
        %1991 = vmatprep.subr.bf16.mxu0 %v1914
        %1992 = vmatpush1.bf16.msra.mxu0 %v1913
        %1993 = vmatprep.subr.bf16.mxu0 %v1944
        %1994 = vmatpush2.bf16.msra.mxu0 %v1943
        %1995 = vmatprep.subr.bf16.mxu0 %v1942
        %1996 = vmatpush2.bf16.msra.mxu0 %v1941
        %1997 = vmatprep.subr.bf16.mxu0 %v1940
        %1998 = vmatpush2.bf16.msra.mxu0 %v1939
        %1999 = vmatprep.subr.bf16.mxu0 %v1938
        %2000 = vmatpush2.bf16.msra.mxu0 %v1937
        %2001 = vmatprep.subr.bf16.mxu0 %v1936
        %2002 = vmatpush2.bf16.msra.mxu0 %v1935
        %2003 = vmatprep.subr.bf16.mxu0 %v1934
        %2004 = vmatpush2.bf16.msra.mxu0 %v1933
        %2005 = vmatprep.subr.bf16.mxu0 %v1932
        %2006 = vmatpush2.bf16.msra.mxu0 %v1931
        %2007 = vmatprep.subr.bf16.mxu0 %v1930
        %2008 = vmatpush2.bf16.msra.mxu0 %v1929
        %2009 = vmatprep.mubr.bf16.mxu0 %v1810
        %2010 = vmatmul.mubr.bf16.gmra.mxu0 %v1809
        %v2011 = vpop.f32.mrf.mxu0
        %v2012 = vadd.f32 0.0, %v2011
        %v2013 = vpop.f32.mrf.mxu0
        %v2014 = vadd.f32 0.0, %v2013
        %v2015 = vpop.f32.mrf.mxu0
        %v2016 = vadd.f32 0.0, %v2015
        %v2017 = vpop.f32.mrf.mxu0
        %v2018 = vadd.f32 0.0, %v2017
        %2019 = vmatprep.mubr.bf16.mxu0 %v1812
        %2020 = vmatmul.mubr.bf16.gmra.mxu0 %v1811
        %v2021 = vpop.f32.mrf.mxu0
        %v2022 = vadd.f32 0.0, %v2021
        %v2023 = vpop.f32.mrf.mxu0
        %v2024 = vadd.f32 0.0, %v2023
        %v2025 = vpop.f32.mrf.mxu0
        %v2026 = vadd.f32 0.0, %v2025
        %v2027 = vpop.f32.mrf.mxu0
        %v2028 = vadd.f32 0.0, %v2027
        %2029 = vdwg.mxu0
        %v2030 = vld [vmem:[#allocation4] sm:$0xff]
        %v2031 = vld [vmem:[#allocation4 + $0x8] sm:$0xff]
        %v2032 = vld [vmem:[#allocation4 + $0x10] sm:$0xff]
        %v2033 = vld [vmem:[#allocation4 + $0x18] sm:$0xff]
        %v2034 = vld [vmem:[#allocation4 + $0x20] sm:$0xff]
        %v2035 = vld [vmem:[#allocation4 + $0x28] sm:$0xff]
        %v2036 = vld [vmem:[#allocation4 + $0x30] sm:$0xff]
        %v2037 = vld [vmem:[#allocation4 + $0x38] sm:$0xff]
        %v2038 = vadd.f32 %v2030, %v2012
        %v2039 = vadd.f32 %v2031, %v2014
        %v2040 = vadd.f32 %v2032, %v2016
        %v2041 = vadd.f32 %v2033, %v2018
        %v2042 = vadd.f32 %v2034, %v2022
        %v2043 = vadd.f32 %v2035, %v2024
        %v2044 = vadd.f32 %v2036, %v2026
        %v2045 = vadd.f32 %v2037, %v2028
        %2046 = vst [vmem:[#allocation4] sm:$0xff] %v2038
        %2047 = vst [vmem:[#allocation4 + $0x8] sm:$0xff] %v2039
        %2048 = vst [vmem:[#allocation4 + $0x10] sm:$0xff] %v2040
        %2049 = vst [vmem:[#allocation4 + $0x18] sm:$0xff] %v2041
        %2050 = vst [vmem:[#allocation4 + $0x20] sm:$0xff] %v2042
        %2051 = vst [vmem:[#allocation4 + $0x28] sm:$0xff] %v2043
        %2052 = vst [vmem:[#allocation4 + $0x30] sm:$0xff] %v2044
        %2053 = vst [vmem:[#allocation4 + $0x38] sm:$0xff] %v2045
        %v2054 = vld [vmem:[%s810] sm:$0xff]
        %v2055 = vld [vmem:[%s810 + $0x8] sm:$0xff]
        %v2056 = vld [vmem:[%s810 + $0x10] sm:$0x11]
        %v2057 = vld [vmem:[%s810 + $0x18] sm:$0xff]
        %v2058 = vld [vmem:[%s810 + $0x20] sm:$0xff]
        %v2059 = vld [vmem:[%s810 + $0x28] sm:$0x11]
        %v2061 = vshrl.u32 %v2054, 16
        %v2063 = vrot.slane %v2061, 4
        %v2064 = vshll.u32 %v2054, 16
        %v2066 = vrot.slane %v2064, 5
        %v2067 = vor.u32 %v2063, %v2066
        %v2068 = vrot.slane %v2067, 4
        %v2070 = vshll.u32 %v2055, 16
        %v2072 = vrot.slane %v2070, 5
        %v2073 = vsel %vm1110, %v2068, %v2072
        %v2074 = vshrl.u32 %v2055, 16
        %v2076 = vrot.slane %v2074, 4
        %v2077 = vor.u32 %v2076, %v2072
        %v2078 = vrot.slane %v2077, 4
        %v2080 = vshll.u32 %v2056, 16
        %v2082 = vrot.slane %v2080, 5
        %v2083 = vsel %vm1110, %v2078, %v2082
        %v2085 = vshrl.u32 %v2057, 16
        %v2087 = vrot.slane %v2085, 4
        %v2088 = vshll.u32 %v2057, 16
        %v2090 = vrot.slane %v2088, 5
        %v2091 = vor.u32 %v2087, %v2090
        %v2092 = vrot.slane %v2091, 4
        %v2094 = vshll.u32 %v2058, 16
        %v2096 = vrot.slane %v2094, 5
        %v2097 = vsel %vm1110, %v2092, %v2096
        %v2098 = vshrl.u32 %v2058, 16
        %v2100 = vrot.slane %v2098, 4
        %v2101 = vor.u32 %v2100, %v2096
        %v2102 = vrot.slane %v2101, 4
        %v2104 = vshll.u32 %v2059, 16
        %v2106 = vrot.slane %v2104, 5
        %v2107 = vsel %vm1110, %v2102, %v2106
        %s2108 = scalar_lea.vmem %s3, 1024
        %v2109 = vld [vmem:[%s2108] sm:$0xff]
        %v2110 = vld [vmem:[%s2108 + $0x8] sm:$0xff]
        %v2111 = vld [vmem:[%s2108 + $0x10] sm:$0xff]
        %v2112 = vld [vmem:[%s2108 + $0x18] sm:$0xff]
        %v2113 = vld [vmem:[%s2108 + $0x20] sm:$0xff]
        %v2114 = vld [vmem:[%s2108 + $0x28] sm:$0xff]
        %v2115 = vld [vmem:[%s2108 + $0x30] sm:$0xff]
        %v2116 = vld [vmem:[%s2108 + $0x38] sm:$0xff]
        %v2117 = vld [vmem:[%s2108 + $0x40] sm:$0xff]
        %v2118 = vld [vmem:[%s2108 + $0x48] sm:$0xff]
        %v2119 = vld [vmem:[%s2108 + $0x50] sm:$0xff]
        %v2120 = vld [vmem:[%s2108 + $0x58] sm:$0xff]
        %v2121 = vld [vmem:[%s2108 + $0x60] sm:$0xff]
        %v2122 = vld [vmem:[%s2108 + $0x68] sm:$0xff]
        %v2123 = vld [vmem:[%s2108 + $0x70] sm:$0xff]
        %v2124 = vld [vmem:[%s2108 + $0x78] sm:$0xff]
        %v2125 = vld [vmem:[%s2108 + $0x80] sm:$0xff]
        %v2126 = vld [vmem:[%s2108 + $0x88] sm:$0xff]
        %v2127 = vld [vmem:[%s2108 + $0x90] sm:$0xff]
        %v2128 = vld [vmem:[%s2108 + $0x98] sm:$0xff]
        %v2129 = vld [vmem:[%s2108 + $0xa0] sm:$0xff]
        %v2130 = vld [vmem:[%s2108 + $0xa8] sm:$0xff]
        %v2131 = vld [vmem:[%s2108 + $0xb0] sm:$0xff]
        %v2132 = vld [vmem:[%s2108 + $0xb8] sm:$0xff]
        %v2133 = vld [vmem:[%s2108 + $0xc0] sm:$0xff]
        %v2134 = vld [vmem:[%s2108 + $0xc8] sm:$0xff]
        %v2135 = vld [vmem:[%s2108 + $0xd0] sm:$0xff]
        %v2136 = vld [vmem:[%s2108 + $0xd8] sm:$0xff]
        %v2137 = vld [vmem:[%s2108 + $0xe0] sm:$0xff]
        %v2138 = vld [vmem:[%s2108 + $0xe8] sm:$0xff]
        %v2139 = vld [vmem:[%s2108 + $0xf0] sm:$0xff]
        %v2140 = vld [vmem:[%s2108 + $0xf8] sm:$0xff]
        %v2141 = vunpack.c.l.b16 %v2073
        %v2142 = vunpack.c.h.b16 %v2073
        %v2143 = vunpack.c.l.b16 %v2083
        %v2144 = vunpack.c.h.b16 %v2083
        %v2145 = vunpack.c.l.b16 %v2097
        %v2146 = vunpack.c.h.b16 %v2097
        %v2147 = vunpack.c.l.b16 %v2107
        %v2148 = vunpack.c.h.b16 %v2107
        %v2149 = vpack.c.b16 %v2143, %v2141
        %v2150 = vpack.c.b16 %v2144, %v2142
        %v2151 = vpack.c.b16 %v2147, %v2145
        %v2152 = vpack.c.b16 %v2148, %v2146
        %v2189 = vunpack.c.l.b16 %v2109
        %v2190 = vunpack.c.h.b16 %v2109
        %v2191 = vunpack.c.l.b16 %v2110
        %v2192 = vunpack.c.h.b16 %v2110
        %v2193 = vunpack.c.l.b16 %v2111
        %v2194 = vunpack.c.h.b16 %v2111
        %v2195 = vunpack.c.l.b16 %v2112
        %v2196 = vunpack.c.h.b16 %v2112
        %v2197 = vunpack.c.l.b16 %v2113
        %v2198 = vunpack.c.h.b16 %v2113
        %v2199 = vunpack.c.l.b16 %v2114
        %v2200 = vunpack.c.h.b16 %v2114
        %v2201 = vunpack.c.l.b16 %v2115
        %v2202 = vunpack.c.h.b16 %v2115
        %v2203 = vunpack.c.l.b16 %v2116
        %v2204 = vunpack.c.h.b16 %v2116
        %v2205 = vunpack.c.l.b16 %v2117
        %v2206 = vunpack.c.h.b16 %v2117
        %v2207 = vunpack.c.l.b16 %v2118
        %v2208 = vunpack.c.h.b16 %v2118
        %v2209 = vunpack.c.l.b16 %v2119
        %v2210 = vunpack.c.h.b16 %v2119
        %v2211 = vunpack.c.l.b16 %v2120
        %v2212 = vunpack.c.h.b16 %v2120
        %v2213 = vunpack.c.l.b16 %v2121
        %v2214 = vunpack.c.h.b16 %v2121
        %v2215 = vunpack.c.l.b16 %v2122
        %v2216 = vunpack.c.h.b16 %v2122
        %v2217 = vunpack.c.l.b16 %v2123
        %v2218 = vunpack.c.h.b16 %v2123
        %v2219 = vunpack.c.l.b16 %v2124
        %v2220 = vunpack.c.h.b16 %v2124
        %v2221 = vunpack.c.l.b16 %v2125
        %v2222 = vunpack.c.h.b16 %v2125
        %v2223 = vunpack.c.l.b16 %v2126
        %v2224 = vunpack.c.h.b16 %v2126
        %v2225 = vunpack.c.l.b16 %v2127
        %v2226 = vunpack.c.h.b16 %v2127
        %v2227 = vunpack.c.l.b16 %v2128
        %v2228 = vunpack.c.h.b16 %v2128
        %v2229 = vunpack.c.l.b16 %v2129
        %v2230 = vunpack.c.h.b16 %v2129
        %v2231 = vunpack.c.l.b16 %v2130
        %v2232 = vunpack.c.h.b16 %v2130
        %v2233 = vunpack.c.l.b16 %v2131
        %v2234 = vunpack.c.h.b16 %v2131
        %v2235 = vunpack.c.l.b16 %v2132
        %v2236 = vunpack.c.h.b16 %v2132
        %v2237 = vunpack.c.l.b16 %v2133
        %v2238 = vunpack.c.h.b16 %v2133
        %v2239 = vunpack.c.l.b16 %v2134
        %v2240 = vunpack.c.h.b16 %v2134
        %v2241 = vunpack.c.l.b16 %v2135
        %v2242 = vunpack.c.h.b16 %v2135
        %v2243 = vunpack.c.l.b16 %v2136
        %v2244 = vunpack.c.h.b16 %v2136
        %v2245 = vunpack.c.l.b16 %v2137
        %v2246 = vunpack.c.h.b16 %v2137
        %v2247 = vunpack.c.l.b16 %v2138
        %v2248 = vunpack.c.h.b16 %v2138
        %v2249 = vunpack.c.l.b16 %v2139
        %v2250 = vunpack.c.h.b16 %v2139
        %v2251 = vunpack.c.l.b16 %v2140
        %v2252 = vunpack.c.h.b16 %v2140
        %v2253 = vpack.c.b16 %v2191, %v2189
        %v2254 = vpack.c.b16 %v2192, %v2190
        %v2255 = vpack.c.b16 %v2195, %v2193
        %v2256 = vpack.c.b16 %v2196, %v2194
        %v2257 = vpack.c.b16 %v2199, %v2197
        %v2258 = vpack.c.b16 %v2200, %v2198
        %v2259 = vpack.c.b16 %v2203, %v2201
        %v2260 = vpack.c.b16 %v2204, %v2202
        %v2261 = vpack.c.b16 %v2207, %v2205
        %v2262 = vpack.c.b16 %v2208, %v2206
        %v2263 = vpack.c.b16 %v2211, %v2209
        %v2264 = vpack.c.b16 %v2212, %v2210
        %v2265 = vpack.c.b16 %v2215, %v2213
        %v2266 = vpack.c.b16 %v2216, %v2214
        %v2267 = vpack.c.b16 %v2219, %v2217
        %v2268 = vpack.c.b16 %v2220, %v2218
        %v2269 = vpack.c.b16 %v2223, %v2221
        %v2270 = vpack.c.b16 %v2224, %v2222
        %v2271 = vpack.c.b16 %v2227, %v2225
        %v2272 = vpack.c.b16 %v2228, %v2226
        %v2273 = vpack.c.b16 %v2231, %v2229
        %v2274 = vpack.c.b16 %v2232, %v2230
        %v2275 = vpack.c.b16 %v2235, %v2233
        %v2276 = vpack.c.b16 %v2236, %v2234
        %v2277 = vpack.c.b16 %v2239, %v2237
        %v2278 = vpack.c.b16 %v2240, %v2238
        %v2279 = vpack.c.b16 %v2243, %v2241
        %v2280 = vpack.c.b16 %v2244, %v2242
        %v2281 = vpack.c.b16 %v2247, %v2245
        %v2282 = vpack.c.b16 %v2248, %v2246
        %v2283 = vpack.c.b16 %v2251, %v2249
        %v2284 = vpack.c.b16 %v2252, %v2250
        %2317 = vmatprep.subr.bf16.mxu0 %v2268
        %2318 = vmatpush1.bf16.msra.mxu0 %v2267
        %2319 = vmatprep.subr.bf16.mxu0 %v2266
        %2320 = vmatpush1.bf16.msra.mxu0 %v2265
        %2321 = vmatprep.subr.bf16.mxu0 %v2264
        %2322 = vmatpush1.bf16.msra.mxu0 %v2263
        %2323 = vmatprep.subr.bf16.mxu0 %v2262
        %2324 = vmatpush1.bf16.msra.mxu0 %v2261
        %2325 = vmatprep.subr.bf16.mxu0 %v2260
        %2326 = vmatpush1.bf16.msra.mxu0 %v2259
        %2327 = vmatprep.subr.bf16.mxu0 %v2258
        %2328 = vmatpush1.bf16.msra.mxu0 %v2257
        %2329 = vmatprep.subr.bf16.mxu0 %v2256
        %2330 = vmatpush1.bf16.msra.mxu0 %v2255
        %2331 = vmatprep.subr.bf16.mxu0 %v2254
        %2332 = vmatpush1.bf16.msra.mxu0 %v2253
        %2333 = vmatprep.subr.bf16.mxu0 %v2284
        %2334 = vmatpush2.bf16.msra.mxu0 %v2283
        %2335 = vmatprep.subr.bf16.mxu0 %v2282
        %2336 = vmatpush2.bf16.msra.mxu0 %v2281
        %2337 = vmatprep.subr.bf16.mxu0 %v2280
        %2338 = vmatpush2.bf16.msra.mxu0 %v2279
        %2339 = vmatprep.subr.bf16.mxu0 %v2278
        %2340 = vmatpush2.bf16.msra.mxu0 %v2277
        %2341 = vmatprep.subr.bf16.mxu0 %v2276
        %2342 = vmatpush2.bf16.msra.mxu0 %v2275
        %2343 = vmatprep.subr.bf16.mxu0 %v2274
        %2344 = vmatpush2.bf16.msra.mxu0 %v2273
        %2345 = vmatprep.subr.bf16.mxu0 %v2272
        %2346 = vmatpush2.bf16.msra.mxu0 %v2271
        %2347 = vmatprep.subr.bf16.mxu0 %v2270
        %2348 = vmatpush2.bf16.msra.mxu0 %v2269
        %2349 = vmatprep.mubr.bf16.mxu0 %v2150
        %2350 = vmatmul.mubr.bf16.gmra.mxu0 %v2149
        %v2351 = vpop.f32.mrf.mxu0
        %v2352 = vadd.f32 0.0, %v2351
        %v2353 = vpop.f32.mrf.mxu0
        %v2354 = vadd.f32 0.0, %v2353
        %v2355 = vpop.f32.mrf.mxu0
        %v2356 = vadd.f32 0.0, %v2355
        %v2357 = vpop.f32.mrf.mxu0
        %v2358 = vadd.f32 0.0, %v2357
        %2359 = vmatprep.mubr.bf16.mxu0 %v2152
        %2360 = vmatmul.mubr.bf16.gmra.mxu0 %v2151
        %v2361 = vpop.f32.mrf.mxu0
        %v2362 = vadd.f32 0.0, %v2361
        %v2363 = vpop.f32.mrf.mxu0
        %v2364 = vadd.f32 0.0, %v2363
        %v2365 = vpop.f32.mrf.mxu0
        %v2366 = vadd.f32 0.0, %v2365
        %v2367 = vpop.f32.mrf.mxu0
        %v2368 = vadd.f32 0.0, %v2367
        %2369 = vdwg.mxu0
        %v2370 = vld [vmem:[#allocation4] sm:$0xff]
        %v2371 = vld [vmem:[#allocation4 + $0x8] sm:$0xff]
        %v2372 = vld [vmem:[#allocation4 + $0x10] sm:$0xff]
        %v2373 = vld [vmem:[#allocation4 + $0x18] sm:$0xff]
        %v2374 = vld [vmem:[#allocation4 + $0x20] sm:$0xff]
        %v2375 = vld [vmem:[#allocation4 + $0x28] sm:$0xff]
        %v2376 = vld [vmem:[#allocation4 + $0x30] sm:$0xff]
        %v2377 = vld [vmem:[#allocation4 + $0x38] sm:$0xff]
        %v2378 = vadd.f32 %v2370, %v2352
        %v2379 = vadd.f32 %v2371, %v2354
        %v2380 = vadd.f32 %v2372, %v2356
        %v2381 = vadd.f32 %v2373, %v2358
        %v2382 = vadd.f32 %v2374, %v2362
        %v2383 = vadd.f32 %v2375, %v2364
        %v2384 = vadd.f32 %v2376, %v2366
        %v2385 = vadd.f32 %v2377, %v2368
        %2386 = vst [vmem:[#allocation4] sm:$0xff] %v2378
        %2387 = vst [vmem:[#allocation4 + $0x8] sm:$0xff] %v2379
        %2388 = vst [vmem:[#allocation4 + $0x10] sm:$0xff] %v2380
        %2389 = vst [vmem:[#allocation4 + $0x18] sm:$0xff] %v2381
        %2390 = vst [vmem:[#allocation4 + $0x20] sm:$0xff] %v2382
        %2391 = vst [vmem:[#allocation4 + $0x28] sm:$0xff] %v2383
        %2392 = vst [vmem:[#allocation4 + $0x30] sm:$0xff] %v2384
        %2393 = vst [vmem:[#allocation4 + $0x38] sm:$0xff] %v2385
        %v2394 = vld [vmem:[%s810] sm:$0xee]
        %v2395 = vld [vmem:[%s810 + $0x8] sm:$0xff]
        %v2396 = vld [vmem:[%s810 + $0x10] sm:$0x11]
        %v2397 = vld [vmem:[%s810 + $0x18] sm:$0xee]
        %v2398 = vld [vmem:[%s810 + $0x20] sm:$0xff]
        %v2399 = vld [vmem:[%s810 + $0x28] sm:$0x11]
        %v2406 = vrot.slane %v2394, 5
        %v2407 = vrot.slane %v2406, 4
        %v2408 = vrot.slane %v2395, 5
        %v2409 = vsel %vm1459, %v2407, %v2408
        %v2410 = vrot.slane %v2408, 4
        %v2411 = vrot.slane %v2396, 5
        %v2412 = vsel %vm1459, %v2410, %v2411
        %v2413 = vrot.slane %v2397, 5
        %v2414 = vrot.slane %v2413, 4
        %v2415 = vrot.slane %v2398, 5
        %v2416 = vsel %vm1459, %v2414, %v2415
        %v2417 = vrot.slane %v2415, 4
        %v2418 = vrot.slane %v2399, 5
        %v2419 = vsel %vm1459, %v2417, %v2418
        %s2420 = scalar_lea.vmem %s3, 1280
        %v2421 = vld [vmem:[%s2420] sm:$0xff]
        %v2422 = vld [vmem:[%s2420 + $0x8] sm:$0xff]
        %v2423 = vld [vmem:[%s2420 + $0x10] sm:$0xff]
        %v2424 = vld [vmem:[%s2420 + $0x18] sm:$0xff]
        %v2425 = vld [vmem:[%s2420 + $0x20] sm:$0xff]
        %v2426 = vld [vmem:[%s2420 + $0x28] sm:$0xff]
        %v2427 = vld [vmem:[%s2420 + $0x30] sm:$0xff]
        %v2428 = vld [vmem:[%s2420 + $0x38] sm:$0xff]
        %v2429 = vld [vmem:[%s2420 + $0x40] sm:$0xff]
        %v2430 = vld [vmem:[%s2420 + $0x48] sm:$0xff]
        %v2431 = vld [vmem:[%s2420 + $0x50] sm:$0xff]
        %v2432 = vld [vmem:[%s2420 + $0x58] sm:$0xff]
        %v2433 = vld [vmem:[%s2420 + $0x60] sm:$0xff]
        %v2434 = vld [vmem:[%s2420 + $0x68] sm:$0xff]
        %v2435 = vld [vmem:[%s2420 + $0x70] sm:$0xff]
        %v2436 = vld [vmem:[%s2420 + $0x78] sm:$0xff]
        %v2437 = vld [vmem:[%s2420 + $0x80] sm:$0xff]
        %v2438 = vld [vmem:[%s2420 + $0x88] sm:$0xff]
        %v2439 = vld [vmem:[%s2420 + $0x90] sm:$0xff]
        %v2440 = vld [vmem:[%s2420 + $0x98] sm:$0xff]
        %v2441 = vld [vmem:[%s2420 + $0xa0] sm:$0xff]
        %v2442 = vld [vmem:[%s2420 + $0xa8] sm:$0xff]
        %v2443 = vld [vmem:[%s2420 + $0xb0] sm:$0xff]
        %v2444 = vld [vmem:[%s2420 + $0xb8] sm:$0xff]
        %v2445 = vld [vmem:[%s2420 + $0xc0] sm:$0xff]
        %v2446 = vld [vmem:[%s2420 + $0xc8] sm:$0xff]
        %v2447 = vld [vmem:[%s2420 + $0xd0] sm:$0xff]
        %v2448 = vld [vmem:[%s2420 + $0xd8] sm:$0xff]
        %v2449 = vld [vmem:[%s2420 + $0xe0] sm:$0xff]
        %v2450 = vld [vmem:[%s2420 + $0xe8] sm:$0xff]
        %v2451 = vld [vmem:[%s2420 + $0xf0] sm:$0xff]
        %v2452 = vld [vmem:[%s2420 + $0xf8] sm:$0xff]
        %v2453 = vunpack.c.l.b16 %v2409
        %v2454 = vunpack.c.h.b16 %v2409
        %v2455 = vunpack.c.l.b16 %v2412
        %v2456 = vunpack.c.h.b16 %v2412
        %v2457 = vunpack.c.l.b16 %v2416
        %v2458 = vunpack.c.h.b16 %v2416
        %v2459 = vunpack.c.l.b16 %v2419
        %v2460 = vunpack.c.h.b16 %v2419
        %v2461 = vpack.c.b16 %v2455, %v2453
        %v2462 = vpack.c.b16 %v2456, %v2454
        %v2463 = vpack.c.b16 %v2459, %v2457
        %v2464 = vpack.c.b16 %v2460, %v2458
        %v2501 = vunpack.c.l.b16 %v2421
        %v2502 = vunpack.c.h.b16 %v2421
        %v2503 = vunpack.c.l.b16 %v2422
        %v2504 = vunpack.c.h.b16 %v2422
        %v2505 = vunpack.c.l.b16 %v2423
        %v2506 = vunpack.c.h.b16 %v2423
        %v2507 = vunpack.c.l.b16 %v2424
        %v2508 = vunpack.c.h.b16 %v2424
        %v2509 = vunpack.c.l.b16 %v2425
        %v2510 = vunpack.c.h.b16 %v2425
        %v2511 = vunpack.c.l.b16 %v2426
        %v2512 = vunpack.c.h.b16 %v2426
        %v2513 = vunpack.c.l.b16 %v2427
        %v2514 = vunpack.c.h.b16 %v2427
        %v2515 = vunpack.c.l.b16 %v2428
        %v2516 = vunpack.c.h.b16 %v2428
        %v2517 = vunpack.c.l.b16 %v2429
        %v2518 = vunpack.c.h.b16 %v2429
        %v2519 = vunpack.c.l.b16 %v2430
        %v2520 = vunpack.c.h.b16 %v2430
        %v2521 = vunpack.c.l.b16 %v2431
        %v2522 = vunpack.c.h.b16 %v2431
        %v2523 = vunpack.c.l.b16 %v2432
        %v2524 = vunpack.c.h.b16 %v2432
        %v2525 = vunpack.c.l.b16 %v2433
        %v2526 = vunpack.c.h.b16 %v2433
        %v2527 = vunpack.c.l.b16 %v2434
        %v2528 = vunpack.c.h.b16 %v2434
        %v2529 = vunpack.c.l.b16 %v2435
        %v2530 = vunpack.c.h.b16 %v2435
        %v2531 = vunpack.c.l.b16 %v2436
        %v2532 = vunpack.c.h.b16 %v2436
        %v2533 = vunpack.c.l.b16 %v2437
        %v2534 = vunpack.c.h.b16 %v2437
        %v2535 = vunpack.c.l.b16 %v2438
        %v2536 = vunpack.c.h.b16 %v2438
        %v2537 = vunpack.c.l.b16 %v2439
        %v2538 = vunpack.c.h.b16 %v2439
        %v2539 = vunpack.c.l.b16 %v2440
        %v2540 = vunpack.c.h.b16 %v2440
        %v2541 = vunpack.c.l.b16 %v2441
        %v2542 = vunpack.c.h.b16 %v2441
        %v2543 = vunpack.c.l.b16 %v2442
        %v2544 = vunpack.c.h.b16 %v2442
        %v2545 = vunpack.c.l.b16 %v2443
        %v2546 = vunpack.c.h.b16 %v2443
        %v2547 = vunpack.c.l.b16 %v2444
        %v2548 = vunpack.c.h.b16 %v2444
        %v2549 = vunpack.c.l.b16 %v2445
        %v2550 = vunpack.c.h.b16 %v2445
        %v2551 = vunpack.c.l.b16 %v2446
        %v2552 = vunpack.c.h.b16 %v2446
        %v2553 = vunpack.c.l.b16 %v2447
        %v2554 = vunpack.c.h.b16 %v2447
        %v2555 = vunpack.c.l.b16 %v2448
        %v2556 = vunpack.c.h.b16 %v2448
        %v2557 = vunpack.c.l.b16 %v2449
        %v2558 = vunpack.c.h.b16 %v2449
        %v2559 = vunpack.c.l.b16 %v2450
        %v2560 = vunpack.c.h.b16 %v2450
        %v2561 = vunpack.c.l.b16 %v2451
        %v2562 = vunpack.c.h.b16 %v2451
        %v2563 = vunpack.c.l.b16 %v2452
        %v2564 = vunpack.c.h.b16 %v2452
        %v2565 = vpack.c.b16 %v2503, %v2501
        %v2566 = vpack.c.b16 %v2504, %v2502
        %v2567 = vpack.c.b16 %v2507, %v2505
        %v2568 = vpack.c.b16 %v2508, %v2506
        %v2569 = vpack.c.b16 %v2511, %v2509
        %v2570 = vpack.c.b16 %v2512, %v2510
        %v2571 = vpack.c.b16 %v2515, %v2513
        %v2572 = vpack.c.b16 %v2516, %v2514
        %v2573 = vpack.c.b16 %v2519, %v2517
        %v2574 = vpack.c.b16 %v2520, %v2518
        %v2575 = vpack.c.b16 %v2523, %v2521
        %v2576 = vpack.c.b16 %v2524, %v2522
        %v2577 = vpack.c.b16 %v2527, %v2525
        %v2578 = vpack.c.b16 %v2528, %v2526
        %v2579 = vpack.c.b16 %v2531, %v2529
        %v2580 = vpack.c.b16 %v2532, %v2530
        %v2581 = vpack.c.b16 %v2535, %v2533
        %v2582 = vpack.c.b16 %v2536, %v2534
        %v2583 = vpack.c.b16 %v2539, %v2537
        %v2584 = vpack.c.b16 %v2540, %v2538
        %v2585 = vpack.c.b16 %v2543, %v2541
        %v2586 = vpack.c.b16 %v2544, %v2542
        %v2587 = vpack.c.b16 %v2547, %v2545
        %v2588 = vpack.c.b16 %v2548, %v2546
        %v2589 = vpack.c.b16 %v2551, %v2549
        %v2590 = vpack.c.b16 %v2552, %v2550
        %v2591 = vpack.c.b16 %v2555, %v2553
        %v2592 = vpack.c.b16 %v2556, %v2554
        %v2593 = vpack.c.b16 %v2559, %v2557
        %v2594 = vpack.c.b16 %v2560, %v2558
        %v2595 = vpack.c.b16 %v2563, %v2561
        %v2596 = vpack.c.b16 %v2564, %v2562
        %2629 = vmatprep.subr.bf16.mxu0 %v2580
        %2630 = vmatpush1.bf16.msra.mxu0 %v2579
        %2631 = vmatprep.subr.bf16.mxu0 %v2578
        %2632 = vmatpush1.bf16.msra.mxu0 %v2577
        %2633 = vmatprep.subr.bf16.mxu0 %v2576
        %2634 = vmatpush1.bf16.msra.mxu0 %v2575
        %2635 = vmatprep.subr.bf16.mxu0 %v2574
        %2636 = vmatpush1.bf16.msra.mxu0 %v2573
        %2637 = vmatprep.subr.bf16.mxu0 %v2572
        %2638 = vmatpush1.bf16.msra.mxu0 %v2571
        %2639 = vmatprep.subr.bf16.mxu0 %v2570
        %2640 = vmatpush1.bf16.msra.mxu0 %v2569
        %2641 = vmatprep.subr.bf16.mxu0 %v2568
        %2642 = vmatpush1.bf16.msra.mxu0 %v2567
        %2643 = vmatprep.subr.bf16.mxu0 %v2566
        %2644 = vmatpush1.bf16.msra.mxu0 %v2565
        %2645 = vmatprep.subr.bf16.mxu0 %v2596
        %2646 = vmatpush2.bf16.msra.mxu0 %v2595
        %2647 = vmatprep.subr.bf16.mxu0 %v2594
        %2648 = vmatpush2.bf16.msra.mxu0 %v2593
        %2649 = vmatprep.subr.bf16.mxu0 %v2592
        %2650 = vmatpush2.bf16.msra.mxu0 %v2591
        %2651 = vmatprep.subr.bf16.mxu0 %v2590
        %2652 = vmatpush2.bf16.msra.mxu0 %v2589
        %2653 = vmatprep.subr.bf16.mxu0 %v2588
        %2654 = vmatpush2.bf16.msra.mxu0 %v2587
        %2655 = vmatprep.subr.bf16.mxu0 %v2586
        %2656 = vmatpush2.bf16.msra.mxu0 %v2585
        %2657 = vmatprep.subr.bf16.mxu0 %v2584
        %2658 = vmatpush2.bf16.msra.mxu0 %v2583
        %2659 = vmatprep.subr.bf16.mxu0 %v2582
        %2660 = vmatpush2.bf16.msra.mxu0 %v2581
        %2661 = vmatprep.mubr.bf16.mxu0 %v2462
        %2662 = vmatmul.mubr.bf16.gmra.mxu0 %v2461
        %v2663 = vpop.f32.mrf.mxu0
        %v2664 = vadd.f32 0.0, %v2663
        %v2665 = vpop.f32.mrf.mxu0
        %v2666 = vadd.f32 0.0, %v2665
        %v2667 = vpop.f32.mrf.mxu0
        %v2668 = vadd.f32 0.0, %v2667
        %v2669 = vpop.f32.mrf.mxu0
        %v2670 = vadd.f32 0.0, %v2669
        %2671 = vmatprep.mubr.bf16.mxu0 %v2464
        %2672 = vmatmul.mubr.bf16.gmra.mxu0 %v2463
        %v2673 = vpop.f32.mrf.mxu0
        %v2674 = vadd.f32 0.0, %v2673
        %v2675 = vpop.f32.mrf.mxu0
        %v2676 = vadd.f32 0.0, %v2675
        %v2677 = vpop.f32.mrf.mxu0
        %v2678 = vadd.f32 0.0, %v2677
        %v2679 = vpop.f32.mrf.mxu0
        %v2680 = vadd.f32 0.0, %v2679
        %2681 = vdwg.mxu0
        %v2682 = vld [vmem:[#allocation4] sm:$0xff]
        %v2683 = vld [vmem:[#allocation4 + $0x8] sm:$0xff]
        %v2684 = vld [vmem:[#allocation4 + $0x10] sm:$0xff]
        %v2685 = vld [vmem:[#allocation4 + $0x18] sm:$0xff]
        %v2686 = vld [vmem:[#allocation4 + $0x20] sm:$0xff]
        %v2687 = vld [vmem:[#allocation4 + $0x28] sm:$0xff]
        %v2688 = vld [vmem:[#allocation4 + $0x30] sm:$0xff]
        %v2689 = vld [vmem:[#allocation4 + $0x38] sm:$0xff]
        %v2690 = vadd.f32 %v2682, %v2664
        %v2691 = vadd.f32 %v2683, %v2666
        %v2692 = vadd.f32 %v2684, %v2668
        %v2693 = vadd.f32 %v2685, %v2670
        %v2694 = vadd.f32 %v2686, %v2674
        %v2695 = vadd.f32 %v2687, %v2676
        %v2696 = vadd.f32 %v2688, %v2678
        %v2697 = vadd.f32 %v2689, %v2680
        %2698 = vst [vmem:[#allocation4] sm:$0xff] %v2690
        %2699 = vst [vmem:[#allocation4 + $0x8] sm:$0xff] %v2691
        %2700 = vst [vmem:[#allocation4 + $0x10] sm:$0xff] %v2692
        %2701 = vst [vmem:[#allocation4 + $0x18] sm:$0xff] %v2693
        %2702 = vst [vmem:[#allocation4 + $0x20] sm:$0xff] %v2694
        %2703 = vst [vmem:[#allocation4 + $0x28] sm:$0xff] %v2695
        %2704 = vst [vmem:[#allocation4 + $0x30] sm:$0xff] %v2696
        %2705 = vst [vmem:[#allocation4 + $0x38] sm:$0xff] %v2697
        %v2706 = vld [vmem:[#allocation4] sm:$0xff]
        %v2707 = vld [vmem:[#allocation4 + $0x8] sm:$0xff]
        %v2708 = vld [vmem:[#allocation4 + $0x10] sm:$0xff]
        %v2709 = vld [vmem:[#allocation4 + $0x18] sm:$0xff]
        %v2710 = vld [vmem:[#allocation4 + $0x20] sm:$0xff]
        %v2711 = vld [vmem:[#allocation4 + $0x28] sm:$0xff]
        %v2712 = vld [vmem:[#allocation4 + $0x30] sm:$0xff]
        %v2713 = vld [vmem:[#allocation4 + $0x38] sm:$0xff]
        %v2714 = vld [vmem:[%s4] sm:$0x3]
        %v2716 = vlaneseq
        %v2717 = vshrl.u32 %v2716, 7
        %v2718 = vsub.s32 0, %v2717
        %v2719 = vrot.slane %v2714, %v2718
        %v2720 = vlaneseq
        %v2721 = vshrl.u32 %v2720, 7
        %v2722 = vsub.s32 1, %v2721
        %v2723 = vrot.slane %v2714, %v2722
        %v2726 = vadd.f32 %v2706, %v2719
        %v2727 = vadd.f32 %v2707, %v2723
        %v2728 = vadd.f32 %v2708, %v2719
        %v2729 = vadd.f32 %v2709, %v2723
        %v2730 = vadd.f32 %v2710, %v2719
        %v2731 = vadd.f32 %v2711, %v2723
        %v2732 = vadd.f32 %v2712, %v2719
        %v2733 = vadd.f32 %v2713, %v2723
        %v2734 = vmax.f32 %v2726, 0.0
        %v2735 = vmax.f32 %v2727, 0.0
        %v2736 = vmax.f32 %v2728, 0.0
        %v2737 = vmax.f32 %v2729, 0.0
        %v2738 = vmax.f32 %v2730, 0.0
        %v2739 = vmax.f32 %v2731, 0.0
        %v2740 = vmax.f32 %v2732, 0.0
        %v2741 = vmax.f32 %v2733, 0.0
        %v2742 = vpack.c.bf16 %v2736, %v2734
        %v2743 = vpack.c.bf16 %v2737, %v2735
        %v2744 = vpack.c.bf16 %v2740, %v2738
        %v2745 = vpack.c.bf16 %v2741, %v2739
        %v2750 = vunpack.c.l.b16 %v2742
        %v2751 = vunpack.c.l.b16 %v2743
        %v2752 = vunpack.c.h.b16 %v2742
        %v2753 = vunpack.c.h.b16 %v2743
        %v2754 = vunpack.c.l.b16 %v2744
        %v2755 = vunpack.c.l.b16 %v2745
        %v2756 = vunpack.c.h.b16 %v2744
        %v2757 = vunpack.c.h.b16 %v2745
        %v2758 = vpack.c.b16 %v2751, %v2750
        %v2759 = vpack.c.b16 %v2753, %v2752
        %v2760 = vpack.c.b16 %v2755, %v2754
        %v2761 = vpack.c.b16 %v2757, %v2756
        %v2763 = vshrl.u32 %v2758, 16
        %v2765 = vrot.slane %v2763, 7
        %v2766 = vshll.u32 %v2758, 16
        %v2768 = vor.u32 %v2765, %v2766
        %v2769 = vrot.slane %v2765, 4
        %v2771 = vshrl.u32 %v2759, 16
        %v2773 = vrot.slane %v2771, 7
        %v2774 = vshll.u32 %v2759, 16
        %v2776 = vor.u32 %v2773, %v2774
        %v2777 = vsel %vm554, %v2769, %v2776
        %v2778 = vrot.slane %v2773, 4
        %v2780 = vshrl.u32 %v2760, 16
        %v2782 = vrot.slane %v2780, 7
        %v2783 = vshll.u32 %v2760, 16
        %v2785 = vor.u32 %v2782, %v2783
        %v2786 = vrot.slane %v2782, 4
        %v2788 = vshrl.u32 %v2761, 16
        %v2790 = vrot.slane %v2788, 7
        %v2791 = vshll.u32 %v2761, 16
        %v2793 = vor.u32 %v2790, %v2791
        %v2794 = vsel %vm554, %v2786, %v2793
        %v2795 = vrot.slane %v2790, 4
        %v2802 = vld [vmem:[#allocation3] sm:$0xff]
        %v2803 = vsel %vm601, %v2768, %v2802
        %2804 = vst [vmem:[#allocation3] sm:$0xff] %v2803
        %2805 = vst [vmem:[#allocation3 + $0x8] sm:$0xff] %v2777
        %v2806 = vld [vmem:[#allocation3 + $0x10] sm:$0x11]
        %v2807 = vsel %vm611, %v2778, %v2806
        %2808 = vst [vmem:[#allocation3 + $0x10] sm:$0x11] %v2807
        %v2809 = vld [vmem:[#allocation3 + $0x18] sm:$0xff]
        %v2810 = vsel %vm601, %v2785, %v2809
        %2811 = vst [vmem:[#allocation3 + $0x18] sm:$0xff] %v2810
        %2812 = vst [vmem:[#allocation3 + $0x20] sm:$0xff] %v2794
        %v2813 = vld [vmem:[#allocation3 + $0x28] sm:$0x11]
        %v2814 = vsel %vm611, %v2795, %v2813
        %2815 = vst [vmem:[#allocation3 + $0x28] sm:$0x11] %v2814
        %v2816 = vld [vmem:[#allocation3] sm:$0xff]
        %v2817 = vld [vmem:[#allocation3 + $0x8] sm:$0xff]
        %v2818 = vld [vmem:[#allocation3 + $0x18] sm:$0xff]
        %v2819 = vld [vmem:[#allocation3 + $0x20] sm:$0xff]
        %v2820 = vld [vmem:[%s5] sm:$0xf]
        %v2821 = vld [vmem:[%s5 + $0x4] sm:$0xf]
        %v2822 = vld [vmem:[%s5 + $0x8] sm:$0xf]
        %v2823 = vld [vmem:[%s5 + $0xc] sm:$0xf]
        %v2824 = vld [vmem:[%s5 + $0x10] sm:$0xf]
        %v2825 = vld [vmem:[%s5 + $0x14] sm:$0xf]
        %v2826 = vld [vmem:[%s5 + $0x18] sm:$0xf]
        %v2827 = vld [vmem:[%s5 + $0x1c] sm:$0xf]
        %v2828 = vld [vmem:[%s5 + $0x20] sm:$0xf]
        %v2829 = vld [vmem:[%s5 + $0x24] sm:$0xf]
        %v2830 = vld [vmem:[%s5 + $0x28] sm:$0xf]
        %v2831 = vld [vmem:[%s5 + $0x2c] sm:$0xf]
        %v2832 = vld [vmem:[%s5 + $0x30] sm:$0xf]
        %v2833 = vld [vmem:[%s5 + $0x34] sm:$0xf]
        %v2834 = vld [vmem:[%s5 + $0x38] sm:$0xf]
        %v2835 = vld [vmem:[%s5 + $0x3c] sm:$0xf]
        %v2836 = vld [vmem:[%s5 + $0x40] sm:$0xf]
        %v2837 = vld [vmem:[%s5 + $0x44] sm:$0xf]
        %v2838 = vld [vmem:[%s5 + $0x48] sm:$0xf]
        %v2839 = vld [vmem:[%s5 + $0x4c] sm:$0xf]
        %v2840 = vld [vmem:[%s5 + $0x50] sm:$0xf]
        %v2841 = vld [vmem:[%s5 + $0x54] sm:$0xf]
        %v2842 = vld [vmem:[%s5 + $0x58] sm:$0xf]
        %v2843 = vld [vmem:[%s5 + $0x5c] sm:$0xf]
        %v2844 = vld [vmem:[%s5 + $0x60] sm:$0xf]
        %v2845 = vld [vmem:[%s5 + $0x64] sm:$0xf]
        %v2846 = vld [vmem:[%s5 + $0x68] sm:$0xf]
        %v2847 = vld [vmem:[%s5 + $0x6c] sm:$0xf]
        %v2848 = vld [vmem:[%s5 + $0x70] sm:$0xf]
        %v2849 = vld [vmem:[%s5 + $0x74] sm:$0xf]
        %v2850 = vld [vmem:[%s5 + $0x78] sm:$0xf]
        %v2851 = vld [vmem:[%s5 + $0x7c] sm:$0xf]
        %v2856 = vunpack.c.l.b16 %v2816
        %v2857 = vunpack.c.h.b16 %v2816
        %v2858 = vunpack.c.l.b16 %v2817
        %v2859 = vunpack.c.h.b16 %v2817
        %v2860 = vunpack.c.l.b16 %v2818
        %v2861 = vunpack.c.h.b16 %v2818
        %v2862 = vunpack.c.l.b16 %v2819
        %v2863 = vunpack.c.h.b16 %v2819
        %v2864 = vpack.c.b16 %v2858, %v2856
        %v2865 = vpack.c.b16 %v2859, %v2857
        %v2866 = vpack.c.b16 %v2862, %v2860
        %v2867 = vpack.c.b16 %v2863, %v2861
        %v2904 = vunpack.c.l.b16 %v2820
        %v2905 = vunpack.c.l.b16 %v2821
        %v2906 = vunpack.c.l.b16 %v2822
        %v2907 = vunpack.c.l.b16 %v2823
        %v2908 = vunpack.c.l.b16 %v2824
        %v2909 = vunpack.c.l.b16 %v2825
        %v2910 = vunpack.c.l.b16 %v2826
        %v2911 = vunpack.c.l.b16 %v2827
        %v2912 = vunpack.c.l.b16 %v2828
        %v2913 = vunpack.c.l.b16 %v2829
        %v2914 = vunpack.c.l.b16 %v2830
        %v2915 = vunpack.c.l.b16 %v2831
        %v2916 = vunpack.c.l.b16 %v2832
        %v2917 = vunpack.c.l.b16 %v2833
        %v2918 = vunpack.c.l.b16 %v2834
        %v2919 = vunpack.c.l.b16 %v2835
        %v2920 = vunpack.c.l.b16 %v2836
        %v2921 = vunpack.c.l.b16 %v2837
        %v2922 = vunpack.c.l.b16 %v2838
        %v2923 = vunpack.c.l.b16 %v2839
        %v2924 = vunpack.c.l.b16 %v2840
        %v2925 = vunpack.c.l.b16 %v2841
        %v2926 = vunpack.c.l.b16 %v2842
        %v2927 = vunpack.c.l.b16 %v2843
        %v2928 = vunpack.c.l.b16 %v2844
        %v2929 = vunpack.c.l.b16 %v2845
        %v2930 = vunpack.c.l.b16 %v2846
        %v2931 = vunpack.c.l.b16 %v2847
        %v2932 = vunpack.c.l.b16 %v2848
        %v2933 = vunpack.c.l.b16 %v2849
        %v2934 = vunpack.c.l.b16 %v2850
        %v2935 = vunpack.c.l.b16 %v2851
        %v2936 = vpack.c.b16 %v2905, %v2904
        %v2937 = vpack.c.b16 %v2907, %v2906
        %v2938 = vpack.c.b16 %v2909, %v2908
        %v2939 = vpack.c.b16 %v2911, %v2910
        %v2940 = vpack.c.b16 %v2913, %v2912
        %v2941 = vpack.c.b16 %v2915, %v2914
        %v2942 = vpack.c.b16 %v2917, %v2916
        %v2943 = vpack.c.b16 %v2919, %v2918
        %v2944 = vpack.c.b16 %v2921, %v2920
        %v2945 = vpack.c.b16 %v2923, %v2922
        %v2946 = vpack.c.b16 %v2925, %v2924
        %v2947 = vpack.c.b16 %v2927, %v2926
        %v2948 = vpack.c.b16 %v2929, %v2928
        %v2949 = vpack.c.b16 %v2931, %v2930
        %v2950 = vpack.c.b16 %v2933, %v2932
        %v2951 = vpack.c.b16 %v2935, %v2934
        %2968 = vmatprep.subr.bf16.mxu0 0
        %2969 = vmatpush1.bf16.msra.mxu0 %v2943
        %2970 = vmatprep.subr.bf16.mxu0 0
        %2971 = vmatpush1.bf16.msra.mxu0 %v2942
        %2972 = vmatprep.subr.bf16.mxu0 0
        %2973 = vmatpush1.bf16.msra.mxu0 %v2941
        %2974 = vmatprep.subr.bf16.mxu0 0
        %2975 = vmatpush1.bf16.msra.mxu0 %v2940
        %2976 = vmatprep.subr.bf16.mxu0 0
        %2977 = vmatpush1.bf16.msra.mxu0 %v2939
        %2978 = vmatprep.subr.bf16.mxu0 0
        %2979 = vmatpush1.bf16.msra.mxu0 %v2938
        %2980 = vmatprep.subr.bf16.mxu0 0
        %2981 = vmatpush1.bf16.msra.mxu0 %v2937
        %2982 = vmatprep.subr.bf16.mxu0 0
        %2983 = vmatpush1.bf16.msra.mxu0 %v2936
        %2984 = vmatprep.subr.bf16.mxu0 0
        %2985 = vmatpush2.bf16.msra.mxu0 %v2951
        %2986 = vmatprep.subr.bf16.mxu0 0
        %2987 = vmatpush2.bf16.msra.mxu0 %v2950
        %2988 = vmatprep.subr.bf16.mxu0 0
        %2989 = vmatpush2.bf16.msra.mxu0 %v2949
        %2990 = vmatprep.subr.bf16.mxu0 0
        %2991 = vmatpush2.bf16.msra.mxu0 %v2948
        %2992 = vmatprep.subr.bf16.mxu0 0
        %2993 = vmatpush2.bf16.msra.mxu0 %v2947
        %2994 = vmatprep.subr.bf16.mxu0 0
        %2995 = vmatpush2.bf16.msra.mxu0 %v2946
        %2996 = vmatprep.subr.bf16.mxu0 0
        %2997 = vmatpush2.bf16.msra.mxu0 %v2945
        %2998 = vmatprep.subr.bf16.mxu0 0
        %2999 = vmatpush2.bf16.msra.mxu0 %v2944
        %3000 = vmatprep.mubr.bf16.mxu0 %v2865
        %3001 = vmatmul.mubr.bf16.gmra.mxu0 %v2864
        %v3002 = vpop.f32.mrf.mxu0
        %v3003 = vadd.f32 0.0, %v3002
        %v3004 = vpop.f32.mrf.mxu0
        %v3005 = vpop.f32.mrf.mxu0
        %v3006 = vadd.f32 0.0, %v3005
        %v3007 = vpop.f32.mrf.mxu0
        %3008 = vmatprep.mubr.bf16.mxu0 %v2867
        %3009 = vmatmul.mubr.bf16.gmra.mxu0 %v2866
        %v3010 = vpop.f32.mrf.mxu0
        %v3011 = vadd.f32 0.0, %v3010
        %v3012 = vpop.f32.mrf.mxu0
        %v3013 = vpop.f32.mrf.mxu0
        %v3014 = vadd.f32 0.0, %v3013
        %v3015 = vpop.f32.mrf.mxu0
        %3016 = vdwg.mxu0
        %3017 = vst [vmem:[#allocation5] sm:$0xff] %v3003
        %3018 = vst [vmem:[#allocation5 + $0x8] sm:$0xff] %v3006
        %3019 = vst [vmem:[#allocation5 + $0x10] sm:$0xff] %v3011
        %3020 = vst [vmem:[#allocation5 + $0x18] sm:$0xff] %v3014
        %v3021 = vld [vmem:[#allocation3] sm:$0xff]
        %v3022 = vld [vmem:[#allocation3 + $0x8] sm:$0xff]
        %v3023 = vld [vmem:[#allocation3 + $0x10] sm:$0x11]
        %v3024 = vld [vmem:[#allocation3 + $0x18] sm:$0xff]
        %v3025 = vld [vmem:[#allocation3 + $0x20] sm:$0xff]
        %v3026 = vld [vmem:[#allocation3 + $0x28] sm:$0x11]
        %v3028 = vshrl.u32 %v3021, 16
        %v3030 = vrot.slane %v3028, 4
        %v3031 = vshll.u32 %v3021, 16
        %v3033 = vrot.slane %v3031, 5
        %v3034 = vor.u32 %v3030, %v3033
        %v3035 = vrot.slane %v3034, 4
        %v3037 = vshll.u32 %v3022, 16
        %v3039 = vrot.slane %v3037, 5
        %v3040 = vsel %vm1110, %v3035, %v3039
        %v3041 = vshrl.u32 %v3022, 16
        %v3043 = vrot.slane %v3041, 4
        %v3044 = vor.u32 %v3043, %v3039
        %v3045 = vrot.slane %v3044, 4
        %v3047 = vshll.u32 %v3023, 16
        %v3049 = vrot.slane %v3047, 5
        %v3050 = vsel %vm1110, %v3045, %v3049
        %v3052 = vshrl.u32 %v3024, 16
        %v3054 = vrot.slane %v3052, 4
        %v3055 = vshll.u32 %v3024, 16
        %v3057 = vrot.slane %v3055, 5
        %v3058 = vor.u32 %v3054, %v3057
        %v3059 = vrot.slane %v3058, 4
        %v3061 = vshll.u32 %v3025, 16
        %v3063 = vrot.slane %v3061, 5
        %v3064 = vsel %vm1110, %v3059, %v3063
        %v3065 = vshrl.u32 %v3025, 16
        %v3067 = vrot.slane %v3065, 4
        %v3068 = vor.u32 %v3067, %v3063
        %v3069 = vrot.slane %v3068, 4
        %v3071 = vshll.u32 %v3026, 16
        %v3073 = vrot.slane %v3071, 5
        %v3074 = vsel %vm1110, %v3069, %v3073
        %s3075 = scalar_lea.vmem %s5, 128
        %v3076 = vld [vmem:[%s3075] sm:$0xf]
        %v3077 = vld [vmem:[%s3075 + $0x4] sm:$0xf]
        %v3078 = vld [vmem:[%s3075 + $0x8] sm:$0xf]
        %v3079 = vld [vmem:[%s3075 + $0xc] sm:$0xf]
        %v3080 = vld [vmem:[%s3075 + $0x10] sm:$0xf]
        %v3081 = vld [vmem:[%s3075 + $0x14] sm:$0xf]
        %v3082 = vld [vmem:[%s3075 + $0x18] sm:$0xf]
        %v3083 = vld [vmem:[%s3075 + $0x1c] sm:$0xf]
        %v3084 = vld [vmem:[%s3075 + $0x20] sm:$0xf]
        %v3085 = vld [vmem:[%s3075 + $0x24] sm:$0xf]
        %v3086 = vld [vmem:[%s3075 + $0x28] sm:$0xf]
        %v3087 = vld [vmem:[%s3075 + $0x2c] sm:$0xf]
        %v3088 = vld [vmem:[%s3075 + $0x30] sm:$0xf]
        %v3089 = vld [vmem:[%s3075 + $0x34] sm:$0xf]
        %v3090 = vld [vmem:[%s3075 + $0x38] sm:$0xf]
        %v3091 = vld [vmem:[%s3075 + $0x3c] sm:$0xf]
        %v3092 = vld [vmem:[%s3075 + $0x40] sm:$0xf]
        %v3093 = vld [vmem:[%s3075 + $0x44] sm:$0xf]
        %v3094 = vld [vmem:[%s3075 + $0x48] sm:$0xf]
        %v3095 = vld [vmem:[%s3075 + $0x4c] sm:$0xf]
        %v3096 = vld [vmem:[%s3075 + $0x50] sm:$0xf]
        %v3097 = vld [vmem:[%s3075 + $0x54] sm:$0xf]
        %v3098 = vld [vmem:[%s3075 + $0x58] sm:$0xf]
        %v3099 = vld [vmem:[%s3075 + $0x5c] sm:$0xf]
        %v3100 = vld [vmem:[%s3075 + $0x60] sm:$0xf]
        %v3101 = vld [vmem:[%s3075 + $0x64] sm:$0xf]
        %v3102 = vld [vmem:[%s3075 + $0x68] sm:$0xf]
        %v3103 = vld [vmem:[%s3075 + $0x6c] sm:$0xf]
        %v3104 = vld [vmem:[%s3075 + $0x70] sm:$0xf]
        %v3105 = vld [vmem:[%s3075 + $0x74] sm:$0xf]
        %v3106 = vld [vmem:[%s3075 + $0x78] sm:$0xf]
        %v3107 = vld [vmem:[%s3075 + $0x7c] sm:$0xf]
        %v3108 = vunpack.c.l.b16 %v3040
        %v3109 = vunpack.c.h.b16 %v3040
        %v3110 = vunpack.c.l.b16 %v3050
        %v3111 = vunpack.c.h.b16 %v3050
        %v3112 = vunpack.c.l.b16 %v3064
        %v3113 = vunpack.c.h.b16 %v3064
        %v3114 = vunpack.c.l.b16 %v3074
        %v3115 = vunpack.c.h.b16 %v3074
        %v3116 = vpack.c.b16 %v3110, %v3108
        %v3117 = vpack.c.b16 %v3111, %v3109
        %v3118 = vpack.c.b16 %v3114, %v3112
        %v3119 = vpack.c.b16 %v3115, %v3113
        %v3156 = vunpack.c.l.b16 %v3076
        %v3157 = vunpack.c.l.b16 %v3077
        %v3158 = vunpack.c.l.b16 %v3078
        %v3159 = vunpack.c.l.b16 %v3079
        %v3160 = vunpack.c.l.b16 %v3080
        %v3161 = vunpack.c.l.b16 %v3081
        %v3162 = vunpack.c.l.b16 %v3082
        %v3163 = vunpack.c.l.b16 %v3083
        %v3164 = vunpack.c.l.b16 %v3084
        %v3165 = vunpack.c.l.b16 %v3085
        %v3166 = vunpack.c.l.b16 %v3086
        %v3167 = vunpack.c.l.b16 %v3087
        %v3168 = vunpack.c.l.b16 %v3088
        %v3169 = vunpack.c.l.b16 %v3089
        %v3170 = vunpack.c.l.b16 %v3090
        %v3171 = vunpack.c.l.b16 %v3091
        %v3172 = vunpack.c.l.b16 %v3092
        %v3173 = vunpack.c.l.b16 %v3093
        %v3174 = vunpack.c.l.b16 %v3094
        %v3175 = vunpack.c.l.b16 %v3095
        %v3176 = vunpack.c.l.b16 %v3096
        %v3177 = vunpack.c.l.b16 %v3097
        %v3178 = vunpack.c.l.b16 %v3098
        %v3179 = vunpack.c.l.b16 %v3099
        %v3180 = vunpack.c.l.b16 %v3100
        %v3181 = vunpack.c.l.b16 %v3101
        %v3182 = vunpack.c.l.b16 %v3102
        %v3183 = vunpack.c.l.b16 %v3103
        %v3184 = vunpack.c.l.b16 %v3104
        %v3185 = vunpack.c.l.b16 %v3105
        %v3186 = vunpack.c.l.b16 %v3106
        %v3187 = vunpack.c.l.b16 %v3107
        %v3188 = vpack.c.b16 %v3157, %v3156
        %v3189 = vpack.c.b16 %v3159, %v3158
        %v3190 = vpack.c.b16 %v3161, %v3160
        %v3191 = vpack.c.b16 %v3163, %v3162
        %v3192 = vpack.c.b16 %v3165, %v3164
        %v3193 = vpack.c.b16 %v3167, %v3166
        %v3194 = vpack.c.b16 %v3169, %v3168
        %v3195 = vpack.c.b16 %v3171, %v3170
        %v3196 = vpack.c.b16 %v3173, %v3172
        %v3197 = vpack.c.b16 %v3175, %v3174
        %v3198 = vpack.c.b16 %v3177, %v3176
        %v3199 = vpack.c.b16 %v3179, %v3178
        %v3200 = vpack.c.b16 %v3181, %v3180
        %v3201 = vpack.c.b16 %v3183, %v3182
        %v3202 = vpack.c.b16 %v3185, %v3184
        %v3203 = vpack.c.b16 %v3187, %v3186
        %3220 = vmatprep.subr.bf16.mxu0 0
        %3221 = vmatpush1.bf16.msra.mxu0 %v3195
        %3222 = vmatprep.subr.bf16.mxu0 0
        %3223 = vmatpush1.bf16.msra.mxu0 %v3194
        %3224 = vmatprep.subr.bf16.mxu0 0
        %3225 = vmatpush1.bf16.msra.mxu0 %v3193
        %3226 = vmatprep.subr.bf16.mxu0 0
        %3227 = vmatpush1.bf16.msra.mxu0 %v3192
        %3228 = vmatprep.subr.bf16.mxu0 0
        %3229 = vmatpush1.bf16.msra.mxu0 %v3191
        %3230 = vmatprep.subr.bf16.mxu0 0
        %3231 = vmatpush1.bf16.msra.mxu0 %v3190
        %3232 = vmatprep.subr.bf16.mxu0 0
        %3233 = vmatpush1.bf16.msra.mxu0 %v3189
        %3234 = vmatprep.subr.bf16.mxu0 0
        %3235 = vmatpush1.bf16.msra.mxu0 %v3188
        %3236 = vmatprep.subr.bf16.mxu0 0
        %3237 = vmatpush2.bf16.msra.mxu0 %v3203
        %3238 = vmatprep.subr.bf16.mxu0 0
        %3239 = vmatpush2.bf16.msra.mxu0 %v3202
        %3240 = vmatprep.subr.bf16.mxu0 0
        %3241 = vmatpush2.bf16.msra.mxu0 %v3201
        %3242 = vmatprep.subr.bf16.mxu0 0
        %3243 = vmatpush2.bf16.msra.mxu0 %v3200
        %3244 = vmatprep.subr.bf16.mxu0 0
        %3245 = vmatpush2.bf16.msra.mxu0 %v3199
        %3246 = vmatprep.subr.bf16.mxu0 0
        %3247 = vmatpush2.bf16.msra.mxu0 %v3198
        %3248 = vmatprep.subr.bf16.mxu0 0
        %3249 = vmatpush2.bf16.msra.mxu0 %v3197
        %3250 = vmatprep.subr.bf16.mxu0 0
        %3251 = vmatpush2.bf16.msra.mxu0 %v3196
        %3252 = vmatprep.mubr.bf16.mxu0 %v3117
        %3253 = vmatmul.mubr.bf16.gmra.mxu0 %v3116
        %v3254 = vpop.f32.mrf.mxu0
        %v3255 = vadd.f32 0.0, %v3254
        %v3256 = vpop.f32.mrf.mxu0
        %v3257 = vpop.f32.mrf.mxu0
        %v3258 = vadd.f32 0.0, %v3257
        %v3259 = vpop.f32.mrf.mxu0
        %3260 = vmatprep.mubr.bf16.mxu0 %v3119
        %3261 = vmatmul.mubr.bf16.gmra.mxu0 %v3118
        %v3262 = vpop.f32.mrf.mxu0
        %v3263 = vadd.f32 0.0, %v3262
        %v3264 = vpop.f32.mrf.mxu0
        %v3265 = vpop.f32.mrf.mxu0
        %v3266 = vadd.f32 0.0, %v3265
        %v3267 = vpop.f32.mrf.mxu0
        %3268 = vdwg.mxu0
        %v3269 = vld [vmem:[#allocation5] sm:$0xff]
        %v3270 = vld [vmem:[#allocation5 + $0x8] sm:$0xff]
        %v3271 = vld [vmem:[#allocation5 + $0x10] sm:$0xff]
        %v3272 = vld [vmem:[#allocation5 + $0x18] sm:$0xff]
        %v3273 = vadd.f32 %v3269, %v3255
        %v3274 = vadd.f32 %v3270, %v3258
        %v3275 = vadd.f32 %v3271, %v3263
        %v3276 = vadd.f32 %v3272, %v3266
        %3277 = vst [vmem:[#allocation5] sm:$0xff] %v3273
        %3278 = vst [vmem:[#allocation5 + $0x8] sm:$0xff] %v3274
        %3279 = vst [vmem:[#allocation5 + $0x10] sm:$0xff] %v3275
        %3280 = vst [vmem:[#allocation5 + $0x18] sm:$0xff] %v3276
        %v3281 = vld [vmem:[#allocation3] sm:$0xee]
        %v3282 = vld [vmem:[#allocation3 + $0x8] sm:$0xff]
        %v3283 = vld [vmem:[#allocation3 + $0x10] sm:$0x11]
        %v3284 = vld [vmem:[#allocation3 + $0x18] sm:$0xee]
        %v3285 = vld [vmem:[#allocation3 + $0x20] sm:$0xff]
        %v3286 = vld [vmem:[#allocation3 + $0x28] sm:$0x11]
        %v3293 = vrot.slane %v3281, 5
        %v3294 = vrot.slane %v3293, 4
        %v3295 = vrot.slane %v3282, 5
        %v3296 = vsel %vm1459, %v3294, %v3295
        %v3297 = vrot.slane %v3295, 4
        %v3298 = vrot.slane %v3283, 5
        %v3299 = vsel %vm1459, %v3297, %v3298
        %v3300 = vrot.slane %v3284, 5
        %v3301 = vrot.slane %v3300, 4
        %v3302 = vrot.slane %v3285, 5
        %v3303 = vsel %vm1459, %v3301, %v3302
        %v3304 = vrot.slane %v3302, 4
        %v3305 = vrot.slane %v3286, 5
        %v3306 = vsel %vm1459, %v3304, %v3305
        %s3307 = scalar_lea.vmem %s5, 256
        %v3308 = vld [vmem:[%s3307] sm:$0xf]
        %v3309 = vld [vmem:[%s3307 + $0x4] sm:$0xf]
        %v3310 = vld [vmem:[%s3307 + $0x8] sm:$0xf]
        %v3311 = vld [vmem:[%s3307 + $0xc] sm:$0xf]
        %v3312 = vld [vmem:[%s3307 + $0x10] sm:$0xf]
        %v3313 = vld [vmem:[%s3307 + $0x14] sm:$0xf]
        %v3314 = vld [vmem:[%s3307 + $0x18] sm:$0xf]
        %v3315 = vld [vmem:[%s3307 + $0x1c] sm:$0xf]
        %v3316 = vld [vmem:[%s3307 + $0x20] sm:$0xf]
        %v3317 = vld [vmem:[%s3307 + $0x24] sm:$0xf]
        %v3318 = vld [vmem:[%s3307 + $0x28] sm:$0xf]
        %v3319 = vld [vmem:[%s3307 + $0x2c] sm:$0xf]
        %v3320 = vld [vmem:[%s3307 + $0x30] sm:$0xf]
        %v3321 = vld [vmem:[%s3307 + $0x34] sm:$0xf]
        %v3322 = vld [vmem:[%s3307 + $0x38] sm:$0xf]
        %v3323 = vld [vmem:[%s3307 + $0x3c] sm:$0xf]
        %v3324 = vld [vmem:[%s3307 + $0x40] sm:$0xf]
        %v3325 = vld [vmem:[%s3307 + $0x44] sm:$0xf]
        %v3326 = vld [vmem:[%s3307 + $0x48] sm:$0xf]
        %v3327 = vld [vmem:[%s3307 + $0x4c] sm:$0xf]
        %v3328 = vld [vmem:[%s3307 + $0x50] sm:$0xf]
        %v3329 = vld [vmem:[%s3307 + $0x54] sm:$0xf]
        %v3330 = vld [vmem:[%s3307 + $0x58] sm:$0xf]
        %v3331 = vld [vmem:[%s3307 + $0x5c] sm:$0xf]
        %v3332 = vld [vmem:[%s3307 + $0x60] sm:$0xf]
        %v3333 = vld [vmem:[%s3307 + $0x64] sm:$0xf]
        %v3334 = vld [vmem:[%s3307 + $0x68] sm:$0xf]
        %v3335 = vld [vmem:[%s3307 + $0x6c] sm:$0xf]
        %v3336 = vld [vmem:[%s3307 + $0x70] sm:$0xf]
        %v3337 = vld [vmem:[%s3307 + $0x74] sm:$0xf]
        %v3338 = vld [vmem:[%s3307 + $0x78] sm:$0xf]
        %v3339 = vld [vmem:[%s3307 + $0x7c] sm:$0xf]
        %v3340 = vunpack.c.l.b16 %v3296
        %v3341 = vunpack.c.h.b16 %v3296
        %v3342 = vunpack.c.l.b16 %v3299
        %v3343 = vunpack.c.h.b16 %v3299
        %v3344 = vunpack.c.l.b16 %v3303
        %v3345 = vunpack.c.h.b16 %v3303
        %v3346 = vunpack.c.l.b16 %v3306
        %v3347 = vunpack.c.h.b16 %v3306
        %v3348 = vpack.c.b16 %v3342, %v3340
        %v3349 = vpack.c.b16 %v3343, %v3341
        %v3350 = vpack.c.b16 %v3346, %v3344
        %v3351 = vpack.c.b16 %v3347, %v3345
        %v3388 = vunpack.c.l.b16 %v3308
        %v3389 = vunpack.c.l.b16 %v3309
        %v3390 = vunpack.c.l.b16 %v3310
        %v3391 = vunpack.c.l.b16 %v3311
        %v3392 = vunpack.c.l.b16 %v3312
        %v3393 = vunpack.c.l.b16 %v3313
        %v3394 = vunpack.c.l.b16 %v3314
        %v3395 = vunpack.c.l.b16 %v3315
        %v3396 = vunpack.c.l.b16 %v3316
        %v3397 = vunpack.c.l.b16 %v3317
        %v3398 = vunpack.c.l.b16 %v3318
        %v3399 = vunpack.c.l.b16 %v3319
        %v3400 = vunpack.c.l.b16 %v3320
        %v3401 = vunpack.c.l.b16 %v3321
        %v3402 = vunpack.c.l.b16 %v3322
        %v3403 = vunpack.c.l.b16 %v3323
        %v3404 = vunpack.c.l.b16 %v3324
        %v3405 = vunpack.c.l.b16 %v3325
        %v3406 = vunpack.c.l.b16 %v3326
        %v3407 = vunpack.c.l.b16 %v3327
        %v3408 = vunpack.c.l.b16 %v3328
        %v3409 = vunpack.c.l.b16 %v3329
        %v3410 = vunpack.c.l.b16 %v3330
        %v3411 = vunpack.c.l.b16 %v3331
        %v3412 = vunpack.c.l.b16 %v3332
        %v3413 = vunpack.c.l.b16 %v3333
        %v3414 = vunpack.c.l.b16 %v3334
        %v3415 = vunpack.c.l.b16 %v3335
        %v3416 = vunpack.c.l.b16 %v3336
        %v3417 = vunpack.c.l.b16 %v3337
        %v3418 = vunpack.c.l.b16 %v3338
        %v3419 = vunpack.c.l.b16 %v3339
        %v3420 = vpack.c.b16 %v3389, %v3388
        %v3421 = vpack.c.b16 %v3391, %v3390
        %v3422 = vpack.c.b16 %v3393, %v3392
        %v3423 = vpack.c.b16 %v3395, %v3394
        %v3424 = vpack.c.b16 %v3397, %v3396
        %v3425 = vpack.c.b16 %v3399, %v3398
        %v3426 = vpack.c.b16 %v3401, %v3400
        %v3427 = vpack.c.b16 %v3403, %v3402
        %v3428 = vpack.c.b16 %v3405, %v3404
        %v3429 = vpack.c.b16 %v3407, %v3406
        %v3430 = vpack.c.b16 %v3409, %v3408
        %v3431 = vpack.c.b16 %v3411, %v3410
        %v3432 = vpack.c.b16 %v3413, %v3412
        %v3433 = vpack.c.b16 %v3415, %v3414
        %v3434 = vpack.c.b16 %v3417, %v3416
        %v3435 = vpack.c.b16 %v3419, %v3418
        %3452 = vmatprep.subr.bf16.mxu0 0
        %3453 = vmatpush1.bf16.msra.mxu0 %v3427
        %3454 = vmatprep.subr.bf16.mxu0 0
        %3455 = vmatpush1.bf16.msra.mxu0 %v3426
        %3456 = vmatprep.subr.bf16.mxu0 0
        %3457 = vmatpush1.bf16.msra.mxu0 %v3425
        %3458 = vmatprep.subr.bf16.mxu0 0
        %3459 = vmatpush1.bf16.msra.mxu0 %v3424
        %3460 = vmatprep.subr.bf16.mxu0 0
        %3461 = vmatpush1.bf16.msra.mxu0 %v3423
        %3462 = vmatprep.subr.bf16.mxu0 0
        %3463 = vmatpush1.bf16.msra.mxu0 %v3422
        %3464 = vmatprep.subr.bf16.mxu0 0
        %3465 = vmatpush1.bf16.msra.mxu0 %v3421
        %3466 = vmatprep.subr.bf16.mxu0 0
        %3467 = vmatpush1.bf16.msra.mxu0 %v3420
        %3468 = vmatprep.subr.bf16.mxu0 0
        %3469 = vmatpush2.bf16.msra.mxu0 %v3435
        %3470 = vmatprep.subr.bf16.mxu0 0
        %3471 = vmatpush2.bf16.msra.mxu0 %v3434
        %3472 = vmatprep.subr.bf16.mxu0 0
        %3473 = vmatpush2.bf16.msra.mxu0 %v3433
        %3474 = vmatprep.subr.bf16.mxu0 0
        %3475 = vmatpush2.bf16.msra.mxu0 %v3432
        %3476 = vmatprep.subr.bf16.mxu0 0
        %3477 = vmatpush2.bf16.msra.mxu0 %v3431
        %3478 = vmatprep.subr.bf16.mxu0 0
        %3479 = vmatpush2.bf16.msra.mxu0 %v3430
        %3480 = vmatprep.subr.bf16.mxu0 0
        %3481 = vmatpush2.bf16.msra.mxu0 %v3429
        %3482 = vmatprep.subr.bf16.mxu0 0
        %3483 = vmatpush2.bf16.msra.mxu0 %v3428
        %3484 = vmatprep.mubr.bf16.mxu0 %v3349
        %3485 = vmatmul.mubr.bf16.gmra.mxu0 %v3348
        %v3486 = vpop.f32.mrf.mxu0
        %v3487 = vadd.f32 0.0, %v3486
        %v3488 = vpop.f32.mrf.mxu0
        %v3489 = vpop.f32.mrf.mxu0
        %v3490 = vadd.f32 0.0, %v3489
        %v3491 = vpop.f32.mrf.mxu0
        %3492 = vmatprep.mubr.bf16.mxu0 %v3351
        %3493 = vmatmul.mubr.bf16.gmra.mxu0 %v3350
        %v3494 = vpop.f32.mrf.mxu0
        %v3495 = vadd.f32 0.0, %v3494
        %v3496 = vpop.f32.mrf.mxu0
        %v3497 = vpop.f32.mrf.mxu0
        %v3498 = vadd.f32 0.0, %v3497
        %v3499 = vpop.f32.mrf.mxu0
        %3500 = vdwg.mxu0
        %v3501 = vld [vmem:[#allocation5] sm:$0xff]
        %v3502 = vld [vmem:[#allocation5 + $0x8] sm:$0xff]
        %v3503 = vld [vmem:[#allocation5 + $0x10] sm:$0xff]
        %v3504 = vld [vmem:[#allocation5 + $0x18] sm:$0xff]
        %v3505 = vadd.f32 %v3501, %v3487
        %v3506 = vadd.f32 %v3502, %v3490
        %v3507 = vadd.f32 %v3503, %v3495
        %v3508 = vadd.f32 %v3504, %v3498
        %3509 = vst [vmem:[#allocation5] sm:$0xff] %v3505
        %3510 = vst [vmem:[#allocation5 + $0x8] sm:$0xff] %v3506
        %3511 = vst [vmem:[#allocation5 + $0x10] sm:$0xff] %v3507
        %3512 = vst [vmem:[#allocation5 + $0x18] sm:$0xff] %v3508
        %v3513 = vld [vmem:[#allocation5] sm:$0xff]
        %v3514 = vld [vmem:[#allocation5 + $0x8] sm:$0xff]
        %v3515 = vld [vmem:[#allocation5 + $0x10] sm:$0xff]
        %v3516 = vld [vmem:[#allocation5 + $0x18] sm:$0xff]
        %v3517 = vld [vmem:[%s6] sm:$0x1]
        %v3519 = vlaneseq
        %v3520 = vshrl.u32 %v3519, 7
        %v3521 = vsub.s32 0, %v3520
        %v3522 = vrot.slane %v3517, %v3521
        %v3524 = vadd.f32 %v3513, %v3522
        %v3525 = vadd.f32 %v3514, %v3522
        %v3526 = vadd.f32 %v3515, %v3522
        %v3527 = vadd.f32 %v3516, %v3522
        %v3528 = vmax.f32 %v3524, 0.0
        %v3529 = vmax.f32 %v3525, 0.0
        %v3530 = vmax.f32 %v3526, 0.0
        %v3531 = vmax.f32 %v3527, 0.0
        %3532 = vst [vmem:[%s274] sm:$0xff] %v3528
        %3533 = vst [vmem:[%s274 + $0x8] sm:$0xff] %v3529
        %3534 = vst [vmem:[%s274 + $0x10] sm:$0xff] %v3530
        %3535 = vst [vmem:[%s274 + $0x18] sm:$0xff] %v3531
        %s3536 = sand.u32 %s181, 1
        %s3537 = scalar_lea.sflag [#allocation7], %s3536
        %s3538 = sand.u32 %s181, 1
        %s3539 = smul.addr %s3538, 32
        %s3540 = scalar_lea.vmem [#allocation6], %s3539
        // Predicated region
        $region53: #{conv_patch_embedding.1} parent=47 // pred_check
          %p3541 = pneg %p191
        $region54: #{conv_patch_embedding.1} parent=47 // pred_check_branch
          %3543 = sbr.rel (%p3541) target = $region56
        $region55: #{conv_patch_embedding.1} parent=47 // pred_region
          %s3544 = smul.u32 2, %s21
          %s3546 = ssub.s32 512, 512
          %3547 = vsyncadd %s3537, %s3546
          %s3548 = smul.addr %s3544, 2
          %s3549 = smul.addr %s3548, 128
          %s3550 = scalar_lea.hbm %s7, %s3549
          %s3551 = sshll.u32 %s3540, 4
          %s3552 = int_to_ptr.vmem [resolvable:$true] %s3551
          %3557 = dma.vmem_to_hbm [thread:$0]  %s3552, 512, %s3550, %s3537, 128, 128, 8
        $region56: #{conv_patch_embedding.1} parent=47 // pred_fallthru
          _
      $region48: #{conv_patch_embedding.1} parent=5 // pred_fallthru
        _
      %p3558 = scmp.le.s32.totalorder 2, %s16
      // Predicated region
      $region57: #{conv_patch_embedding.1} parent=5 // pred_check
        %p3559 = pneg %p3558
      $region58: #{conv_patch_embedding.1} parent=5 // pred_check_branch
        %3561 = sbr.rel (%p3559) target = $region60
      $region59: #{conv_patch_embedding.1} parent=5 // pred_region
        %s3562 = ssub.s32 %s16, 2
        // Predicated region
        $region61: #{conv_patch_embedding.1} parent=59 // pred_check
          %p3563 = pneg %p197
        $region62: #{conv_patch_embedding.1} parent=59 // pred_check_branch
          %3565 = sbr.rel (%p3563) target = $region64
        $region63: #{conv_patch_embedding.1} parent=59 // pred_region
          %s3566 = sand.u32 %s182, 1
          %s3567 = scalar_lea.sflag [#allocation7], %s3566
          %s3568 = sand.u32 %s182, 1
          %s3569 = smul.addr %s3568, 32
          %s3570 = scalar_lea.vmem [#allocation6], %s3569
          %3571 = dma.done %s3567, 512
        $region64: #{conv_patch_embedding.1} parent=59 // pred_fallthru
          _
      $region60: #{conv_patch_embedding.1} parent=5 // pred_fallthru
        _
    $region6: #{conv_patch_embedding.1} parent=1 // loop_footer
      %s20 = sadd.s32 1, %s16
    $region7: #{conv_patch_embedding.1} parent=1 // loop_footer_branch
      %15 = sbr.rel target = $region3
    $region8: #{conv_patch_embedding.1} parent=1 // loop_exit
      _
    %3572 = vsyncpa [#allocation7], 1
    %s3573 = scalar_lea.sflag [#allocation7], 1
    %3574 = vsyncpa %s3573, 1

</llo_original>
